<compile_context>
chip_gen: v6e
topology: v6e:2x2x1
jax: 0.10.0
libtpu: 0.0.40
codegen_flags: <defaults>
</compile_context>

<pallas_src>
import jax
import jax.numpy as jnp
from jax import lax
from jax.experimental import pallas as pl
from jax.experimental.pallas import tpu as pltpu

DIM = 20        # conv output channels (hard-coded `dim = 20` in the module)
KSIZE = 19
STRIDE = 3
PAD = 5
BN_EPS = 1e-5


def _round_up(n, m):
    return (n + m - 1) // m * m


def make_fused_kernel(B, L_conv, H):
    assert L_conv % 2 == 1, "row-slab max-pool below assumes odd conv length"
    T = L_conv // 2 + 1          # MaxPool1d(2, padding=1, stride=2) output length
    H4 = 4 * H
    R = T * B                    # valid rows per pooling slab
    R1 = _round_up(R, 8)         # sublane-aligned slab size (zero-padded in the wrapper)
    n_stats = L_conv * B         # rows carrying real conv outputs (BN population size)

    def kernel(p_ref, wconv_ref, g_ref, beta_ref, wih_ref, bih_ref,
               whh_ref, wfcf_ref, wfcb_ref, bfc_ref, o_ref, gx_ref):
        # ---- Conv1d as one im2col matmul (conv bias dropped: cancelled by BN mean) ----
        act = jnp.dot(p_ref[...], wconv_ref[...], preferred_element_type=jnp.float32)

        # ---- Single-pass BatchNorm stats (biased variance, training mode) ----
        # Zero pad rows contribute 0 (no conv bias); subtract the duplicated time-0 rows.
        dup = act[:B, :]
        s = jnp.sum(act, axis=0, keepdims=True) - jnp.sum(dup, axis=0, keepdims=True)
        ss = (jnp.sum(act * act, axis=0, keepdims=True)
              - jnp.sum(dup * dup, axis=0, keepdims=True))
        inv_n = 1.0 / n_stats
        mean = s * inv_n
        var = ss * inv_n - mean * mean
        a = g_ref[...] * lax.rsqrt(var + BN_EPS)
        b = beta_ref[...] - mean * a
        act = jnp.maximum(act * a + b, 0.0)               # folded BN + ReLU

        # ---- MaxPool1d(2,pad=1,stride=2): one aligned max of two R1-row slabs ----
        pooled = jnp.maximum(act[:R1, :], act[R1:, :])    # rows >= R are garbage, never read

        # ---- Hoisted input projection for BOTH directions (fwd|bwd gates -> 8H wide) ----
        gates_x = (jnp.dot(pooled, wih_ref[...], preferred_element_type=jnp.float32)
                   + bih_ref[...])                        # (R1, 8H)
        gx_ref[...] = gates_x[:, :H4]                     # forward gates into VMEM scratch

        # Single-tanh nonlinearity over a whole 4H gate block (PyTorch order i,f,g,o):
        #   i/f/o lanes: sigmoid(x) = 0.5*tanh(0.5*x) + 0.5 ; g lanes: tanh(x)
        # -> one EUP launch per gate block via precomputed per-lane scale/offset.
        lane = lax.broadcasted_iota(jnp.int32, (B, H4), 1)
        is_g = (lane >= 2 * H) & (lane < 3 * H)
        sel = jnp.where(is_g, 1.0, 0.5).astype(jnp.float32)
        off = jnp.where(is_g, 0.0, 0.5).astype(jnp.float32)

        whh_b16 = whh_ref[...]                            # (H, 4H) bf16, loaded once

        # ---- Reverse direction at the last step: h0 == 0 => no Whh_bwd matmul ----
        gb = gates_x[(T - 1) * B:T * B, H4:]              # (B, 4H)
        ab = jnp.tanh(gb * sel) * sel + off
        c_b = ab[:, :H] * ab[:, 2 * H:3 * H]              # i*g   (f*c_prev == 0)
        h_bwd = ab[:, 3 * H:] * jnp.tanh(c_b)             # o*tanh(c)

        # ---- Forward recurrence: 1 bf16 MXU matmul + 2 EUP passes + VPU per step ----
        def step(t, carry):
            h, c = carry                                  # (B, H) f32 each
            mm = jnp.dot(h.astype(jnp.bfloat16), whh_b16,
                         preferred_element_type=jnp.float32)        # (B, 4H)
            g_t = gx_ref[pl.ds(t * B, B), :] + mm
            a_t = jnp.tanh(g_t * sel) * sel + off         # [sig i | sig f | tanh g | sig o]
            c = a_t[:, H:2 * H] * c + a_t[:, :H] * a_t[:, 2 * H:3 * H]
            h = a_t[:, 3 * H:] * jnp.tanh(c)
            return h, c

        h0 = jnp.zeros((B, H), jnp.float32)
        c0 = jnp.zeros((B, H), jnp.float32)
        h_fwd, _ = lax.fori_loop(0, T, step, (h0, c0), unroll=True)

        # ---- Final Linear on output[:, -1] = [h_fwd | h_bwd], w_fc pre-split (no concat) ----
        o_ref[...] = (jnp.dot(h_fwd, wfcf_ref[...], preferred_element_type=jnp.float32)
                      + jnp.dot(h_bwd, wfcb_ref[...], preferred_element_type=jnp.float32)
                      + bfc_ref[...])

    return kernel, T, R1


def lstm_forward(x, params):
    B, L = x.shape
    L_conv = (L + 2 * PAD - KSIZE) // STRIDE + 1
    H = params["whh_f"].shape[0]
    classes = params["w_fc"].shape[1]

    kernel, T, R1 = make_fused_kernel(B, L_conv, H)
    R = T * B

    # im2col in the wrapper (fused XLA gather).  Row layout:
    #   [even conv times (R rows) | zeros (R1-R) | dup time-0 (B) + odd conv times | zeros]
    # so the in-kernel pool is one aligned maximum of act[:R1] and act[R1:].
    x_pad = jnp.pad(x, ((0, 0), (PAD, PAD)))
    k_off = jnp.arange(KSIZE)

    def rows_for(times):                       # time-major / batch-minor patch rows
        idx = times[:, None] * STRIDE + k_off[None, :]          # (n, K)
        return x_pad[:, idx].transpose(1, 0, 2).reshape(-1, KSIZE)

    even_t = jnp.arange(0, L_conv, 2)                                          # T times
    dup_odd_t = jnp.concatenate([jnp.zeros((1,), jnp.int32),
                                 jnp.arange(1, L_conv, 2)])                    # T times
    zpad = jnp.zeros((R1 - R, KSIZE), x.dtype)
    patches = jnp.concatenate([rows_for(even_t), zpad, rows_for(dup_odd_t), zpad], axis=0)

    # Kernel-layout weight prep: bf16 recurrent weights (f32 accumulation in-kernel),
    # final-layer weights split so no lane concat is needed for [h_fwd | h_bwd].
    whh_b16 = params["whh_f"].astype(jnp.bfloat16)       # (H, 4H)
    w_fc_f = params["w_fc"][:H]
    w_fc_b = params["w_fc"][H:]

    flops = 2 * (2 * R1 * KSIZE * DIM + R1 * DIM * 8 * H
                 + T * B * H * 4 * H + 2 * B * H * classes)
    transcendentals = 2 * (T + 1) * B * 4 * H
    bytes_accessed = 4 * (2 * R1 * KSIZE + KSIZE * DIM + 2 * DIM + DIM * 8 * H + 8 * H
                          + 2 * H * classes + classes + B * classes) + 2 * H * 4 * H

    return pl.pallas_call(
        kernel,
        out_shape=jax.ShapeDtypeStruct((B, classes), jnp.float32),
        in_specs=[pl.BlockSpec(memory_space=pltpu.MemorySpace.VMEM)] * 10,
        out_specs=pl.BlockSpec(memory_space=pltpu.MemorySpace.VMEM),
        scratch_shapes=[pltpu.VMEM((R1, 4 * H), jnp.float32)],
        cost_estimate=pl.CostEstimate(flops=flops, transcendentals=transcendentals,
                                      bytes_accessed=bytes_accessed),
    )(patches, params["w_conv"], params["bn_g"], params["bn_b"],
      params["wih_cat"], params["b_cat"], whh_b16, w_fc_f, w_fc_b, params["b_fc"])


def init_params(key, hidden, classes):
    ks = jax.random.split(key, 12)
    H = hidden

    def u(k, shape, fan_in):
        s = 1.0 / (fan_in ** 0.5)
        return jax.random.uniform(k, shape, jnp.float32, -s, s)

    # PyTorch parameter mapping (stored transposed for row-major x @ W):
    #   Conv1d(1,20,19): weight (20,1,19) -> (19,20).  The conv bias is omitted: under
    #     training-mode BatchNorm it cancels exactly and contributes nothing to the output.
    #   LSTM weight_ih_l0 / weight_ih_l0_reverse (4H,20) -> concatenated (20, 8H)
    #   LSTM bias_ih + bias_hh (fwd | reverse)           -> (1, 8H)
    #   LSTM weight_hh_l0 (4H,H) -> (H,4H).  weight_hh_l0_reverse is NOT needed: with zero
    #     initial state its contribution to output[:, -1] is exactly zero.
    #   Linear(2H, classes): weight (C,2H) -> (2H,C)
    wih_f = u(ks[2], (DIM, 4 * H), H)
    wih_b = u(ks[3], (DIM, 4 * H), H)
    b_f = u(ks[4], (1, 4 * H), H) + u(ks[5], (1, 4 * H), H)   # bias_ih + bias_hh
    b_b = u(ks[6], (1, 4 * H), H) + u(ks[7], (1, 4 * H), H)
    return dict(
        w_conv=u(ks[0], (KSIZE, DIM), KSIZE),
        bn_g=jnp.ones((1, DIM), jnp.float32),
        bn_b=jnp.zeros((1, DIM), jnp.float32),
        wih_cat=jnp.concatenate([wih_f, wih_b], axis=1),      # (DIM, 8H)
        b_cat=jnp.concatenate([b_f, b_b], axis=1),            # (1, 8H)
        whh_f=u(ks[8], (H, 4 * H), H),
        w_fc=u(ks[9], (2 * H, classes), 2 * H),
        b_fc=u(ks[10], (1, classes), 2 * H),
    )


if __name__ == "__main__":
    key = jax.random.PRNGKey(0)
    k_x, k_p = jax.random.split(key)

    B, L = 2, 256          # raw 1-D signal (cutlen=256); batch up to 8 is latency-free
    HIDDEN, CLASSES = 32, 4

    x = jax.random.normal(k_x, (B, L), jnp.float32)
    params = init_params(k_p, HIDDEN, CLASSES)

    y = jax.jit(lstm_forward)(x, params)
    jax.block_until_ready(y)
    assert y.shape == (B, CLASSES)
    print("KERNEL_OK")
</pallas_src>

<mosaic_0001>
module attributes {stable_mosaic.version = 11 : i64} {
  func.func @kernel(%arg0: memref<176x19xf32, #tpu.memory_space<vmem>>, %arg1: memref<19x20xf32, #tpu.memory_space<vmem>>, %arg2: memref<1x20xf32, #tpu.memory_space<vmem>>, %arg3: memref<1x20xf32, #tpu.memory_space<vmem>>, %arg4: memref<20x256xf32, #tpu.memory_space<vmem>>, %arg5: memref<1x256xf32, #tpu.memory_space<vmem>>, %arg6: memref<32x128xbf16, #tpu.memory_space<vmem>>, %arg7: memref<32x4xf32, #tpu.memory_space<vmem>>, %arg8: memref<32x4xf32, #tpu.memory_space<vmem>>, %arg9: memref<1x4xf32, #tpu.memory_space<vmem>>, %arg10: memref<2x4xf32, #tpu.memory_space<vmem>>, %arg11: memref<88x128xf32, #tpu.memory_space<vmem>>) attributes {dimension_semantics = [], scalar_prefetch = 0 : i64, scratch_operands = 1 : i64, tpu.core_type = #tpu.core_type<tc>} {
    %c0 = arith.constant 0 : index
    %c0_0 = arith.constant 0 : index
    %0 = vector.load %arg0[%c0, %c0_0] : memref<176x19xf32, #tpu.memory_space<vmem>>, vector<176x19xf32>
    %c0_1 = arith.constant 0 : index
    %c0_2 = arith.constant 0 : index
    %1 = vector.load %arg1[%c0_1, %c0_2] : memref<19x20xf32, #tpu.memory_space<vmem>>, vector<19x20xf32>
    %cst = arith.constant dense<0.000000e+00> : vector<176x20xf32>
    %2 = tpu.matmul %0, %1, %cst {dimension_numbers = #tpu.dot_dimension_numbers<[1], [0], [0], [1], [0, 0, 1, 1], [], []>} : vector<176x19xf32>, vector<19x20xf32>, vector<176x20xf32> -> vector<176x20xf32>
    %3 = vector.extract_strided_slice %2 {offsets = [0, 0], sizes = [2, 20], strides = [1, 1]} : vector<176x20xf32> to vector<2x20xf32>
    %cst_3 = arith.constant dense<0.000000e+00> : vector<20xf32>
    %4 = vector.multi_reduction <add>, %2, %cst_3 [0] : vector<176x20xf32> to vector<20xf32>
    %5 = vector.shape_cast %4 : vector<20xf32> to vector<1x20xf32>
    %cst_4 = arith.constant dense<0.000000e+00> : vector<20xf32>
    %6 = vector.multi_reduction <add>, %3, %cst_4 [0] : vector<2x20xf32> to vector<20xf32>
    %7 = vector.shape_cast %6 : vector<20xf32> to vector<1x20xf32>
    %8 = arith.subf %5, %7 : vector<1x20xf32>
    %9 = arith.mulf %2, %2 : vector<176x20xf32>
    %cst_5 = arith.constant dense<0.000000e+00> : vector<20xf32>
    %10 = vector.multi_reduction <add>, %9, %cst_5 [0] : vector<176x20xf32> to vector<20xf32>
    %11 = vector.shape_cast %10 : vector<20xf32> to vector<1x20xf32>
    %12 = arith.mulf %3, %3 : vector<2x20xf32>
    %cst_6 = arith.constant dense<0.000000e+00> : vector<20xf32>
    %13 = vector.multi_reduction <add>, %12, %cst_6 [0] : vector<2x20xf32> to vector<20xf32>
    %14 = vector.shape_cast %13 : vector<20xf32> to vector<1x20xf32>
    %15 = arith.subf %11, %14 : vector<1x20xf32>
    %cst_7 = arith.constant 0.00602409616 : f32
    %16 = vector.broadcast %cst_7 : f32 to vector<1x20xf32>
    %17 = arith.mulf %8, %16 : vector<1x20xf32>
    %cst_8 = arith.constant 0.00602409616 : f32
    %18 = vector.broadcast %cst_8 : f32 to vector<1x20xf32>
    %19 = arith.mulf %15, %18 : vector<1x20xf32>
    %20 = arith.mulf %17, %17 : vector<1x20xf32>
    %21 = arith.subf %19, %20 : vector<1x20xf32>
    %c0_9 = arith.constant 0 : index
    %c0_10 = arith.constant 0 : index
    %22 = vector.load %arg2[%c0_9, %c0_10] : memref<1x20xf32, #tpu.memory_space<vmem>>, vector<1x20xf32>
    %cst_11 = arith.constant 9.99999974E-6 : f32
    %23 = vector.broadcast %cst_11 : f32 to vector<1x20xf32>
    %24 = arith.addf %21, %23 : vector<1x20xf32>
    %25 = math.rsqrt %24 : vector<1x20xf32>
    %26 = arith.mulf %22, %25 : vector<1x20xf32>
    %c0_12 = arith.constant 0 : index
    %c0_13 = arith.constant 0 : index
    %27 = vector.load %arg3[%c0_12, %c0_13] : memref<1x20xf32, #tpu.memory_space<vmem>>, vector<1x20xf32>
    %28 = arith.mulf %17, %26 : vector<1x20xf32>
    %29 = arith.subf %27, %28 : vector<1x20xf32>
    %30 = vector.broadcast %26 : vector<1x20xf32> to vector<176x20xf32>
    %31 = arith.mulf %2, %30 : vector<176x20xf32>
    %32 = vector.broadcast %29 : vector<1x20xf32> to vector<176x20xf32>
    %33 = arith.addf %31, %32 : vector<176x20xf32>
    %cst_14 = arith.constant 0.000000e+00 : f32
    %34 = vector.broadcast %cst_14 : f32 to vector<176x20xf32>
    %35 = arith.maximumf %33, %34 : vector<176x20xf32>
    %36 = vector.extract_strided_slice %35 {offsets = [0, 0], sizes = [88, 20], strides = [1, 1]} : vector<176x20xf32> to vector<88x20xf32>
    %37 = vector.extract_strided_slice %35 {offsets = [88, 0], sizes = [88, 20], strides = [1, 1]} : vector<176x20xf32> to vector<88x20xf32>
    %38 = arith.maximumf %36, %37 : vector<88x20xf32>
    %c0_15 = arith.constant 0 : index
    %c0_16 = arith.constant 0 : index
    %39 = vector.load %arg4[%c0_15, %c0_16] : memref<20x256xf32, #tpu.memory_space<vmem>>, vector<20x256xf32>
    %cst_17 = arith.constant dense<0.000000e+00> : vector<88x256xf32>
    %40 = tpu.matmul %38, %39, %cst_17 {dimension_numbers = #tpu.dot_dimension_numbers<[1], [0], [0], [1], [0, 0, 1, 1], [], []>} : vector<88x20xf32>, vector<20x256xf32>, vector<88x256xf32> -> vector<88x256xf32>
    %c0_18 = arith.constant 0 : index
    %c0_19 = arith.constant 0 : index
    %41 = vector.load %arg5[%c0_18, %c0_19] : memref<1x256xf32, #tpu.memory_space<vmem>>, vector<1x256xf32>
    %42 = vector.broadcast %41 : vector<1x256xf32> to vector<88x256xf32>
    %43 = arith.addf %40, %42 : vector<88x256xf32>
    %44 = vector.extract_strided_slice %43 {offsets = [0, 0], sizes = [88, 128], strides = [1, 1]} : vector<88x256xf32> to vector<88x128xf32>
    %c0_20 = arith.constant 0 : index
    %c0_21 = arith.constant 0 : index
    %45 = vector.load %arg11[%c0_20, %c0_21] : memref<88x128xf32, #tpu.memory_space<vmem>>, vector<88x128xf32>
    tpu.vector_store %arg11[%c0_20, %c0_21], %44 {strides = array<i32>} : memref<88x128xf32, #tpu.memory_space<vmem>>, vector<88x128xf32>,
    %46 = tpu.iota {dimensions = array<i32: 1>} : vector<2x128xi32>
    %c64_i32 = arith.constant 64 : i32
    %47 = vector.broadcast %c64_i32 : i32 to vector<2x128xi32>
    %48 = arith.cmpi sge, %46, %47 : vector<2x128xi32>
    %c96_i32 = arith.constant 96 : i32
    %49 = vector.broadcast %c96_i32 : i32 to vector<2x128xi32>
    %50 = arith.cmpi slt, %46, %49 : vector<2x128xi32>
    %51 = arith.andi %48, %50 : vector<2x128xi1>
    %cst_22 = arith.constant 1.000000e+00 : f32
    %cst_23 = arith.constant 5.000000e-01 : f32
    %52 = vector.broadcast %cst_22 : f32 to vector<2x128xf32>
    %53 = vector.broadcast %cst_23 : f32 to vector<2x128xf32>
    %54 = arith.select %51, %52, %53 : vector<2x128xi1>, vector<2x128xf32>
    %cst_24 = arith.constant 0.000000e+00 : f32
    %cst_25 = arith.constant 5.000000e-01 : f32
    %55 = vector.broadcast %cst_24 : f32 to vector<2x128xf32>
    %56 = vector.broadcast %cst_25 : f32 to vector<2x128xf32>
    %57 = arith.select %51, %55, %56 : vector<2x128xi1>, vector<2x128xf32>
    %c0_26 = arith.constant 0 : index
    %c0_27 = arith.constant 0 : index
    %58 = vector.load %arg6[%c0_26, %c0_27] : memref<32x128xbf16, #tpu.memory_space<vmem>>, vector<32x128xbf16>
    %59 = vector.extract_strided_slice %43 {offsets = [82, 128], sizes = [2, 128], strides = [1, 1]} : vector<88x256xf32> to vector<2x128xf32>
    %60 = arith.mulf %59, %54 : vector<2x128xf32>
    %61 = math.tanh %60 : vector<2x128xf32>
    %62 = arith.mulf %61, %54 : vector<2x128xf32>
    %63 = arith.addf %62, %57 : vector<2x128xf32>
    %64 = vector.extract_strided_slice %63 {offsets = [0, 0], sizes = [2, 32], strides = [1, 1]} : vector<2x128xf32> to vector<2x32xf32>
    %65 = vector.extract_strided_slice %63 {offsets = [0, 64], sizes = [2, 32], strides = [1, 1]} : vector<2x128xf32> to vector<2x32xf32>
    %66 = arith.mulf %64, %65 : vector<2x32xf32>
    %67 = vector.extract_strided_slice %63 {offsets = [0, 96], sizes = [2, 32], strides = [1, 1]} : vector<2x128xf32> to vector<2x32xf32>
    %68 = math.tanh %66 : vector<2x32xf32>
    %69 = arith.mulf %67, %68 : vector<2x32xf32>
    %cst_28 = arith.constant 0.000000e+00 : f32
    %70 = vector.broadcast %cst_28 : f32 to vector<2x32xf32>
    %cst_29 = arith.constant 0.000000e+00 : f32
    %71 = vector.broadcast %cst_29 : f32 to vector<2x32xf32>
    %c0_i32 = arith.constant 0 : i32
    %72 = arith.truncf %70 : vector<2x32xf32> to vector<2x32xbf16>
    %cst_30 = arith.constant dense<0.000000e+00> : vector<2x128xf32>
    %73 = tpu.matmul %72, %58, %cst_30 {dimension_numbers = #tpu.dot_dimension_numbers<[1], [0], [0], [1], [0, 0, 1, 1], [], []>} : vector<2x32xbf16>, vector<32x128xbf16>, vector<2x128xf32> -> vector<2x128xf32>
    %c2_i32 = arith.constant 2 : i32
    %74 = arith.muli %c0_i32, %c2_i32 : i32
    %75 = arith.index_cast %74 : i32 to index
    %c0_31 = arith.constant 0 : index
    %76 = vector.load %arg11[%75, %c0_31] : memref<88x128xf32, #tpu.memory_space<vmem>>, vector<2x128xf32>
    %77 = arith.addf %76, %73 : vector<2x128xf32>
    %78 = arith.mulf %77, %54 : vector<2x128xf32>
    %79 = math.tanh %78 : vector<2x128xf32>
    %80 = arith.mulf %79, %54 : vector<2x128xf32>
    %81 = arith.addf %80, %57 : vector<2x128xf32>
    %82 = vector.extract_strided_slice %81 {offsets = [0, 32], sizes = [2, 32], strides = [1, 1]} : vector<2x128xf32> to vector<2x32xf32>
    %83 = arith.mulf %82, %71 : vector<2x32xf32>
    %84 = vector.extract_strided_slice %81 {offsets = [0, 0], sizes = [2, 32], strides = [1, 1]} : vector<2x128xf32> to vector<2x32xf32>
    %85 = vector.extract_strided_slice %81 {offsets = [0, 64], sizes = [2, 32], strides = [1, 1]} : vector<2x128xf32> to vector<2x32xf32>
    %86 = arith.mulf %84, %85 : vector<2x32xf32>
    %87 = arith.addf %83, %86 : vector<2x32xf32>
    %88 = vector.extract_strided_slice %81 {offsets = [0, 96], sizes = [2, 32], strides = [1, 1]} : vector<2x128xf32> to vector<2x32xf32>
    %89 = math.tanh %87 : vector<2x32xf32>
    %90 = arith.mulf %88, %89 : vector<2x32xf32>
    %c1_i32 = arith.constant 1 : i32
    %91 = arith.truncf %90 : vector<2x32xf32> to vector<2x32xbf16>
    %cst_32 = arith.constant dense<0.000000e+00> : vector<2x128xf32>
    %92 = tpu.matmul %91, %58, %cst_32 {dimension_numbers = #tpu.dot_dimension_numbers<[1], [0], [0], [1], [0, 0, 1, 1], [], []>} : vector<2x32xbf16>, vector<32x128xbf16>, vector<2x128xf32> -> vector<2x128xf32>
    %c2_i32_33 = arith.constant 2 : i32
    %93 = arith.muli %c1_i32, %c2_i32_33 : i32
    %94 = arith.index_cast %93 : i32 to index
    %c0_34 = arith.constant 0 : index
    %95 = vector.load %arg11[%94, %c0_34] : memref<88x128xf32, #tpu.memory_space<vmem>>, vector<2x128xf32>
    %96 = arith.addf %95, %92 : vector<2x128xf32>
    %97 = arith.mulf %96, %54 : vector<2x128xf32>
    %98 = math.tanh %97 : vector<2x128xf32>
    %99 = arith.mulf %98, %54 : vector<2x128xf32>
    %100 = arith.addf %99, %57 : vector<2x128xf32>
    %101 = vector.extract_strided_slice %100 {offsets = [0, 32], sizes = [2, 32], strides = [1, 1]} : vector<2x128xf32> to vector<2x32xf32>
    %102 = arith.mulf %101, %87 : vector<2x32xf32>
    %103 = vector.extract_strided_slice %100 {offsets = [0, 0], sizes = [2, 32], strides = [1, 1]} : vector<2x128xf32> to vector<2x32xf32>
    %104 = vector.extract_strided_slice %100 {offsets = [0, 64], sizes = [2, 32], strides = [1, 1]} : vector<2x128xf32> to vector<2x32xf32>
    %105 = arith.mulf %103, %104 : vector<2x32xf32>
    %106 = arith.addf %102, %105 : vector<2x32xf32>
    %107 = vector.extract_strided_slice %100 {offsets = [0, 96], sizes = [2, 32], strides = [1, 1]} : vector<2x128xf32> to vector<2x32xf32>
    %108 = math.tanh %106 : vector<2x32xf32>
    %109 = arith.mulf %107, %108 : vector<2x32xf32>
    %c2_i32_35 = arith.constant 2 : i32
    %110 = arith.truncf %109 : vector<2x32xf32> to vector<2x32xbf16>
    %cst_36 = arith.constant dense<0.000000e+00> : vector<2x128xf32>
    %111 = tpu.matmul %110, %58, %cst_36 {dimension_numbers = #tpu.dot_dimension_numbers<[1], [0], [0], [1], [0, 0, 1, 1], [], []>} : vector<2x32xbf16>, vector<32x128xbf16>, vector<2x128xf32> -> vector<2x128xf32>
    %c2_i32_37 = arith.constant 2 : i32
    %112 = arith.muli %c2_i32_35, %c2_i32_37 : i32
    %113 = arith.index_cast %112 : i32 to index
    %c0_38 = arith.constant 0 : index
    %114 = vector.load %arg11[%113, %c0_38] : memref<88x128xf32, #tpu.memory_space<vmem>>, vector<2x128xf32>
    %115 = arith.addf %114, %111 : vector<2x128xf32>
    %116 = arith.mulf %115, %54 : vector<2x128xf32>
    %117 = math.tanh %116 : vector<2x128xf32>
    %118 = arith.mulf %117, %54 : vector<2x128xf32>
    %119 = arith.addf %118, %57 : vector<2x128xf32>
    %120 = vector.extract_strided_slice %119 {offsets = [0, 32], sizes = [2, 32], strides = [1, 1]} : vector<2x128xf32> to vector<2x32xf32>
    %121 = arith.mulf %120, %106 : vector<2x32xf32>
    %122 = vector.extract_strided_slice %119 {offsets = [0, 0], sizes = [2, 32], strides = [1, 1]} : vector<2x128xf32> to vector<2x32xf32>
    %123 = vector.extract_strided_slice %119 {offsets = [0, 64], sizes = [2, 32], strides = [1, 1]} : vector<2x128xf32> to vector<2x32xf32>
    %124 = arith.mulf %122, %123 : vector<2x32xf32>
    %125 = arith.addf %121, %124 : vector<2x32xf32>
    %126 = vector.extract_strided_slice %119 {offsets = [0, 96], sizes = [2, 32], strides = [1, 1]} : vector<2x128xf32> to vector<2x32xf32>
    %127 = math.tanh %125 : vector<2x32xf32>
    %128 = arith.mulf %126, %127 : vector<2x32xf32>
    %c3_i32 = arith.constant 3 : i32
    %129 = arith.truncf %128 : vector<2x32xf32> to vector<2x32xbf16>
    %cst_39 = arith.constant dense<0.000000e+00> : vector<2x128xf32>
    %130 = tpu.matmul %129, %58, %cst_39 {dimension_numbers = #tpu.dot_dimension_numbers<[1], [0], [0], [1], [0, 0, 1, 1], [], []>} : vector<2x32xbf16>, vector<32x128xbf16>, vector<2x128xf32> -> vector<2x128xf32>
    %c2_i32_40 = arith.constant 2 : i32
    %131 = arith.muli %c3_i32, %c2_i32_40 : i32
    %132 = arith.index_cast %131 : i32 to index
    %c0_41 = arith.constant 0 : index
    %133 = vector.load %arg11[%132, %c0_41] : memref<88x128xf32, #tpu.memory_space<vmem>>, vector<2x128xf32>
    %134 = arith.addf %133, %130 : vector<2x128xf32>
    %135 = arith.mulf %134, %54 : vector<2x128xf32>
    %136 = math.tanh %135 : vector<2x128xf32>
    %137 = arith.mulf %136, %54 : vector<2x128xf32>
    %138 = arith.addf %137, %57 : vector<2x128xf32>
    %139 = vector.extract_strided_slice %138 {offsets = [0, 32], sizes = [2, 32], strides = [1, 1]} : vector<2x128xf32> to vector<2x32xf32>
    %140 = arith.mulf %139, %125 : vector<2x32xf32>
    %141 = vector.extract_strided_slice %138 {offsets = [0, 0], sizes = [2, 32], strides = [1, 1]} : vector<2x128xf32> to vector<2x32xf32>
    %142 = vector.extract_strided_slice %138 {offsets = [0, 64], sizes = [2, 32], strides = [1, 1]} : vector<2x128xf32> to vector<2x32xf32>
    %143 = arith.mulf %141, %142 : vector<2x32xf32>
    %144 = arith.addf %140, %143 : vector<2x32xf32>
    %145 = vector.extract_strided_slice %138 {offsets = [0, 96], sizes = [2, 32], strides = [1, 1]} : vector<2x128xf32> to vector<2x32xf32>
    %146 = math.tanh %144 : vector<2x32xf32>
    %147 = arith.mulf %145, %146 : vector<2x32xf32>
    %c4_i32 = arith.constant 4 : i32
    %148 = arith.truncf %147 : vector<2x32xf32> to vector<2x32xbf16>
    %cst_42 = arith.constant dense<0.000000e+00> : vector<2x128xf32>
    %149 = tpu.matmul %148, %58, %cst_42 {dimension_numbers = #tpu.dot_dimension_numbers<[1], [0], [0], [1], [0, 0, 1, 1], [], []>} : vector<2x32xbf16>, vector<32x128xbf16>, vector<2x128xf32> -> vector<2x128xf32>
    %c2_i32_43 = arith.constant 2 : i32
    %150 = arith.muli %c4_i32, %c2_i32_43 : i32
    %151 = arith.index_cast %150 : i32 to index
    %c0_44 = arith.constant 0 : index
    %152 = vector.load %arg11[%151, %c0_44] : memref<88x128xf32, #tpu.memory_space<vmem>>, vector<2x128xf32>
    %153 = arith.addf %152, %149 : vector<2x128xf32>
    %154 = arith.mulf %153, %54 : vector<2x128xf32>
    %155 = math.tanh %154 : vector<2x128xf32>
    %156 = arith.mulf %155, %54 : vector<2x128xf32>
    %157 = arith.addf %156, %57 : vector<2x128xf32>
    %158 = vector.extract_strided_slice %157 {offsets = [0, 32], sizes = [2, 32], strides = [1, 1]} : vector<2x128xf32> to vector<2x32xf32>
    %159 = arith.mulf %158, %144 : vector<2x32xf32>
    %160 = vector.extract_strided_slice %157 {offsets = [0, 0], sizes = [2, 32], strides = [1, 1]} : vector<2x128xf32> to vector<2x32xf32>
    %161 = vector.extract_strided_slice %157 {offsets = [0, 64], sizes = [2, 32], strides = [1, 1]} : vector<2x128xf32> to vector<2x32xf32>
    %162 = arith.mulf %160, %161 : vector<2x32xf32>
    %163 = arith.addf %159, %162 : vector<2x32xf32>
    %164 = vector.extract_strided_slice %157 {offsets = [0, 96], sizes = [2, 32], strides = [1, 1]} : vector<2x128xf32> to vector<2x32xf32>
    %165 = math.tanh %163 : vector<2x32xf32>
    %166 = arith.mulf %164, %165 : vector<2x32xf32>
    %c5_i32 = arith.constant 5 : i32
    %167 = arith.truncf %166 : vector<2x32xf32> to vector<2x32xbf16>
    %cst_45 = arith.constant dense<0.000000e+00> : vector<2x128xf32>
    %168 = tpu.matmul %167, %58, %cst_45 {dimension_numbers = #tpu.dot_dimension_numbers<[1], [0], [0], [1], [0, 0, 1, 1], [], []>} : vector<2x32xbf16>, vector<32x128xbf16>, vector<2x128xf32> -> vector<2x128xf32>
    %c2_i32_46 = arith.constant 2 : i32
    %169 = arith.muli %c5_i32, %c2_i32_46 : i32
    %170 = arith.index_cast %169 : i32 to index
    %c0_47 = arith.constant 0 : index
    %171 = vector.load %arg11[%170, %c0_47] : memref<88x128xf32, #tpu.memory_space<vmem>>, vector<2x128xf32>
    %172 = arith.addf %171, %168 : vector<2x128xf32>
    %173 = arith.mulf %172, %54 : vector<2x128xf32>
    %174 = math.tanh %173 : vector<2x128xf32>
    %175 = arith.mulf %174, %54 : vector<2x128xf32>
    %176 = arith.addf %175, %57 : vector<2x128xf32>
    %177 = vector.extract_strided_slice %176 {offsets = [0, 32], sizes = [2, 32], strides = [1, 1]} : vector<2x128xf32> to vector<2x32xf32>
    %178 = arith.mulf %177, %163 : vector<2x32xf32>
    %179 = vector.extract_strided_slice %176 {offsets = [0, 0], sizes = [2, 32], strides = [1, 1]} : vector<2x128xf32> to vector<2x32xf32>
    %180 = vector.extract_strided_slice %176 {offsets = [0, 64], sizes = [2, 32], strides = [1, 1]} : vector<2x128xf32> to vector<2x32xf32>
    %181 = arith.mulf %179, %180 : vector<2x32xf32>
    %182 = arith.addf %178, %181 : vector<2x32xf32>
    %183 = vector.extract_strided_slice %176 {offsets = [0, 96], sizes = [2, 32], strides = [1, 1]} : vector<2x128xf32> to vector<2x32xf32>
    %184 = math.tanh %182 : vector<2x32xf32>
    %185 = arith.mulf %183, %184 : vector<2x32xf32>
    %c6_i32 = arith.constant 6 : i32
    %186 = arith.truncf %185 : vector<2x32xf32> to vector<2x32xbf16>
    %cst_48 = arith.constant dense<0.000000e+00> : vector<2x128xf32>
    %187 = tpu.matmul %186, %58, %cst_48 {dimension_numbers = #tpu.dot_dimension_numbers<[1], [0], [0], [1], [0, 0, 1, 1], [], []>} : vector<2x32xbf16>, vector<32x128xbf16>, vector<2x128xf32> -> vector<2x128xf32>
    %c2_i32_49 = arith.constant 2 : i32
    %188 = arith.muli %c6_i32, %c2_i32_49 : i32
    %189 = arith.index_cast %188 : i32 to index
    %c0_50 = arith.constant 0 : index
    %190 = vector.load %arg11[%189, %c0_50] : memref<88x128xf32, #tpu.memory_space<vmem>>, vector<2x128xf32>
    %191 = arith.addf %190, %187 : vector<2x128xf32>
    %192 = arith.mulf %191, %54 : vector<2x128xf32>
    %193 = math.tanh %192 : vector<2x128xf32>
    %194 = arith.mulf %193, %54 : vector<2x128xf32>
    %195 = arith.addf %194, %57 : vector<2x128xf32>
    %196 = vector.extract_strided_slice %195 {offsets = [0, 32], sizes = [2, 32], strides = [1, 1]} : vector<2x128xf32> to vector<2x32xf32>
    %197 = arith.mulf %196, %182 : vector<2x32xf32>
    %198 = vector.extract_strided_slice %195 {offsets = [0, 0], sizes = [2, 32], strides = [1, 1]} : vector<2x128xf32> to vector<2x32xf32>
    %199 = vector.extract_strided_slice %195 {offsets = [0, 64], sizes = [2, 32], strides = [1, 1]} : vector<2x128xf32> to vector<2x32xf32>
    %200 = arith.mulf %198, %199 : vector<2x32xf32>
    %201 = arith.addf %197, %200 : vector<2x32xf32>
    %202 = vector.extract_strided_slice %195 {offsets = [0, 96], sizes = [2, 32], strides = [1, 1]} : vector<2x128xf32> to vector<2x32xf32>
    %203 = math.tanh %201 : vector<2x32xf32>
    %204 = arith.mulf %202, %203 : vector<2x32xf32>
    %c7_i32 = arith.constant 7 : i32
    %205 = arith.truncf %204 : vector<2x32xf32> to vector<2x32xbf16>
    %cst_51 = arith.constant dense<0.000000e+00> : vector<2x128xf32>
    %206 = tpu.matmul %205, %58, %cst_51 {dimension_numbers = #tpu.dot_dimension_numbers<[1], [0], [0], [1], [0, 0, 1, 1], [], []>} : vector<2x32xbf16>, vector<32x128xbf16>, vector<2x128xf32> -> vector<2x128xf32>
    %c2_i32_52 = arith.constant 2 : i32
    %207 = arith.muli %c7_i32, %c2_i32_52 : i32
    %208 = arith.index_cast %207 : i32 to index
    %c0_53 = arith.constant 0 : index
    %209 = vector.load %arg11[%208, %c0_53] : memref<88x128xf32, #tpu.memory_space<vmem>>, vector<2x128xf32>
    %210 = arith.addf %209, %206 : vector<2x128xf32>
    %211 = arith.mulf %210, %54 : vector<2x128xf32>
    %212 = math.tanh %211 : vector<2x128xf32>
    %213 = arith.mulf %212, %54 : vector<2x128xf32>
    %214 = arith.addf %213, %57 : vector<2x128xf32>
    %215 = vector.extract_strided_slice %214 {offsets = [0, 32], sizes = [2, 32], strides = [1, 1]} : vector<2x128xf32> to vector<2x32xf32>
    %216 = arith.mulf %215, %201 : vector<2x32xf32>
    %217 = vector.extract_strided_slice %214 {offsets = [0, 0], sizes = [2, 32], strides = [1, 1]} : vector<2x128xf32> to vector<2x32xf32>
    %218 = vector.extract_strided_slice %214 {offsets = [0, 64], sizes = [2, 32], strides = [1, 1]} : vector<2x128xf32> to vector<2x32xf32>
    %219 = arith.mulf %217, %218 : vector<2x32xf32>
    %220 = arith.addf %216, %219 : vector<2x32xf32>
    %221 = vector.extract_strided_slice %214 {offsets = [0, 96], sizes = [2, 32], strides = [1, 1]} : vector<2x128xf32> to vector<2x32xf32>
    %222 = math.tanh %220 : vector<2x32xf32>
    %223 = arith.mulf %221, %222 : vector<2x32xf32>
    %c8_i32 = arith.constant 8 : i32
    %224 = arith.truncf %223 : vector<2x32xf32> to vector<2x32xbf16>
    %cst_54 = arith.constant dense<0.000000e+00> : vector<2x128xf32>
    %225 = tpu.matmul %224, %58, %cst_54 {dimension_numbers = #tpu.dot_dimension_numbers<[1], [0], [0], [1], [0, 0, 1, 1], [], []>} : vector<2x32xbf16>, vector<32x128xbf16>, vector<2x128xf32> -> vector<2x128xf32>
    %c2_i32_55 = arith.constant 2 : i32
    %226 = arith.muli %c8_i32, %c2_i32_55 : i32
    %227 = arith.index_cast %226 : i32 to index
    %c0_56 = arith.constant 0 : index
    %228 = vector.load %arg11[%227, %c0_56] : memref<88x128xf32, #tpu.memory_space<vmem>>, vector<2x128xf32>
    %229 = arith.addf %228, %225 : vector<2x128xf32>
    %230 = arith.mulf %229, %54 : vector<2x128xf32>
    %231 = math.tanh %230 : vector<2x128xf32>
    %232 = arith.mulf %231, %54 : vector<2x128xf32>
    %233 = arith.addf %232, %57 : vector<2x128xf32>
    %234 = vector.extract_strided_slice %233 {offsets = [0, 32], sizes = [2, 32], strides = [1, 1]} : vector<2x128xf32> to vector<2x32xf32>
    %235 = arith.mulf %234, %220 : vector<2x32xf32>
    %236 = vector.extract_strided_slice %233 {offsets = [0, 0], sizes = [2, 32], strides = [1, 1]} : vector<2x128xf32> to vector<2x32xf32>
    %237 = vector.extract_strided_slice %233 {offsets = [0, 64], sizes = [2, 32], strides = [1, 1]} : vector<2x128xf32> to vector<2x32xf32>
    %238 = arith.mulf %236, %237 : vector<2x32xf32>
    %239 = arith.addf %235, %238 : vector<2x32xf32>
    %240 = vector.extract_strided_slice %233 {offsets = [0, 96], sizes = [2, 32], strides = [1, 1]} : vector<2x128xf32> to vector<2x32xf32>
    %241 = math.tanh %239 : vector<2x32xf32>
    %242 = arith.mulf %240, %241 : vector<2x32xf32>
    %c9_i32 = arith.constant 9 : i32
    %243 = arith.truncf %242 : vector<2x32xf32> to vector<2x32xbf16>
    %cst_57 = arith.constant dense<0.000000e+00> : vector<2x128xf32>
    %244 = tpu.matmul %243, %58, %cst_57 {dimension_numbers = #tpu.dot_dimension_numbers<[1], [0], [0], [1], [0, 0, 1, 1], [], []>} : vector<2x32xbf16>, vector<32x128xbf16>, vector<2x128xf32> -> vector<2x128xf32>
    %c2_i32_58 = arith.constant 2 : i32
    %245 = arith.muli %c9_i32, %c2_i32_58 : i32
    %246 = arith.index_cast %245 : i32 to index
    %c0_59 = arith.constant 0 : index
    %247 = vector.load %arg11[%246, %c0_59] : memref<88x128xf32, #tpu.memory_space<vmem>>, vector<2x128xf32>
    %248 = arith.addf %247, %244 : vector<2x128xf32>
    %249 = arith.mulf %248, %54 : vector<2x128xf32>
    %250 = math.tanh %249 : vector<2x128xf32>
    %251 = arith.mulf %250, %54 : vector<2x128xf32>
    %252 = arith.addf %251, %57 : vector<2x128xf32>
    %253 = vector.extract_strided_slice %252 {offsets = [0, 32], sizes = [2, 32], strides = [1, 1]} : vector<2x128xf32> to vector<2x32xf32>
    %254 = arith.mulf %253, %239 : vector<2x32xf32>
    %255 = vector.extract_strided_slice %252 {offsets = [0, 0], sizes = [2, 32], strides = [1, 1]} : vector<2x128xf32> to vector<2x32xf32>
    %256 = vector.extract_strided_slice %252 {offsets = [0, 64], sizes = [2, 32], strides = [1, 1]} : vector<2x128xf32> to vector<2x32xf32>
    %257 = arith.mulf %255, %256 : vector<2x32xf32>
    %258 = arith.addf %254, %257 : vector<2x32xf32>
    %259 = vector.extract_strided_slice %252 {offsets = [0, 96], sizes = [2, 32], strides = [1, 1]} : vector<2x128xf32> to vector<2x32xf32>
    %260 = math.tanh %258 : vector<2x32xf32>
    %261 = arith.mulf %259, %260 : vector<2x32xf32>
    %c10_i32 = arith.constant 10 : i32
    %262 = arith.truncf %261 : vector<2x32xf32> to vector<2x32xbf16>
    %cst_60 = arith.constant dense<0.000000e+00> : vector<2x128xf32>
    %263 = tpu.matmul %262, %58, %cst_60 {dimension_numbers = #tpu.dot_dimension_numbers<[1], [0], [0], [1], [0, 0, 1, 1], [], []>} : vector<2x32xbf16>, vector<32x128xbf16>, vector<2x128xf32> -> vector<2x128xf32>
    %c2_i32_61 = arith.constant 2 : i32
    %264 = arith.muli %c10_i32, %c2_i32_61 : i32
    %265 = arith.index_cast %264 : i32 to index
    %c0_62 = arith.constant 0 : index
    %266 = vector.load %arg11[%265, %c0_62] : memref<88x128xf32, #tpu.memory_space<vmem>>, vector<2x128xf32>
    %267 = arith.addf %266, %263 : vector<2x128xf32>
    %268 = arith.mulf %267, %54 : vector<2x128xf32>
    %269 = math.tanh %268 : vector<2x128xf32>
    %270 = arith.mulf %269, %54 : vector<2x128xf32>
    %271 = arith.addf %270, %57 : vector<2x128xf32>
    %272 = vector.extract_strided_slice %271 {offsets = [0, 32], sizes = [2, 32], strides = [1, 1]} : vector<2x128xf32> to vector<2x32xf32>
    %273 = arith.mulf %272, %258 : vector<2x32xf32>
    %274 = vector.extract_strided_slice %271 {offsets = [0, 0], sizes = [2, 32], strides = [1, 1]} : vector<2x128xf32> to vector<2x32xf32>
    %275 = vector.extract_strided_slice %271 {offsets = [0, 64], sizes = [2, 32], strides = [1, 1]} : vector<2x128xf32> to vector<2x32xf32>
    %276 = arith.mulf %274, %275 : vector<2x32xf32>
    %277 = arith.addf %273, %276 : vector<2x32xf32>
    %278 = vector.extract_strided_slice %271 {offsets = [0, 96], sizes = [2, 32], strides = [1, 1]} : vector<2x128xf32> to vector<2x32xf32>
    %279 = math.tanh %277 : vector<2x32xf32>
    %280 = arith.mulf %278, %279 : vector<2x32xf32>
    %c11_i32 = arith.constant 11 : i32
    %281 = arith.truncf %280 : vector<2x32xf32> to vector<2x32xbf16>
    %cst_63 = arith.constant dense<0.000000e+00> : vector<2x128xf32>
    %282 = tpu.matmul %281, %58, %cst_63 {dimension_numbers = #tpu.dot_dimension_numbers<[1], [0], [0], [1], [0, 0, 1, 1], [], []>} : vector<2x32xbf16>, vector<32x128xbf16>, vector<2x128xf32> -> vector<2x128xf32>
    %c2_i32_64 = arith.constant 2 : i32
    %283 = arith.muli %c11_i32, %c2_i32_64 : i32
    %284 = arith.index_cast %283 : i32 to index
    %c0_65 = arith.constant 0 : index
    %285 = vector.load %arg11[%284, %c0_65] : memref<88x128xf32, #tpu.memory_space<vmem>>, vector<2x128xf32>
    %286 = arith.addf %285, %282 : vector<2x128xf32>
    %287 = arith.mulf %286, %54 : vector<2x128xf32>
    %288 = math.tanh %287 : vector<2x128xf32>
    %289 = arith.mulf %288, %54 : vector<2x128xf32>
    %290 = arith.addf %289, %57 : vector<2x128xf32>
    %291 = vector.extract_strided_slice %290 {offsets = [0, 32], sizes = [2, 32], strides = [1, 1]} : vector<2x128xf32> to vector<2x32xf32>
    %292 = arith.mulf %291, %277 : vector<2x32xf32>
    %293 = vector.extract_strided_slice %290 {offsets = [0, 0], sizes = [2, 32], strides = [1, 1]} : vector<2x128xf32> to vector<2x32xf32>
    %294 = vector.extract_strided_slice %290 {offsets = [0, 64], sizes = [2, 32], strides = [1, 1]} : vector<2x128xf32> to vector<2x32xf32>
    %295 = arith.mulf %293, %294 : vector<2x32xf32>
    %296 = arith.addf %292, %295 : vector<2x32xf32>
    %297 = vector.extract_strided_slice %290 {offsets = [0, 96], sizes = [2, 32], strides = [1, 1]} : vector<2x128xf32> to vector<2x32xf32>
    %298 = math.tanh %296 : vector<2x32xf32>
    %299 = arith.mulf %297, %298 : vector<2x32xf32>
    %c12_i32 = arith.constant 12 : i32
    %300 = arith.truncf %299 : vector<2x32xf32> to vector<2x32xbf16>
    %cst_66 = arith.constant dense<0.000000e+00> : vector<2x128xf32>
    %301 = tpu.matmul %300, %58, %cst_66 {dimension_numbers = #tpu.dot_dimension_numbers<[1], [0], [0], [1], [0, 0, 1, 1], [], []>} : vector<2x32xbf16>, vector<32x128xbf16>, vector<2x128xf32> -> vector<2x128xf32>
    %c2_i32_67 = arith.constant 2 : i32
    %302 = arith.muli %c12_i32, %c2_i32_67 : i32
    %303 = arith.index_cast %302 : i32 to index
    %c0_68 = arith.constant 0 : index
    %304 = vector.load %arg11[%303, %c0_68] : memref<88x128xf32, #tpu.memory_space<vmem>>, vector<2x128xf32>
    %305 = arith.addf %304, %301 : vector<2x128xf32>
    %306 = arith.mulf %305, %54 : vector<2x128xf32>
    %307 = math.tanh %306 : vector<2x128xf32>
    %308 = arith.mulf %307, %54 : vector<2x128xf32>
    %309 = arith.addf %308, %57 : vector<2x128xf32>
    %310 = vector.extract_strided_slice %309 {offsets = [0, 32], sizes = [2, 32], strides = [1, 1]} : vector<2x128xf32> to vector<2x32xf32>
    %311 = arith.mulf %310, %296 : vector<2x32xf32>
    %312 = vector.extract_strided_slice %309 {offsets = [0, 0], sizes = [2, 32], strides = [1, 1]} : vector<2x128xf32> to vector<2x32xf32>
    %313 = vector.extract_strided_slice %309 {offsets = [0, 64], sizes = [2, 32], strides = [1, 1]} : vector<2x128xf32> to vector<2x32xf32>
    %314 = arith.mulf %312, %313 : vector<2x32xf32>
    %315 = arith.addf %311, %314 : vector<2x32xf32>
    %316 = vector.extract_strided_slice %309 {offsets = [0, 96], sizes = [2, 32], strides = [1, 1]} : vector<2x128xf32> to vector<2x32xf32>
    %317 = math.tanh %315 : vector<2x32xf32>
    %318 = arith.mulf %316, %317 : vector<2x32xf32>
    %c13_i32 = arith.constant 13 : i32
    %319 = arith.truncf %318 : vector<2x32xf32> to vector<2x32xbf16>
    %cst_69 = arith.constant dense<0.000000e+00> : vector<2x128xf32>
    %320 = tpu.matmul %319, %58, %cst_69 {dimension_numbers = #tpu.dot_dimension_numbers<[1], [0], [0], [1], [0, 0, 1, 1], [], []>} : vector<2x32xbf16>, vector<32x128xbf16>, vector<2x128xf32> -> vector<2x128xf32>
    %c2_i32_70 = arith.constant 2 : i32
    %321 = arith.muli %c13_i32, %c2_i32_70 : i32
    %322 = arith.index_cast %321 : i32 to index
    %c0_71 = arith.constant 0 : index
    %323 = vector.load %arg11[%322, %c0_71] : memref<88x128xf32, #tpu.memory_space<vmem>>, vector<2x128xf32>
    %324 = arith.addf %323, %320 : vector<2x128xf32>
    %325 = arith.mulf %324, %54 : vector<2x128xf32>
    %326 = math.tanh %325 : vector<2x128xf32>
    %327 = arith.mulf %326, %54 : vector<2x128xf32>
    %328 = arith.addf %327, %57 : vector<2x128xf32>
    %329 = vector.extract_strided_slice %328 {offsets = [0, 32], sizes = [2, 32], strides = [1, 1]} : vector<2x128xf32> to vector<2x32xf32>
    %330 = arith.mulf %329, %315 : vector<2x32xf32>
    %331 = vector.extract_strided_slice %328 {offsets = [0, 0], sizes = [2, 32], strides = [1, 1]} : vector<2x128xf32> to vector<2x32xf32>
    %332 = vector.extract_strided_slice %328 {offsets = [0, 64], sizes = [2, 32], strides = [1, 1]} : vector<2x128xf32> to vector<2x32xf32>
    %333 = arith.mulf %331, %332 : vector<2x32xf32>
    %334 = arith.addf %330, %333 : vector<2x32xf32>
    %335 = vector.extract_strided_slice %328 {offsets = [0, 96], sizes = [2, 32], strides = [1, 1]} : vector<2x128xf32> to vector<2x32xf32>
    %336 = math.tanh %334 : vector<2x32xf32>
    %337 = arith.mulf %335, %336 : vector<2x32xf32>
    %c14_i32 = arith.constant 14 : i32
    %338 = arith.truncf %337 : vector<2x32xf32> to vector<2x32xbf16>
    %cst_72 = arith.constant dense<0.000000e+00> : vector<2x128xf32>
    %339 = tpu.matmul %338, %58, %cst_72 {dimension_numbers = #tpu.dot_dimension_numbers<[1], [0], [0], [1], [0, 0, 1, 1], [], []>} : vector<2x32xbf16>, vector<32x128xbf16>, vector<2x128xf32> -> vector<2x128xf32>
    %c2_i32_73 = arith.constant 2 : i32
    %340 = arith.muli %c14_i32, %c2_i32_73 : i32
    %341 = arith.index_cast %340 : i32 to index
    %c0_74 = arith.constant 0 : index
    %342 = vector.load %arg11[%341, %c0_74] : memref<88x128xf32, #tpu.memory_space<vmem>>, vector<2x128xf32>
    %343 = arith.addf %342, %339 : vector<2x128xf32>
    %344 = arith.mulf %343, %54 : vector<2x128xf32>
    %345 = math.tanh %344 : vector<2x128xf32>
    %346 = arith.mulf %345, %54 : vector<2x128xf32>
    %347 = arith.addf %346, %57 : vector<2x128xf32>
    %348 = vector.extract_strided_slice %347 {offsets = [0, 32], sizes = [2, 32], strides = [1, 1]} : vector<2x128xf32> to vector<2x32xf32>
    %349 = arith.mulf %348, %334 : vector<2x32xf32>
    %350 = vector.extract_strided_slice %347 {offsets = [0, 0], sizes = [2, 32], strides = [1, 1]} : vector<2x128xf32> to vector<2x32xf32>
    %351 = vector.extract_strided_slice %347 {offsets = [0, 64], sizes = [2, 32], strides = [1, 1]} : vector<2x128xf32> to vector<2x32xf32>
    %352 = arith.mulf %350, %351 : vector<2x32xf32>
    %353 = arith.addf %349, %352 : vector<2x32xf32>
    %354 = vector.extract_strided_slice %347 {offsets = [0, 96], sizes = [2, 32], strides = [1, 1]} : vector<2x128xf32> to vector<2x32xf32>
    %355 = math.tanh %353 : vector<2x32xf32>
    %356 = arith.mulf %354, %355 : vector<2x32xf32>
    %c15_i32 = arith.constant 15 : i32
    %357 = arith.truncf %356 : vector<2x32xf32> to vector<2x32xbf16>
    %cst_75 = arith.constant dense<0.000000e+00> : vector<2x128xf32>
    %358 = tpu.matmul %357, %58, %cst_75 {dimension_numbers = #tpu.dot_dimension_numbers<[1], [0], [0], [1], [0, 0, 1, 1], [], []>} : vector<2x32xbf16>, vector<32x128xbf16>, vector<2x128xf32> -> vector<2x128xf32>
    %c2_i32_76 = arith.constant 2 : i32
    %359 = arith.muli %c15_i32, %c2_i32_76 : i32
    %360 = arith.index_cast %359 : i32 to index
    %c0_77 = arith.constant 0 : index
    %361 = vector.load %arg11[%360, %c0_77] : memref<88x128xf32, #tpu.memory_space<vmem>>, vector<2x128xf32>
    %362 = arith.addf %361, %358 : vector<2x128xf32>
    %363 = arith.mulf %362, %54 : vector<2x128xf32>
    %364 = math.tanh %363 : vector<2x128xf32>
    %365 = arith.mulf %364, %54 : vector<2x128xf32>
    %366 = arith.addf %365, %57 : vector<2x128xf32>
    %367 = vector.extract_strided_slice %366 {offsets = [0, 32], sizes = [2, 32], strides = [1, 1]} : vector<2x128xf32> to vector<2x32xf32>
    %368 = arith.mulf %367, %353 : vector<2x32xf32>
    %369 = vector.extract_strided_slice %366 {offsets = [0, 0], sizes = [2, 32], strides = [1, 1]} : vector<2x128xf32> to vector<2x32xf32>
    %370 = vector.extract_strided_slice %366 {offsets = [0, 64], sizes = [2, 32], strides = [1, 1]} : vector<2x128xf32> to vector<2x32xf32>
    %371 = arith.mulf %369, %370 : vector<2x32xf32>
    %372 = arith.addf %368, %371 : vector<2x32xf32>
    %373 = vector.extract_strided_slice %366 {offsets = [0, 96], sizes = [2, 32], strides = [1, 1]} : vector<2x128xf32> to vector<2x32xf32>
    %374 = math.tanh %372 : vector<2x32xf32>
    %375 = arith.mulf %373, %374 : vector<2x32xf32>
    %c16_i32 = arith.constant 16 : i32
    %376 = arith.truncf %375 : vector<2x32xf32> to vector<2x32xbf16>
    %cst_78 = arith.constant dense<0.000000e+00> : vector<2x128xf32>
    %377 = tpu.matmul %376, %58, %cst_78 {dimension_numbers = #tpu.dot_dimension_numbers<[1], [0], [0], [1], [0, 0, 1, 1], [], []>} : vector<2x32xbf16>, vector<32x128xbf16>, vector<2x128xf32> -> vector<2x128xf32>
    %c2_i32_79 = arith.constant 2 : i32
    %378 = arith.muli %c16_i32, %c2_i32_79 : i32
    %379 = arith.index_cast %378 : i32 to index
    %c0_80 = arith.constant 0 : index
    %380 = vector.load %arg11[%379, %c0_80] : memref<88x128xf32, #tpu.memory_space<vmem>>, vector<2x128xf32>
    %381 = arith.addf %380, %377 : vector<2x128xf32>
    %382 = arith.mulf %381, %54 : vector<2x128xf32>
    %383 = math.tanh %382 : vector<2x128xf32>
    %384 = arith.mulf %383, %54 : vector<2x128xf32>
    %385 = arith.addf %384, %57 : vector<2x128xf32>
    %386 = vector.extract_strided_slice %385 {offsets = [0, 32], sizes = [2, 32], strides = [1, 1]} : vector<2x128xf32> to vector<2x32xf32>
    %387 = arith.mulf %386, %372 : vector<2x32xf32>
    %388 = vector.extract_strided_slice %385 {offsets = [0, 0], sizes = [2, 32], strides = [1, 1]} : vector<2x128xf32> to vector<2x32xf32>
    %389 = vector.extract_strided_slice %385 {offsets = [0, 64], sizes = [2, 32], strides = [1, 1]} : vector<2x128xf32> to vector<2x32xf32>
    %390 = arith.mulf %388, %389 : vector<2x32xf32>
    %391 = arith.addf %387, %390 : vector<2x32xf32>
    %392 = vector.extract_strided_slice %385 {offsets = [0, 96], sizes = [2, 32], strides = [1, 1]} : vector<2x128xf32> to vector<2x32xf32>
    %393 = math.tanh %391 : vector<2x32xf32>
    %394 = arith.mulf %392, %393 : vector<2x32xf32>
    %c17_i32 = arith.constant 17 : i32
    %395 = arith.truncf %394 : vector<2x32xf32> to vector<2x32xbf16>
    %cst_81 = arith.constant dense<0.000000e+00> : vector<2x128xf32>
    %396 = tpu.matmul %395, %58, %cst_81 {dimension_numbers = #tpu.dot_dimension_numbers<[1], [0], [0], [1], [0, 0, 1, 1], [], []>} : vector<2x32xbf16>, vector<32x128xbf16>, vector<2x128xf32> -> vector<2x128xf32>
    %c2_i32_82 = arith.constant 2 : i32
    %397 = arith.muli %c17_i32, %c2_i32_82 : i32
    %398 = arith.index_cast %397 : i32 to index
    %c0_83 = arith.constant 0 : index
    %399 = vector.load %arg11[%398, %c0_83] : memref<88x128xf32, #tpu.memory_space<vmem>>, vector<2x128xf32>
    %400 = arith.addf %399, %396 : vector<2x128xf32>
    %401 = arith.mulf %400, %54 : vector<2x128xf32>
    %402 = math.tanh %401 : vector<2x128xf32>
    %403 = arith.mulf %402, %54 : vector<2x128xf32>
    %404 = arith.addf %403, %57 : vector<2x128xf32>
    %405 = vector.extract_strided_slice %404 {offsets = [0, 32], sizes = [2, 32], strides = [1, 1]} : vector<2x128xf32> to vector<2x32xf32>
    %406 = arith.mulf %405, %391 : vector<2x32xf32>
    %407 = vector.extract_strided_slice %404 {offsets = [0, 0], sizes = [2, 32], strides = [1, 1]} : vector<2x128xf32> to vector<2x32xf32>
    %408 = vector.extract_strided_slice %404 {offsets = [0, 64], sizes = [2, 32], strides = [1, 1]} : vector<2x128xf32> to vector<2x32xf32>
    %409 = arith.mulf %407, %408 : vector<2x32xf32>
    %410 = arith.addf %406, %409 : vector<2x32xf32>
    %411 = vector.extract_strided_slice %404 {offsets = [0, 96], sizes = [2, 32], strides = [1, 1]} : vector<2x128xf32> to vector<2x32xf32>
    %412 = math.tanh %410 : vector<2x32xf32>
    %413 = arith.mulf %411, %412 : vector<2x32xf32>
    %c18_i32 = arith.constant 18 : i32
    %414 = arith.truncf %413 : vector<2x32xf32> to vector<2x32xbf16>
    %cst_84 = arith.constant dense<0.000000e+00> : vector<2x128xf32>
    %415 = tpu.matmul %414, %58, %cst_84 {dimension_numbers = #tpu.dot_dimension_numbers<[1], [0], [0], [1], [0, 0, 1, 1], [], []>} : vector<2x32xbf16>, vector<32x128xbf16>, vector<2x128xf32> -> vector<2x128xf32>
    %c2_i32_85 = arith.constant 2 : i32
    %416 = arith.muli %c18_i32, %c2_i32_85 : i32
    %417 = arith.index_cast %416 : i32 to index
    %c0_86 = arith.constant 0 : index
    %418 = vector.load %arg11[%417, %c0_86] : memref<88x128xf32, #tpu.memory_space<vmem>>, vector<2x128xf32>
    %419 = arith.addf %418, %415 : vector<2x128xf32>
    %420 = arith.mulf %419, %54 : vector<2x128xf32>
    %421 = math.tanh %420 : vector<2x128xf32>
    %422 = arith.mulf %421, %54 : vector<2x128xf32>
    %423 = arith.addf %422, %57 : vector<2x128xf32>
    %424 = vector.extract_strided_slice %423 {offsets = [0, 32], sizes = [2, 32], strides = [1, 1]} : vector<2x128xf32> to vector<2x32xf32>
    %425 = arith.mulf %424, %410 : vector<2x32xf32>
    %426 = vector.extract_strided_slice %423 {offsets = [0, 0], sizes = [2, 32], strides = [1, 1]} : vector<2x128xf32> to vector<2x32xf32>
    %427 = vector.extract_strided_slice %423 {offsets = [0, 64], sizes = [2, 32], strides = [1, 1]} : vector<2x128xf32> to vector<2x32xf32>
    %428 = arith.mulf %426, %427 : vector<2x32xf32>
    %429 = arith.addf %425, %428 : vector<2x32xf32>
    %430 = vector.extract_strided_slice %423 {offsets = [0, 96], sizes = [2, 32], strides = [1, 1]} : vector<2x128xf32> to vector<2x32xf32>
    %431 = math.tanh %429 : vector<2x32xf32>
    %432 = arith.mulf %430, %431 : vector<2x32xf32>
    %c19_i32 = arith.constant 19 : i32
    %433 = arith.truncf %432 : vector<2x32xf32> to vector<2x32xbf16>
    %cst_87 = arith.constant dense<0.000000e+00> : vector<2x128xf32>
    %434 = tpu.matmul %433, %58, %cst_87 {dimension_numbers = #tpu.dot_dimension_numbers<[1], [0], [0], [1], [0, 0, 1, 1], [], []>} : vector<2x32xbf16>, vector<32x128xbf16>, vector<2x128xf32> -> vector<2x128xf32>
    %c2_i32_88 = arith.constant 2 : i32
    %435 = arith.muli %c19_i32, %c2_i32_88 : i32
    %436 = arith.index_cast %435 : i32 to index
    %c0_89 = arith.constant 0 : index
    %437 = vector.load %arg11[%436, %c0_89] : memref<88x128xf32, #tpu.memory_space<vmem>>, vector<2x128xf32>
    %438 = arith.addf %437, %434 : vector<2x128xf32>
    %439 = arith.mulf %438, %54 : vector<2x128xf32>
    %440 = math.tanh %439 : vector<2x128xf32>
    %441 = arith.mulf %440, %54 : vector<2x128xf32>
    %442 = arith.addf %441, %57 : vector<2x128xf32>
    %443 = vector.extract_strided_slice %442 {offsets = [0, 32], sizes = [2, 32], strides = [1, 1]} : vector<2x128xf32> to vector<2x32xf32>
    %444 = arith.mulf %443, %429 : vector<2x32xf32>
    %445 = vector.extract_strided_slice %442 {offsets = [0, 0], sizes = [2, 32], strides = [1, 1]} : vector<2x128xf32> to vector<2x32xf32>
    %446 = vector.extract_strided_slice %442 {offsets = [0, 64], sizes = [2, 32], strides = [1, 1]} : vector<2x128xf32> to vector<2x32xf32>
    %447 = arith.mulf %445, %446 : vector<2x32xf32>
    %448 = arith.addf %444, %447 : vector<2x32xf32>
    %449 = vector.extract_strided_slice %442 {offsets = [0, 96], sizes = [2, 32], strides = [1, 1]} : vector<2x128xf32> to vector<2x32xf32>
    %450 = math.tanh %448 : vector<2x32xf32>
    %451 = arith.mulf %449, %450 : vector<2x32xf32>
    %c20_i32 = arith.constant 20 : i32
    %452 = arith.truncf %451 : vector<2x32xf32> to vector<2x32xbf16>
    %cst_90 = arith.constant dense<0.000000e+00> : vector<2x128xf32>
    %453 = tpu.matmul %452, %58, %cst_90 {dimension_numbers = #tpu.dot_dimension_numbers<[1], [0], [0], [1], [0, 0, 1, 1], [], []>} : vector<2x32xbf16>, vector<32x128xbf16>, vector<2x128xf32> -> vector<2x128xf32>
    %c2_i32_91 = arith.constant 2 : i32
    %454 = arith.muli %c20_i32, %c2_i32_91 : i32
    %455 = arith.index_cast %454 : i32 to index
    %c0_92 = arith.constant 0 : index
    %456 = vector.load %arg11[%455, %c0_92] : memref<88x128xf32, #tpu.memory_space<vmem>>, vector<2x128xf32>
    %457 = arith.addf %456, %453 : vector<2x128xf32>
    %458 = arith.mulf %457, %54 : vector<2x128xf32>
    %459 = math.tanh %458 : vector<2x128xf32>
    %460 = arith.mulf %459, %54 : vector<2x128xf32>
    %461 = arith.addf %460, %57 : vector<2x128xf32>
    %462 = vector.extract_strided_slice %461 {offsets = [0, 32], sizes = [2, 32], strides = [1, 1]} : vector<2x128xf32> to vector<2x32xf32>
    %463 = arith.mulf %462, %448 : vector<2x32xf32>
    %464 = vector.extract_strided_slice %461 {offsets = [0, 0], sizes = [2, 32], strides = [1, 1]} : vector<2x128xf32> to vector<2x32xf32>
    %465 = vector.extract_strided_slice %461 {offsets = [0, 64], sizes = [2, 32], strides = [1, 1]} : vector<2x128xf32> to vector<2x32xf32>
    %466 = arith.mulf %464, %465 : vector<2x32xf32>
    %467 = arith.addf %463, %466 : vector<2x32xf32>
    %468 = vector.extract_strided_slice %461 {offsets = [0, 96], sizes = [2, 32], strides = [1, 1]} : vector<2x128xf32> to vector<2x32xf32>
    %469 = math.tanh %467 : vector<2x32xf32>
    %470 = arith.mulf %468, %469 : vector<2x32xf32>
    %c21_i32 = arith.constant 21 : i32
    %471 = arith.truncf %470 : vector<2x32xf32> to vector<2x32xbf16>
    %cst_93 = arith.constant dense<0.000000e+00> : vector<2x128xf32>
    %472 = tpu.matmul %471, %58, %cst_93 {dimension_numbers = #tpu.dot_dimension_numbers<[1], [0], [0], [1], [0, 0, 1, 1], [], []>} : vector<2x32xbf16>, vector<32x128xbf16>, vector<2x128xf32> -> vector<2x128xf32>
    %c2_i32_94 = arith.constant 2 : i32
    %473 = arith.muli %c21_i32, %c2_i32_94 : i32
    %474 = arith.index_cast %473 : i32 to index
    %c0_95 = arith.constant 0 : index
    %475 = vector.load %arg11[%474, %c0_95] : memref<88x128xf32, #tpu.memory_space<vmem>>, vector<2x128xf32>
    %476 = arith.addf %475, %472 : vector<2x128xf32>
    %477 = arith.mulf %476, %54 : vector<2x128xf32>
    %478 = math.tanh %477 : vector<2x128xf32>
    %479 = arith.mulf %478, %54 : vector<2x128xf32>
    %480 = arith.addf %479, %57 : vector<2x128xf32>
    %481 = vector.extract_strided_slice %480 {offsets = [0, 32], sizes = [2, 32], strides = [1, 1]} : vector<2x128xf32> to vector<2x32xf32>
    %482 = arith.mulf %481, %467 : vector<2x32xf32>
    %483 = vector.extract_strided_slice %480 {offsets = [0, 0], sizes = [2, 32], strides = [1, 1]} : vector<2x128xf32> to vector<2x32xf32>
    %484 = vector.extract_strided_slice %480 {offsets = [0, 64], sizes = [2, 32], strides = [1, 1]} : vector<2x128xf32> to vector<2x32xf32>
    %485 = arith.mulf %483, %484 : vector<2x32xf32>
    %486 = arith.addf %482, %485 : vector<2x32xf32>
    %487 = vector.extract_strided_slice %480 {offsets = [0, 96], sizes = [2, 32], strides = [1, 1]} : vector<2x128xf32> to vector<2x32xf32>
    %488 = math.tanh %486 : vector<2x32xf32>
    %489 = arith.mulf %487, %488 : vector<2x32xf32>
    %c22_i32 = arith.constant 22 : i32
    %490 = arith.truncf %489 : vector<2x32xf32> to vector<2x32xbf16>
    %cst_96 = arith.constant dense<0.000000e+00> : vector<2x128xf32>
    %491 = tpu.matmul %490, %58, %cst_96 {dimension_numbers = #tpu.dot_dimension_numbers<[1], [0], [0], [1], [0, 0, 1, 1], [], []>} : vector<2x32xbf16>, vector<32x128xbf16>, vector<2x128xf32> -> vector<2x128xf32>
    %c2_i32_97 = arith.constant 2 : i32
    %492 = arith.muli %c22_i32, %c2_i32_97 : i32
    %493 = arith.index_cast %492 : i32 to index
    %c0_98 = arith.constant 0 : index
    %494 = vector.load %arg11[%493, %c0_98] : memref<88x128xf32, #tpu.memory_space<vmem>>, vector<2x128xf32>
    %495 = arith.addf %494, %491 : vector<2x128xf32>
    %496 = arith.mulf %495, %54 : vector<2x128xf32>
    %497 = math.tanh %496 : vector<2x128xf32>
    %498 = arith.mulf %497, %54 : vector<2x128xf32>
    %499 = arith.addf %498, %57 : vector<2x128xf32>
    %500 = vector.extract_strided_slice %499 {offsets = [0, 32], sizes = [2, 32], strides = [1, 1]} : vector<2x128xf32> to vector<2x32xf32>
    %501 = arith.mulf %500, %486 : vector<2x32xf32>
    %502 = vector.extract_strided_slice %499 {offsets = [0, 0], sizes = [2, 32], strides = [1, 1]} : vector<2x128xf32> to vector<2x32xf32>
    %503 = vector.extract_strided_slice %499 {offsets = [0, 64], sizes = [2, 32], strides = [1, 1]} : vector<2x128xf32> to vector<2x32xf32>
    %504 = arith.mulf %502, %503 : vector<2x32xf32>
    %505 = arith.addf %501, %504 : vector<2x32xf32>
    %506 = vector.extract_strided_slice %499 {offsets = [0, 96], sizes = [2, 32], strides = [1, 1]} : vector<2x128xf32> to vector<2x32xf32>
    %507 = math.tanh %505 : vector<2x32xf32>
    %508 = arith.mulf %506, %507 : vector<2x32xf32>
    %c23_i32 = arith.constant 23 : i32
    %509 = arith.truncf %508 : vector<2x32xf32> to vector<2x32xbf16>
    %cst_99 = arith.constant dense<0.000000e+00> : vector<2x128xf32>
    %510 = tpu.matmul %509, %58, %cst_99 {dimension_numbers = #tpu.dot_dimension_numbers<[1], [0], [0], [1], [0, 0, 1, 1], [], []>} : vector<2x32xbf16>, vector<32x128xbf16>, vector<2x128xf32> -> vector<2x128xf32>
    %c2_i32_100 = arith.constant 2 : i32
    %511 = arith.muli %c23_i32, %c2_i32_100 : i32
    %512 = arith.index_cast %511 : i32 to index
    %c0_101 = arith.constant 0 : index
    %513 = vector.load %arg11[%512, %c0_101] : memref<88x128xf32, #tpu.memory_space<vmem>>, vector<2x128xf32>
    %514 = arith.addf %513, %510 : vector<2x128xf32>
    %515 = arith.mulf %514, %54 : vector<2x128xf32>
    %516 = math.tanh %515 : vector<2x128xf32>
    %517 = arith.mulf %516, %54 : vector<2x128xf32>
    %518 = arith.addf %517, %57 : vector<2x128xf32>
    %519 = vector.extract_strided_slice %518 {offsets = [0, 32], sizes = [2, 32], strides = [1, 1]} : vector<2x128xf32> to vector<2x32xf32>
    %520 = arith.mulf %519, %505 : vector<2x32xf32>
    %521 = vector.extract_strided_slice %518 {offsets = [0, 0], sizes = [2, 32], strides = [1, 1]} : vector<2x128xf32> to vector<2x32xf32>
    %522 = vector.extract_strided_slice %518 {offsets = [0, 64], sizes = [2, 32], strides = [1, 1]} : vector<2x128xf32> to vector<2x32xf32>
    %523 = arith.mulf %521, %522 : vector<2x32xf32>
    %524 = arith.addf %520, %523 : vector<2x32xf32>
    %525 = vector.extract_strided_slice %518 {offsets = [0, 96], sizes = [2, 32], strides = [1, 1]} : vector<2x128xf32> to vector<2x32xf32>
    %526 = math.tanh %524 : vector<2x32xf32>
    %527 = arith.mulf %525, %526 : vector<2x32xf32>
    %c24_i32 = arith.constant 24 : i32
    %528 = arith.truncf %527 : vector<2x32xf32> to vector<2x32xbf16>
    %cst_102 = arith.constant dense<0.000000e+00> : vector<2x128xf32>
    %529 = tpu.matmul %528, %58, %cst_102 {dimension_numbers = #tpu.dot_dimension_numbers<[1], [0], [0], [1], [0, 0, 1, 1], [], []>} : vector<2x32xbf16>, vector<32x128xbf16>, vector<2x128xf32> -> vector<2x128xf32>
    %c2_i32_103 = arith.constant 2 : i32
    %530 = arith.muli %c24_i32, %c2_i32_103 : i32
    %531 = arith.index_cast %530 : i32 to index
    %c0_104 = arith.constant 0 : index
    %532 = vector.load %arg11[%531, %c0_104] : memref<88x128xf32, #tpu.memory_space<vmem>>, vector<2x128xf32>
    %533 = arith.addf %532, %529 : vector<2x128xf32>
    %534 = arith.mulf %533, %54 : vector<2x128xf32>
    %535 = math.tanh %534 : vector<2x128xf32>
    %536 = arith.mulf %535, %54 : vector<2x128xf32>
    %537 = arith.addf %536, %57 : vector<2x128xf32>
    %538 = vector.extract_strided_slice %537 {offsets = [0, 32], sizes = [2, 32], strides = [1, 1]} : vector<2x128xf32> to vector<2x32xf32>
    %539 = arith.mulf %538, %524 : vector<2x32xf32>
    %540 = vector.extract_strided_slice %537 {offsets = [0, 0], sizes = [2, 32], strides = [1, 1]} : vector<2x128xf32> to vector<2x32xf32>
    %541 = vector.extract_strided_slice %537 {offsets = [0, 64], sizes = [2, 32], strides = [1, 1]} : vector<2x128xf32> to vector<2x32xf32>
    %542 = arith.mulf %540, %541 : vector<2x32xf32>
    %543 = arith.addf %539, %542 : vector<2x32xf32>
    %544 = vector.extract_strided_slice %537 {offsets = [0, 96], sizes = [2, 32], strides = [1, 1]} : vector<2x128xf32> to vector<2x32xf32>
    %545 = math.tanh %543 : vector<2x32xf32>
    %546 = arith.mulf %544, %545 : vector<2x32xf32>
    %c25_i32 = arith.constant 25 : i32
    %547 = arith.truncf %546 : vector<2x32xf32> to vector<2x32xbf16>
    %cst_105 = arith.constant dense<0.000000e+00> : vector<2x128xf32>
    %548 = tpu.matmul %547, %58, %cst_105 {dimension_numbers = #tpu.dot_dimension_numbers<[1], [0], [0], [1], [0, 0, 1, 1], [], []>} : vector<2x32xbf16>, vector<32x128xbf16>, vector<2x128xf32> -> vector<2x128xf32>
    %c2_i32_106 = arith.constant 2 : i32
    %549 = arith.muli %c25_i32, %c2_i32_106 : i32
    %550 = arith.index_cast %549 : i32 to index
    %c0_107 = arith.constant 0 : index
    %551 = vector.load %arg11[%550, %c0_107] : memref<88x128xf32, #tpu.memory_space<vmem>>, vector<2x128xf32>
    %552 = arith.addf %551, %548 : vector<2x128xf32>
    %553 = arith.mulf %552, %54 : vector<2x128xf32>
    %554 = math.tanh %553 : vector<2x128xf32>
    %555 = arith.mulf %554, %54 : vector<2x128xf32>
    %556 = arith.addf %555, %57 : vector<2x128xf32>
    %557 = vector.extract_strided_slice %556 {offsets = [0, 32], sizes = [2, 32], strides = [1, 1]} : vector<2x128xf32> to vector<2x32xf32>
    %558 = arith.mulf %557, %543 : vector<2x32xf32>
    %559 = vector.extract_strided_slice %556 {offsets = [0, 0], sizes = [2, 32], strides = [1, 1]} : vector<2x128xf32> to vector<2x32xf32>
    %560 = vector.extract_strided_slice %556 {offsets = [0, 64], sizes = [2, 32], strides = [1, 1]} : vector<2x128xf32> to vector<2x32xf32>
    %561 = arith.mulf %559, %560 : vector<2x32xf32>
    %562 = arith.addf %558, %561 : vector<2x32xf32>
    %563 = vector.extract_strided_slice %556 {offsets = [0, 96], sizes = [2, 32], strides = [1, 1]} : vector<2x128xf32> to vector<2x32xf32>
    %564 = math.tanh %562 : vector<2x32xf32>
    %565 = arith.mulf %563, %564 : vector<2x32xf32>
    %c26_i32 = arith.constant 26 : i32
    %566 = arith.truncf %565 : vector<2x32xf32> to vector<2x32xbf16>
    %cst_108 = arith.constant dense<0.000000e+00> : vector<2x128xf32>
    %567 = tpu.matmul %566, %58, %cst_108 {dimension_numbers = #tpu.dot_dimension_numbers<[1], [0], [0], [1], [0, 0, 1, 1], [], []>} : vector<2x32xbf16>, vector<32x128xbf16>, vector<2x128xf32> -> vector<2x128xf32>
    %c2_i32_109 = arith.constant 2 : i32
    %568 = arith.muli %c26_i32, %c2_i32_109 : i32
    %569 = arith.index_cast %568 : i32 to index
    %c0_110 = arith.constant 0 : index
    %570 = vector.load %arg11[%569, %c0_110] : memref<88x128xf32, #tpu.memory_space<vmem>>, vector<2x128xf32>
    %571 = arith.addf %570, %567 : vector<2x128xf32>
    %572 = arith.mulf %571, %54 : vector<2x128xf32>
    %573 = math.tanh %572 : vector<2x128xf32>
    %574 = arith.mulf %573, %54 : vector<2x128xf32>
    %575 = arith.addf %574, %57 : vector<2x128xf32>
    %576 = vector.extract_strided_slice %575 {offsets = [0, 32], sizes = [2, 32], strides = [1, 1]} : vector<2x128xf32> to vector<2x32xf32>
    %577 = arith.mulf %576, %562 : vector<2x32xf32>
    %578 = vector.extract_strided_slice %575 {offsets = [0, 0], sizes = [2, 32], strides = [1, 1]} : vector<2x128xf32> to vector<2x32xf32>
    %579 = vector.extract_strided_slice %575 {offsets = [0, 64], sizes = [2, 32], strides = [1, 1]} : vector<2x128xf32> to vector<2x32xf32>
    %580 = arith.mulf %578, %579 : vector<2x32xf32>
    %581 = arith.addf %577, %580 : vector<2x32xf32>
    %582 = vector.extract_strided_slice %575 {offsets = [0, 96], sizes = [2, 32], strides = [1, 1]} : vector<2x128xf32> to vector<2x32xf32>
    %583 = math.tanh %581 : vector<2x32xf32>
    %584 = arith.mulf %582, %583 : vector<2x32xf32>
    %c27_i32 = arith.constant 27 : i32
    %585 = arith.truncf %584 : vector<2x32xf32> to vector<2x32xbf16>
    %cst_111 = arith.constant dense<0.000000e+00> : vector<2x128xf32>
    %586 = tpu.matmul %585, %58, %cst_111 {dimension_numbers = #tpu.dot_dimension_numbers<[1], [0], [0], [1], [0, 0, 1, 1], [], []>} : vector<2x32xbf16>, vector<32x128xbf16>, vector<2x128xf32> -> vector<2x128xf32>
    %c2_i32_112 = arith.constant 2 : i32
    %587 = arith.muli %c27_i32, %c2_i32_112 : i32
    %588 = arith.index_cast %587 : i32 to index
    %c0_113 = arith.constant 0 : index
    %589 = vector.load %arg11[%588, %c0_113] : memref<88x128xf32, #tpu.memory_space<vmem>>, vector<2x128xf32>
    %590 = arith.addf %589, %586 : vector<2x128xf32>
    %591 = arith.mulf %590, %54 : vector<2x128xf32>
    %592 = math.tanh %591 : vector<2x128xf32>
    %593 = arith.mulf %592, %54 : vector<2x128xf32>
    %594 = arith.addf %593, %57 : vector<2x128xf32>
    %595 = vector.extract_strided_slice %594 {offsets = [0, 32], sizes = [2, 32], strides = [1, 1]} : vector<2x128xf32> to vector<2x32xf32>
    %596 = arith.mulf %595, %581 : vector<2x32xf32>
    %597 = vector.extract_strided_slice %594 {offsets = [0, 0], sizes = [2, 32], strides = [1, 1]} : vector<2x128xf32> to vector<2x32xf32>
    %598 = vector.extract_strided_slice %594 {offsets = [0, 64], sizes = [2, 32], strides = [1, 1]} : vector<2x128xf32> to vector<2x32xf32>
    %599 = arith.mulf %597, %598 : vector<2x32xf32>
    %600 = arith.addf %596, %599 : vector<2x32xf32>
    %601 = vector.extract_strided_slice %594 {offsets = [0, 96], sizes = [2, 32], strides = [1, 1]} : vector<2x128xf32> to vector<2x32xf32>
    %602 = math.tanh %600 : vector<2x32xf32>
    %603 = arith.mulf %601, %602 : vector<2x32xf32>
    %c28_i32 = arith.constant 28 : i32
    %604 = arith.truncf %603 : vector<2x32xf32> to vector<2x32xbf16>
    %cst_114 = arith.constant dense<0.000000e+00> : vector<2x128xf32>
    %605 = tpu.matmul %604, %58, %cst_114 {dimension_numbers = #tpu.dot_dimension_numbers<[1], [0], [0], [1], [0, 0, 1, 1], [], []>} : vector<2x32xbf16>, vector<32x128xbf16>, vector<2x128xf32> -> vector<2x128xf32>
    %c2_i32_115 = arith.constant 2 : i32
    %606 = arith.muli %c28_i32, %c2_i32_115 : i32
    %607 = arith.index_cast %606 : i32 to index
    %c0_116 = arith.constant 0 : index
    %608 = vector.load %arg11[%607, %c0_116] : memref<88x128xf32, #tpu.memory_space<vmem>>, vector<2x128xf32>
    %609 = arith.addf %608, %605 : vector<2x128xf32>
    %610 = arith.mulf %609, %54 : vector<2x128xf32>
    %611 = math.tanh %610 : vector<2x128xf32>
    %612 = arith.mulf %611, %54 : vector<2x128xf32>
    %613 = arith.addf %612, %57 : vector<2x128xf32>
    %614 = vector.extract_strided_slice %613 {offsets = [0, 32], sizes = [2, 32], strides = [1, 1]} : vector<2x128xf32> to vector<2x32xf32>
    %615 = arith.mulf %614, %600 : vector<2x32xf32>
    %616 = vector.extract_strided_slice %613 {offsets = [0, 0], sizes = [2, 32], strides = [1, 1]} : vector<2x128xf32> to vector<2x32xf32>
    %617 = vector.extract_strided_slice %613 {offsets = [0, 64], sizes = [2, 32], strides = [1, 1]} : vector<2x128xf32> to vector<2x32xf32>
    %618 = arith.mulf %616, %617 : vector<2x32xf32>
    %619 = arith.addf %615, %618 : vector<2x32xf32>
    %620 = vector.extract_strided_slice %613 {offsets = [0, 96], sizes = [2, 32], strides = [1, 1]} : vector<2x128xf32> to vector<2x32xf32>
    %621 = math.tanh %619 : vector<2x32xf32>
    %622 = arith.mulf %620, %621 : vector<2x32xf32>
    %c29_i32 = arith.constant 29 : i32
    %623 = arith.truncf %622 : vector<2x32xf32> to vector<2x32xbf16>
    %cst_117 = arith.constant dense<0.000000e+00> : vector<2x128xf32>
    %624 = tpu.matmul %623, %58, %cst_117 {dimension_numbers = #tpu.dot_dimension_numbers<[1], [0], [0], [1], [0, 0, 1, 1], [], []>} : vector<2x32xbf16>, vector<32x128xbf16>, vector<2x128xf32> -> vector<2x128xf32>
    %c2_i32_118 = arith.constant 2 : i32
    %625 = arith.muli %c29_i32, %c2_i32_118 : i32
    %626 = arith.index_cast %625 : i32 to index
    %c0_119 = arith.constant 0 : index
    %627 = vector.load %arg11[%626, %c0_119] : memref<88x128xf32, #tpu.memory_space<vmem>>, vector<2x128xf32>
    %628 = arith.addf %627, %624 : vector<2x128xf32>
    %629 = arith.mulf %628, %54 : vector<2x128xf32>
    %630 = math.tanh %629 : vector<2x128xf32>
    %631 = arith.mulf %630, %54 : vector<2x128xf32>
    %632 = arith.addf %631, %57 : vector<2x128xf32>
    %633 = vector.extract_strided_slice %632 {offsets = [0, 32], sizes = [2, 32], strides = [1, 1]} : vector<2x128xf32> to vector<2x32xf32>
    %634 = arith.mulf %633, %619 : vector<2x32xf32>
    %635 = vector.extract_strided_slice %632 {offsets = [0, 0], sizes = [2, 32], strides = [1, 1]} : vector<2x128xf32> to vector<2x32xf32>
    %636 = vector.extract_strided_slice %632 {offsets = [0, 64], sizes = [2, 32], strides = [1, 1]} : vector<2x128xf32> to vector<2x32xf32>
    %637 = arith.mulf %635, %636 : vector<2x32xf32>
    %638 = arith.addf %634, %637 : vector<2x32xf32>
    %639 = vector.extract_strided_slice %632 {offsets = [0, 96], sizes = [2, 32], strides = [1, 1]} : vector<2x128xf32> to vector<2x32xf32>
    %640 = math.tanh %638 : vector<2x32xf32>
    %641 = arith.mulf %639, %640 : vector<2x32xf32>
    %c30_i32 = arith.constant 30 : i32
    %642 = arith.truncf %641 : vector<2x32xf32> to vector<2x32xbf16>
    %cst_120 = arith.constant dense<0.000000e+00> : vector<2x128xf32>
    %643 = tpu.matmul %642, %58, %cst_120 {dimension_numbers = #tpu.dot_dimension_numbers<[1], [0], [0], [1], [0, 0, 1, 1], [], []>} : vector<2x32xbf16>, vector<32x128xbf16>, vector<2x128xf32> -> vector<2x128xf32>
    %c2_i32_121 = arith.constant 2 : i32
    %644 = arith.muli %c30_i32, %c2_i32_121 : i32
    %645 = arith.index_cast %644 : i32 to index
    %c0_122 = arith.constant 0 : index
    %646 = vector.load %arg11[%645, %c0_122] : memref<88x128xf32, #tpu.memory_space<vmem>>, vector<2x128xf32>
    %647 = arith.addf %646, %643 : vector<2x128xf32>
    %648 = arith.mulf %647, %54 : vector<2x128xf32>
    %649 = math.tanh %648 : vector<2x128xf32>
    %650 = arith.mulf %649, %54 : vector<2x128xf32>
    %651 = arith.addf %650, %57 : vector<2x128xf32>
    %652 = vector.extract_strided_slice %651 {offsets = [0, 32], sizes = [2, 32], strides = [1, 1]} : vector<2x128xf32> to vector<2x32xf32>
    %653 = arith.mulf %652, %638 : vector<2x32xf32>
    %654 = vector.extract_strided_slice %651 {offsets = [0, 0], sizes = [2, 32], strides = [1, 1]} : vector<2x128xf32> to vector<2x32xf32>
    %655 = vector.extract_strided_slice %651 {offsets = [0, 64], sizes = [2, 32], strides = [1, 1]} : vector<2x128xf32> to vector<2x32xf32>
    %656 = arith.mulf %654, %655 : vector<2x32xf32>
    %657 = arith.addf %653, %656 : vector<2x32xf32>
    %658 = vector.extract_strided_slice %651 {offsets = [0, 96], sizes = [2, 32], strides = [1, 1]} : vector<2x128xf32> to vector<2x32xf32>
    %659 = math.tanh %657 : vector<2x32xf32>
    %660 = arith.mulf %658, %659 : vector<2x32xf32>
    %c31_i32 = arith.constant 31 : i32
    %661 = arith.truncf %660 : vector<2x32xf32> to vector<2x32xbf16>
    %cst_123 = arith.constant dense<0.000000e+00> : vector<2x128xf32>
    %662 = tpu.matmul %661, %58, %cst_123 {dimension_numbers = #tpu.dot_dimension_numbers<[1], [0], [0], [1], [0, 0, 1, 1], [], []>} : vector<2x32xbf16>, vector<32x128xbf16>, vector<2x128xf32> -> vector<2x128xf32>
    %c2_i32_124 = arith.constant 2 : i32
    %663 = arith.muli %c31_i32, %c2_i32_124 : i32
    %664 = arith.index_cast %663 : i32 to index
    %c0_125 = arith.constant 0 : index
    %665 = vector.load %arg11[%664, %c0_125] : memref<88x128xf32, #tpu.memory_space<vmem>>, vector<2x128xf32>
    %666 = arith.addf %665, %662 : vector<2x128xf32>
    %667 = arith.mulf %666, %54 : vector<2x128xf32>
    %668 = math.tanh %667 : vector<2x128xf32>
    %669 = arith.mulf %668, %54 : vector<2x128xf32>
    %670 = arith.addf %669, %57 : vector<2x128xf32>
    %671 = vector.extract_strided_slice %670 {offsets = [0, 32], sizes = [2, 32], strides = [1, 1]} : vector<2x128xf32> to vector<2x32xf32>
    %672 = arith.mulf %671, %657 : vector<2x32xf32>
    %673 = vector.extract_strided_slice %670 {offsets = [0, 0], sizes = [2, 32], strides = [1, 1]} : vector<2x128xf32> to vector<2x32xf32>
    %674 = vector.extract_strided_slice %670 {offsets = [0, 64], sizes = [2, 32], strides = [1, 1]} : vector<2x128xf32> to vector<2x32xf32>
    %675 = arith.mulf %673, %674 : vector<2x32xf32>
    %676 = arith.addf %672, %675 : vector<2x32xf32>
    %677 = vector.extract_strided_slice %670 {offsets = [0, 96], sizes = [2, 32], strides = [1, 1]} : vector<2x128xf32> to vector<2x32xf32>
    %678 = math.tanh %676 : vector<2x32xf32>
    %679 = arith.mulf %677, %678 : vector<2x32xf32>
    %c32_i32 = arith.constant 32 : i32
    %680 = arith.truncf %679 : vector<2x32xf32> to vector<2x32xbf16>
    %cst_126 = arith.constant dense<0.000000e+00> : vector<2x128xf32>
    %681 = tpu.matmul %680, %58, %cst_126 {dimension_numbers = #tpu.dot_dimension_numbers<[1], [0], [0], [1], [0, 0, 1, 1], [], []>} : vector<2x32xbf16>, vector<32x128xbf16>, vector<2x128xf32> -> vector<2x128xf32>
    %c2_i32_127 = arith.constant 2 : i32
    %682 = arith.muli %c32_i32, %c2_i32_127 : i32
    %683 = arith.index_cast %682 : i32 to index
    %c0_128 = arith.constant 0 : index
    %684 = vector.load %arg11[%683, %c0_128] : memref<88x128xf32, #tpu.memory_space<vmem>>, vector<2x128xf32>
    %685 = arith.addf %684, %681 : vector<2x128xf32>
    %686 = arith.mulf %685, %54 : vector<2x128xf32>
    %687 = math.tanh %686 : vector<2x128xf32>
    %688 = arith.mulf %687, %54 : vector<2x128xf32>
    %689 = arith.addf %688, %57 : vector<2x128xf32>
    %690 = vector.extract_strided_slice %689 {offsets = [0, 32], sizes = [2, 32], strides = [1, 1]} : vector<2x128xf32> to vector<2x32xf32>
    %691 = arith.mulf %690, %676 : vector<2x32xf32>
    %692 = vector.extract_strided_slice %689 {offsets = [0, 0], sizes = [2, 32], strides = [1, 1]} : vector<2x128xf32> to vector<2x32xf32>
    %693 = vector.extract_strided_slice %689 {offsets = [0, 64], sizes = [2, 32], strides = [1, 1]} : vector<2x128xf32> to vector<2x32xf32>
    %694 = arith.mulf %692, %693 : vector<2x32xf32>
    %695 = arith.addf %691, %694 : vector<2x32xf32>
    %696 = vector.extract_strided_slice %689 {offsets = [0, 96], sizes = [2, 32], strides = [1, 1]} : vector<2x128xf32> to vector<2x32xf32>
    %697 = math.tanh %695 : vector<2x32xf32>
    %698 = arith.mulf %696, %697 : vector<2x32xf32>
    %c33_i32 = arith.constant 33 : i32
    %699 = arith.truncf %698 : vector<2x32xf32> to vector<2x32xbf16>
    %cst_129 = arith.constant dense<0.000000e+00> : vector<2x128xf32>
    %700 = tpu.matmul %699, %58, %cst_129 {dimension_numbers = #tpu.dot_dimension_numbers<[1], [0], [0], [1], [0, 0, 1, 1], [], []>} : vector<2x32xbf16>, vector<32x128xbf16>, vector<2x128xf32> -> vector<2x128xf32>
    %c2_i32_130 = arith.constant 2 : i32
    %701 = arith.muli %c33_i32, %c2_i32_130 : i32
    %702 = arith.index_cast %701 : i32 to index
    %c0_131 = arith.constant 0 : index
    %703 = vector.load %arg11[%702, %c0_131] : memref<88x128xf32, #tpu.memory_space<vmem>>, vector<2x128xf32>
    %704 = arith.addf %703, %700 : vector<2x128xf32>
    %705 = arith.mulf %704, %54 : vector<2x128xf32>
    %706 = math.tanh %705 : vector<2x128xf32>
    %707 = arith.mulf %706, %54 : vector<2x128xf32>
    %708 = arith.addf %707, %57 : vector<2x128xf32>
    %709 = vector.extract_strided_slice %708 {offsets = [0, 32], sizes = [2, 32], strides = [1, 1]} : vector<2x128xf32> to vector<2x32xf32>
    %710 = arith.mulf %709, %695 : vector<2x32xf32>
    %711 = vector.extract_strided_slice %708 {offsets = [0, 0], sizes = [2, 32], strides = [1, 1]} : vector<2x128xf32> to vector<2x32xf32>
    %712 = vector.extract_strided_slice %708 {offsets = [0, 64], sizes = [2, 32], strides = [1, 1]} : vector<2x128xf32> to vector<2x32xf32>
    %713 = arith.mulf %711, %712 : vector<2x32xf32>
    %714 = arith.addf %710, %713 : vector<2x32xf32>
    %715 = vector.extract_strided_slice %708 {offsets = [0, 96], sizes = [2, 32], strides = [1, 1]} : vector<2x128xf32> to vector<2x32xf32>
    %716 = math.tanh %714 : vector<2x32xf32>
    %717 = arith.mulf %715, %716 : vector<2x32xf32>
    %c34_i32 = arith.constant 34 : i32
    %718 = arith.truncf %717 : vector<2x32xf32> to vector<2x32xbf16>
    %cst_132 = arith.constant dense<0.000000e+00> : vector<2x128xf32>
    %719 = tpu.matmul %718, %58, %cst_132 {dimension_numbers = #tpu.dot_dimension_numbers<[1], [0], [0], [1], [0, 0, 1, 1], [], []>} : vector<2x32xbf16>, vector<32x128xbf16>, vector<2x128xf32> -> vector<2x128xf32>
    %c2_i32_133 = arith.constant 2 : i32
    %720 = arith.muli %c34_i32, %c2_i32_133 : i32
    %721 = arith.index_cast %720 : i32 to index
    %c0_134 = arith.constant 0 : index
    %722 = vector.load %arg11[%721, %c0_134] : memref<88x128xf32, #tpu.memory_space<vmem>>, vector<2x128xf32>
    %723 = arith.addf %722, %719 : vector<2x128xf32>
    %724 = arith.mulf %723, %54 : vector<2x128xf32>
    %725 = math.tanh %724 : vector<2x128xf32>
    %726 = arith.mulf %725, %54 : vector<2x128xf32>
    %727 = arith.addf %726, %57 : vector<2x128xf32>
    %728 = vector.extract_strided_slice %727 {offsets = [0, 32], sizes = [2, 32], strides = [1, 1]} : vector<2x128xf32> to vector<2x32xf32>
    %729 = arith.mulf %728, %714 : vector<2x32xf32>
    %730 = vector.extract_strided_slice %727 {offsets = [0, 0], sizes = [2, 32], strides = [1, 1]} : vector<2x128xf32> to vector<2x32xf32>
    %731 = vector.extract_strided_slice %727 {offsets = [0, 64], sizes = [2, 32], strides = [1, 1]} : vector<2x128xf32> to vector<2x32xf32>
    %732 = arith.mulf %730, %731 : vector<2x32xf32>
    %733 = arith.addf %729, %732 : vector<2x32xf32>
    %734 = vector.extract_strided_slice %727 {offsets = [0, 96], sizes = [2, 32], strides = [1, 1]} : vector<2x128xf32> to vector<2x32xf32>
    %735 = math.tanh %733 : vector<2x32xf32>
    %736 = arith.mulf %734, %735 : vector<2x32xf32>
    %c35_i32 = arith.constant 35 : i32
    %737 = arith.truncf %736 : vector<2x32xf32> to vector<2x32xbf16>
    %cst_135 = arith.constant dense<0.000000e+00> : vector<2x128xf32>
    %738 = tpu.matmul %737, %58, %cst_135 {dimension_numbers = #tpu.dot_dimension_numbers<[1], [0], [0], [1], [0, 0, 1, 1], [], []>} : vector<2x32xbf16>, vector<32x128xbf16>, vector<2x128xf32> -> vector<2x128xf32>
    %c2_i32_136 = arith.constant 2 : i32
    %739 = arith.muli %c35_i32, %c2_i32_136 : i32
    %740 = arith.index_cast %739 : i32 to index
    %c0_137 = arith.constant 0 : index
    %741 = vector.load %arg11[%740, %c0_137] : memref<88x128xf32, #tpu.memory_space<vmem>>, vector<2x128xf32>
    %742 = arith.addf %741, %738 : vector<2x128xf32>
    %743 = arith.mulf %742, %54 : vector<2x128xf32>
    %744 = math.tanh %743 : vector<2x128xf32>
    %745 = arith.mulf %744, %54 : vector<2x128xf32>
    %746 = arith.addf %745, %57 : vector<2x128xf32>
    %747 = vector.extract_strided_slice %746 {offsets = [0, 32], sizes = [2, 32], strides = [1, 1]} : vector<2x128xf32> to vector<2x32xf32>
    %748 = arith.mulf %747, %733 : vector<2x32xf32>
    %749 = vector.extract_strided_slice %746 {offsets = [0, 0], sizes = [2, 32], strides = [1, 1]} : vector<2x128xf32> to vector<2x32xf32>
    %750 = vector.extract_strided_slice %746 {offsets = [0, 64], sizes = [2, 32], strides = [1, 1]} : vector<2x128xf32> to vector<2x32xf32>
    %751 = arith.mulf %749, %750 : vector<2x32xf32>
    %752 = arith.addf %748, %751 : vector<2x32xf32>
    %753 = vector.extract_strided_slice %746 {offsets = [0, 96], sizes = [2, 32], strides = [1, 1]} : vector<2x128xf32> to vector<2x32xf32>
    %754 = math.tanh %752 : vector<2x32xf32>
    %755 = arith.mulf %753, %754 : vector<2x32xf32>
    %c36_i32 = arith.constant 36 : i32
    %756 = arith.truncf %755 : vector<2x32xf32> to vector<2x32xbf16>
    %cst_138 = arith.constant dense<0.000000e+00> : vector<2x128xf32>
    %757 = tpu.matmul %756, %58, %cst_138 {dimension_numbers = #tpu.dot_dimension_numbers<[1], [0], [0], [1], [0, 0, 1, 1], [], []>} : vector<2x32xbf16>, vector<32x128xbf16>, vector<2x128xf32> -> vector<2x128xf32>
    %c2_i32_139 = arith.constant 2 : i32
    %758 = arith.muli %c36_i32, %c2_i32_139 : i32
    %759 = arith.index_cast %758 : i32 to index
    %c0_140 = arith.constant 0 : index
    %760 = vector.load %arg11[%759, %c0_140] : memref<88x128xf32, #tpu.memory_space<vmem>>, vector<2x128xf32>
    %761 = arith.addf %760, %757 : vector<2x128xf32>
    %762 = arith.mulf %761, %54 : vector<2x128xf32>
    %763 = math.tanh %762 : vector<2x128xf32>
    %764 = arith.mulf %763, %54 : vector<2x128xf32>
    %765 = arith.addf %764, %57 : vector<2x128xf32>
    %766 = vector.extract_strided_slice %765 {offsets = [0, 32], sizes = [2, 32], strides = [1, 1]} : vector<2x128xf32> to vector<2x32xf32>
    %767 = arith.mulf %766, %752 : vector<2x32xf32>
    %768 = vector.extract_strided_slice %765 {offsets = [0, 0], sizes = [2, 32], strides = [1, 1]} : vector<2x128xf32> to vector<2x32xf32>
    %769 = vector.extract_strided_slice %765 {offsets = [0, 64], sizes = [2, 32], strides = [1, 1]} : vector<2x128xf32> to vector<2x32xf32>
    %770 = arith.mulf %768, %769 : vector<2x32xf32>
    %771 = arith.addf %767, %770 : vector<2x32xf32>
    %772 = vector.extract_strided_slice %765 {offsets = [0, 96], sizes = [2, 32], strides = [1, 1]} : vector<2x128xf32> to vector<2x32xf32>
    %773 = math.tanh %771 : vector<2x32xf32>
    %774 = arith.mulf %772, %773 : vector<2x32xf32>
    %c37_i32 = arith.constant 37 : i32
    %775 = arith.truncf %774 : vector<2x32xf32> to vector<2x32xbf16>
    %cst_141 = arith.constant dense<0.000000e+00> : vector<2x128xf32>
    %776 = tpu.matmul %775, %58, %cst_141 {dimension_numbers = #tpu.dot_dimension_numbers<[1], [0], [0], [1], [0, 0, 1, 1], [], []>} : vector<2x32xbf16>, vector<32x128xbf16>, vector<2x128xf32> -> vector<2x128xf32>
    %c2_i32_142 = arith.constant 2 : i32
    %777 = arith.muli %c37_i32, %c2_i32_142 : i32
    %778 = arith.index_cast %777 : i32 to index
    %c0_143 = arith.constant 0 : index
    %779 = vector.load %arg11[%778, %c0_143] : memref<88x128xf32, #tpu.memory_space<vmem>>, vector<2x128xf32>
    %780 = arith.addf %779, %776 : vector<2x128xf32>
    %781 = arith.mulf %780, %54 : vector<2x128xf32>
    %782 = math.tanh %781 : vector<2x128xf32>
    %783 = arith.mulf %782, %54 : vector<2x128xf32>
    %784 = arith.addf %783, %57 : vector<2x128xf32>
    %785 = vector.extract_strided_slice %784 {offsets = [0, 32], sizes = [2, 32], strides = [1, 1]} : vector<2x128xf32> to vector<2x32xf32>
    %786 = arith.mulf %785, %771 : vector<2x32xf32>
    %787 = vector.extract_strided_slice %784 {offsets = [0, 0], sizes = [2, 32], strides = [1, 1]} : vector<2x128xf32> to vector<2x32xf32>
    %788 = vector.extract_strided_slice %784 {offsets = [0, 64], sizes = [2, 32], strides = [1, 1]} : vector<2x128xf32> to vector<2x32xf32>
    %789 = arith.mulf %787, %788 : vector<2x32xf32>
    %790 = arith.addf %786, %789 : vector<2x32xf32>
    %791 = vector.extract_strided_slice %784 {offsets = [0, 96], sizes = [2, 32], strides = [1, 1]} : vector<2x128xf32> to vector<2x32xf32>
    %792 = math.tanh %790 : vector<2x32xf32>
    %793 = arith.mulf %791, %792 : vector<2x32xf32>
    %c38_i32 = arith.constant 38 : i32
    %794 = arith.truncf %793 : vector<2x32xf32> to vector<2x32xbf16>
    %cst_144 = arith.constant dense<0.000000e+00> : vector<2x128xf32>
    %795 = tpu.matmul %794, %58, %cst_144 {dimension_numbers = #tpu.dot_dimension_numbers<[1], [0], [0], [1], [0, 0, 1, 1], [], []>} : vector<2x32xbf16>, vector<32x128xbf16>, vector<2x128xf32> -> vector<2x128xf32>
    %c2_i32_145 = arith.constant 2 : i32
    %796 = arith.muli %c38_i32, %c2_i32_145 : i32
    %797 = arith.index_cast %796 : i32 to index
    %c0_146 = arith.constant 0 : index
    %798 = vector.load %arg11[%797, %c0_146] : memref<88x128xf32, #tpu.memory_space<vmem>>, vector<2x128xf32>
    %799 = arith.addf %798, %795 : vector<2x128xf32>
    %800 = arith.mulf %799, %54 : vector<2x128xf32>
    %801 = math.tanh %800 : vector<2x128xf32>
    %802 = arith.mulf %801, %54 : vector<2x128xf32>
    %803 = arith.addf %802, %57 : vector<2x128xf32>
    %804 = vector.extract_strided_slice %803 {offsets = [0, 32], sizes = [2, 32], strides = [1, 1]} : vector<2x128xf32> to vector<2x32xf32>
    %805 = arith.mulf %804, %790 : vector<2x32xf32>
    %806 = vector.extract_strided_slice %803 {offsets = [0, 0], sizes = [2, 32], strides = [1, 1]} : vector<2x128xf32> to vector<2x32xf32>
    %807 = vector.extract_strided_slice %803 {offsets = [0, 64], sizes = [2, 32], strides = [1, 1]} : vector<2x128xf32> to vector<2x32xf32>
    %808 = arith.mulf %806, %807 : vector<2x32xf32>
    %809 = arith.addf %805, %808 : vector<2x32xf32>
    %810 = vector.extract_strided_slice %803 {offsets = [0, 96], sizes = [2, 32], strides = [1, 1]} : vector<2x128xf32> to vector<2x32xf32>
    %811 = math.tanh %809 : vector<2x32xf32>
    %812 = arith.mulf %810, %811 : vector<2x32xf32>
    %c39_i32 = arith.constant 39 : i32
    %813 = arith.truncf %812 : vector<2x32xf32> to vector<2x32xbf16>
    %cst_147 = arith.constant dense<0.000000e+00> : vector<2x128xf32>
    %814 = tpu.matmul %813, %58, %cst_147 {dimension_numbers = #tpu.dot_dimension_numbers<[1], [0], [0], [1], [0, 0, 1, 1], [], []>} : vector<2x32xbf16>, vector<32x128xbf16>, vector<2x128xf32> -> vector<2x128xf32>
    %c2_i32_148 = arith.constant 2 : i32
    %815 = arith.muli %c39_i32, %c2_i32_148 : i32
    %816 = arith.index_cast %815 : i32 to index
    %c0_149 = arith.constant 0 : index
    %817 = vector.load %arg11[%816, %c0_149] : memref<88x128xf32, #tpu.memory_space<vmem>>, vector<2x128xf32>
    %818 = arith.addf %817, %814 : vector<2x128xf32>
    %819 = arith.mulf %818, %54 : vector<2x128xf32>
    %820 = math.tanh %819 : vector<2x128xf32>
    %821 = arith.mulf %820, %54 : vector<2x128xf32>
    %822 = arith.addf %821, %57 : vector<2x128xf32>
    %823 = vector.extract_strided_slice %822 {offsets = [0, 32], sizes = [2, 32], strides = [1, 1]} : vector<2x128xf32> to vector<2x32xf32>
    %824 = arith.mulf %823, %809 : vector<2x32xf32>
    %825 = vector.extract_strided_slice %822 {offsets = [0, 0], sizes = [2, 32], strides = [1, 1]} : vector<2x128xf32> to vector<2x32xf32>
    %826 = vector.extract_strided_slice %822 {offsets = [0, 64], sizes = [2, 32], strides = [1, 1]} : vector<2x128xf32> to vector<2x32xf32>
    %827 = arith.mulf %825, %826 : vector<2x32xf32>
    %828 = arith.addf %824, %827 : vector<2x32xf32>
    %829 = vector.extract_strided_slice %822 {offsets = [0, 96], sizes = [2, 32], strides = [1, 1]} : vector<2x128xf32> to vector<2x32xf32>
    %830 = math.tanh %828 : vector<2x32xf32>
    %831 = arith.mulf %829, %830 : vector<2x32xf32>
    %c40_i32 = arith.constant 40 : i32
    %832 = arith.truncf %831 : vector<2x32xf32> to vector<2x32xbf16>
    %cst_150 = arith.constant dense<0.000000e+00> : vector<2x128xf32>
    %833 = tpu.matmul %832, %58, %cst_150 {dimension_numbers = #tpu.dot_dimension_numbers<[1], [0], [0], [1], [0, 0, 1, 1], [], []>} : vector<2x32xbf16>, vector<32x128xbf16>, vector<2x128xf32> -> vector<2x128xf32>
    %c2_i32_151 = arith.constant 2 : i32
    %834 = arith.muli %c40_i32, %c2_i32_151 : i32
    %835 = arith.index_cast %834 : i32 to index
    %c0_152 = arith.constant 0 : index
    %836 = vector.load %arg11[%835, %c0_152] : memref<88x128xf32, #tpu.memory_space<vmem>>, vector<2x128xf32>
    %837 = arith.addf %836, %833 : vector<2x128xf32>
    %838 = arith.mulf %837, %54 : vector<2x128xf32>
    %839 = math.tanh %838 : vector<2x128xf32>
    %840 = arith.mulf %839, %54 : vector<2x128xf32>
    %841 = arith.addf %840, %57 : vector<2x128xf32>
    %842 = vector.extract_strided_slice %841 {offsets = [0, 32], sizes = [2, 32], strides = [1, 1]} : vector<2x128xf32> to vector<2x32xf32>
    %843 = arith.mulf %842, %828 : vector<2x32xf32>
    %844 = vector.extract_strided_slice %841 {offsets = [0, 0], sizes = [2, 32], strides = [1, 1]} : vector<2x128xf32> to vector<2x32xf32>
    %845 = vector.extract_strided_slice %841 {offsets = [0, 64], sizes = [2, 32], strides = [1, 1]} : vector<2x128xf32> to vector<2x32xf32>
    %846 = arith.mulf %844, %845 : vector<2x32xf32>
    %847 = arith.addf %843, %846 : vector<2x32xf32>
    %848 = vector.extract_strided_slice %841 {offsets = [0, 96], sizes = [2, 32], strides = [1, 1]} : vector<2x128xf32> to vector<2x32xf32>
    %849 = math.tanh %847 : vector<2x32xf32>
    %850 = arith.mulf %848, %849 : vector<2x32xf32>
    %c41_i32 = arith.constant 41 : i32
    %851 = arith.truncf %850 : vector<2x32xf32> to vector<2x32xbf16>
    %cst_153 = arith.constant dense<0.000000e+00> : vector<2x128xf32>
    %852 = tpu.matmul %851, %58, %cst_153 {dimension_numbers = #tpu.dot_dimension_numbers<[1], [0], [0], [1], [0, 0, 1, 1], [], []>} : vector<2x32xbf16>, vector<32x128xbf16>, vector<2x128xf32> -> vector<2x128xf32>
    %c2_i32_154 = arith.constant 2 : i32
    %853 = arith.muli %c41_i32, %c2_i32_154 : i32
    %854 = arith.index_cast %853 : i32 to index
    %c0_155 = arith.constant 0 : index
    %855 = vector.load %arg11[%854, %c0_155] : memref<88x128xf32, #tpu.memory_space<vmem>>, vector<2x128xf32>
    %856 = arith.addf %855, %852 : vector<2x128xf32>
    %857 = arith.mulf %856, %54 : vector<2x128xf32>
    %858 = math.tanh %857 : vector<2x128xf32>
    %859 = arith.mulf %858, %54 : vector<2x128xf32>
    %860 = arith.addf %859, %57 : vector<2x128xf32>
    %861 = vector.extract_strided_slice %860 {offsets = [0, 32], sizes = [2, 32], strides = [1, 1]} : vector<2x128xf32> to vector<2x32xf32>
    %862 = arith.mulf %861, %847 : vector<2x32xf32>
    %863 = vector.extract_strided_slice %860 {offsets = [0, 0], sizes = [2, 32], strides = [1, 1]} : vector<2x128xf32> to vector<2x32xf32>
    %864 = vector.extract_strided_slice %860 {offsets = [0, 64], sizes = [2, 32], strides = [1, 1]} : vector<2x128xf32> to vector<2x32xf32>
    %865 = arith.mulf %863, %864 : vector<2x32xf32>
    %866 = arith.addf %862, %865 : vector<2x32xf32>
    %867 = vector.extract_strided_slice %860 {offsets = [0, 96], sizes = [2, 32], strides = [1, 1]} : vector<2x128xf32> to vector<2x32xf32>
    %868 = math.tanh %866 : vector<2x32xf32>
    %869 = arith.mulf %867, %868 : vector<2x32xf32>
    %c42_i32 = arith.constant 42 : i32
    %c0_156 = arith.constant 0 : index
    %c0_157 = arith.constant 0 : index
    %870 = vector.load %arg7[%c0_156, %c0_157] : memref<32x4xf32, #tpu.memory_space<vmem>>, vector<32x4xf32>
    %cst_158 = arith.constant dense<0.000000e+00> : vector<2x4xf32>
    %871 = tpu.matmul %869, %870, %cst_158 {dimension_numbers = #tpu.dot_dimension_numbers<[1], [0], [0], [1], [0, 0, 1, 1], [], []>} : vector<2x32xf32>, vector<32x4xf32>, vector<2x4xf32> -> vector<2x4xf32>
    %c0_159 = arith.constant 0 : index
    %c0_160 = arith.constant 0 : index
    %872 = vector.load %arg8[%c0_159, %c0_160] : memref<32x4xf32, #tpu.memory_space<vmem>>, vector<32x4xf32>
    %cst_161 = arith.constant dense<0.000000e+00> : vector<2x4xf32>
    %873 = tpu.matmul %69, %872, %cst_161 {dimension_numbers = #tpu.dot_dimension_numbers<[1], [0], [0], [1], [0, 0, 1, 1], [], []>} : vector<2x32xf32>, vector<32x4xf32>, vector<2x4xf32> -> vector<2x4xf32>
    %874 = arith.addf %871, %873 : vector<2x4xf32>
    %c0_162 = arith.constant 0 : index
    %c0_163 = arith.constant 0 : index
    %875 = vector.load %arg9[%c0_162, %c0_163] : memref<1x4xf32, #tpu.memory_space<vmem>>, vector<1x4xf32>
    %876 = vector.broadcast %875 : vector<1x4xf32> to vector<2x4xf32>
    %877 = arith.addf %874, %876 : vector<2x4xf32>
    %c0_164 = arith.constant 0 : index
    %c0_165 = arith.constant 0 : index
    %878 = vector.load %arg10[%c0_164, %c0_165] : memref<2x4xf32, #tpu.memory_space<vmem>>, vector<2x4xf32>
    tpu.vector_store %arg10[%c0_164, %c0_165], %877 {strides = array<i32>} : memref<2x4xf32, #tpu.memory_space<vmem>>, vector<2x4xf32>,
    return
  }
}

</mosaic_0001>

<llo_original>
// kernel: lstm_forward.1
$region0: #{lstm_forward.1}
  #allocation0 [shape = 'u32[]', space=smem, size = 0x4, offset = 0x4, fixed_abs, tag = 'smem constant byte address 0x4 - core index']
  #allocation1 [shape = 'u32[144,128]{1,0:T(1,128)}', space=vmem, size = 0x12000, scoped, tag = 'internal scratch']
  #allocation2 [shape = 'f32[88,128]{1,0:T(8,128)}', space=vmem, size = 0xb000, scoped, tag = 'scratch operand']
  %s0 = inlined_call_operand.vmem [shape: f32[176,19], index: 0, kind: input, shape index: {}]
  %s1 = inlined_call_operand.vmem [shape: f32[19,20], index: 1, kind: input, shape index: {}]
  %s2 = inlined_call_operand.vmem [shape: f32[1,20], index: 2, kind: input, shape index: {}]
  %s3 = inlined_call_operand.vmem [shape: f32[1,20], index: 3, kind: input, shape index: {}]
  %s4 = inlined_call_operand.vmem [shape: f32[20,256], index: 4, kind: input, shape index: {}]
  %s5 = inlined_call_operand.vmem [shape: f32[1,256], index: 5, kind: input, shape index: {}]
  %s6 = inlined_call_operand.vmem [shape: bf16[32,128], index: 6, kind: input, shape index: {}]
  %s7 = inlined_call_operand.vmem [shape: f32[32,4], index: 7, kind: input, shape index: {}]
  %s8 = inlined_call_operand.vmem [shape: f32[32,4], index: 8, kind: input, shape index: {}]
  %s9 = inlined_call_operand.vmem [shape: f32[1,4], index: 9, kind: input, shape index: {}]
  %s10 = inlined_call_operand.hbm [shape: f32[2,4], index: 10, kind: output, shape index: {}]
  %s11 = sld [smem:[#allocation0]]
  $region50: #{lstm_forward.1} parent=0
    _
  %s13 = ssub.s32 1, %s11
  %s14 = scalar_select 0, %s13, %s11
  $region1: #{lstm_forward.1} parent=0
    #allocation3 [shape = 'u8[1024]{0}', space=vmem, size = 0x400, scoped, tag = 'output window, operand 0, single buffered']
    #allocation4 [shape = 's32[1]{0}', space=sflag, size = 0x4, scoped, tag = 'scoped memory for lstm_forward.1']
    %15 = vsyncpa [#allocation4], 0
    // Predicated region
    $region2: #{lstm_forward.1} parent=1 // pred_check
      _
    $region3: #{lstm_forward.1} parent=1 // pred_check_branch
      %17 = sbr.rel (0) target = $region5
    $region4: #{lstm_forward.1} parent=1 // pred_region
      _
    $region5: #{lstm_forward.1} parent=1 // pred_fallthru
      _
    // Predicated region
    $region6: #{lstm_forward.1} parent=1 // pred_check
      _
    $region7: #{lstm_forward.1} parent=1 // pred_check_branch
      %19 = sbr.rel (0) target = $region9
    $region8: #{lstm_forward.1} parent=1 // pred_region
      _
    $region9: #{lstm_forward.1} parent=1 // pred_fallthru
      _
    // Predicated region
    $region10: #{lstm_forward.1} parent=1 // pred_check
      _
    $region11: #{lstm_forward.1} parent=1 // pred_check_branch
      %21 = sbr.rel (0) target = $region13
    $region12: #{lstm_forward.1} parent=1 // pred_region
      _
    $region13: #{lstm_forward.1} parent=1 // pred_fallthru
      _
    // Predicated region
    $region14: #{lstm_forward.1} parent=1 // pred_check
      _
    $region15: #{lstm_forward.1} parent=1 // pred_check_branch
      %23 = sbr.rel (0) target = $region17
    $region16: #{lstm_forward.1} parent=1 // pred_region
      _
    $region17: #{lstm_forward.1} parent=1 // pred_fallthru
      _
    // Predicated region
    $region18: #{lstm_forward.1} parent=1 // pred_check
      _
    $region19: #{lstm_forward.1} parent=1 // pred_check_branch
      %25 = sbr.rel (0) target = $region21
    $region20: #{lstm_forward.1} parent=1 // pred_region
      _
    $region21: #{lstm_forward.1} parent=1 // pred_fallthru
      _
    // Predicated region
    $region22: #{lstm_forward.1} parent=1 // pred_check
      _
    $region23: #{lstm_forward.1} parent=1 // pred_check_branch
      %27 = sbr.rel (0) target = $region25
    $region24: #{lstm_forward.1} parent=1 // pred_region
      _
    $region25: #{lstm_forward.1} parent=1 // pred_fallthru
      _
    // Predicated region
    $region26: #{lstm_forward.1} parent=1 // pred_check
      _
    $region27: #{lstm_forward.1} parent=1 // pred_check_branch
      %29 = sbr.rel (0) target = $region29
    $region28: #{lstm_forward.1} parent=1 // pred_region
      _
    $region29: #{lstm_forward.1} parent=1 // pred_fallthru
      _
    // Predicated region
    $region30: #{lstm_forward.1} parent=1 // pred_check
      _
    $region31: #{lstm_forward.1} parent=1 // pred_check_branch
      %31 = sbr.rel (0) target = $region33
    $region32: #{lstm_forward.1} parent=1 // pred_region
      _
    $region33: #{lstm_forward.1} parent=1 // pred_fallthru
      _
    // Predicated region
    $region34: #{lstm_forward.1} parent=1 // pred_check
      _
    $region35: #{lstm_forward.1} parent=1 // pred_check_branch
      %33 = sbr.rel (0) target = $region37
    $region36: #{lstm_forward.1} parent=1 // pred_region
      _
    $region37: #{lstm_forward.1} parent=1 // pred_fallthru
      _
    // Predicated region
    $region38: #{lstm_forward.1} parent=1 // pred_check
      _
    $region39: #{lstm_forward.1} parent=1 // pred_check_branch
      %35 = sbr.rel (0) target = $region41
    $region40: #{lstm_forward.1} parent=1 // pred_region
      _
    $region41: #{lstm_forward.1} parent=1 // pred_fallthru
      _
    %v37 = vld [vmem:[%s0] sm:$0xff]
    %v38 = vld [vmem:[%s0 + $0x8] sm:$0xff]
    %v39 = vld [vmem:[%s0 + $0x10] sm:$0xff]
    %v40 = vld [vmem:[%s0 + $0x18] sm:$0xff]
    %v41 = vld [vmem:[%s0 + $0x20] sm:$0xff]
    %v42 = vld [vmem:[%s0 + $0x28] sm:$0xff]
    %v43 = vld [vmem:[%s0 + $0x30] sm:$0xff]
    %v44 = vld [vmem:[%s0 + $0x38] sm:$0xff]
    %v45 = vld [vmem:[%s0 + $0x40] sm:$0xff]
    %v46 = vld [vmem:[%s0 + $0x48] sm:$0xff]
    %v47 = vld [vmem:[%s0 + $0x50] sm:$0xff]
    %v48 = vld [vmem:[%s0 + $0x58] sm:$0xff]
    %v49 = vld [vmem:[%s0 + $0x60] sm:$0xff]
    %v50 = vld [vmem:[%s0 + $0x68] sm:$0xff]
    %v51 = vld [vmem:[%s0 + $0x70] sm:$0xff]
    %v52 = vld [vmem:[%s0 + $0x78] sm:$0xff]
    %v53 = vld [vmem:[%s0 + $0x80] sm:$0xff]
    %v54 = vld [vmem:[%s0 + $0x88] sm:$0xff]
    %v55 = vld [vmem:[%s0 + $0x90] sm:$0xff]
    %v56 = vld [vmem:[%s0 + $0x98] sm:$0xff]
    %v57 = vld [vmem:[%s0 + $0xa0] sm:$0xff]
    %v58 = vld [vmem:[%s0 + $0xa8] sm:$0xff]
    %v59 = vld [vmem:[%s1] sm:$0xff]
    %v60 = vld [vmem:[%s1 + $0x8] sm:$0xff]
    %v61 = vld [vmem:[%s1 + $0x10] sm:$0x7]
    %vm62 = vcmask 154624
    %v64 = vsel %vm62, %v37, 0
    %v67 = vsel %vm62, %v38, 0
    %v70 = vsel %vm62, %v39, 0
    %v73 = vsel %vm62, %v40, 0
    %v76 = vsel %vm62, %v41, 0
    %v79 = vsel %vm62, %v42, 0
    %v82 = vsel %vm62, %v43, 0
    %v85 = vsel %vm62, %v44, 0
    %v88 = vsel %vm62, %v45, 0
    %v91 = vsel %vm62, %v46, 0
    %v94 = vsel %vm62, %v47, 0
    %v97 = vsel %vm62, %v48, 0
    %v100 = vsel %vm62, %v49, 0
    %v103 = vsel %vm62, %v50, 0
    %v106 = vsel %vm62, %v51, 0
    %v109 = vsel %vm62, %v52, 0
    %v112 = vsel %vm62, %v53, 0
    %v115 = vsel %vm62, %v54, 0
    %v118 = vsel %vm62, %v55, 0
    %v121 = vsel %vm62, %v56, 0
    %v124 = vsel %vm62, %v57, 0
    %v127 = vsel %vm62, %v58, 0
    %vm129 = vcmask 1042432
    %v131 = vsel %vm129, %v61, 0
    %133 = vmatprep.subr.mxu0 0.0
    %134 = vmatpush1.msra.mxu0 0.0
    %135 = vmatprep.subr.mxu0 0.0
    %136 = vmatpush1.msra.mxu0 0.0
    %137 = vmatprep.subr.mxu0 0.0
    %138 = vmatpush1.msra.mxu0 0.0
    %139 = vmatprep.subr.mxu0 0.0
    %140 = vmatpush1.msra.mxu0 0.0
    %141 = vmatprep.subr.mxu0 0.0
    %142 = vmatpush1.msra.mxu0 0.0
    %143 = vmatprep.subr.mxu0 0.0
    %144 = vmatpush1.msra.mxu0 0.0
    %145 = vmatprep.subr.mxu0 0.0
    %146 = vmatpush1.msra.mxu0 0.0
    %147 = vmatprep.subr.mxu0 0.0
    %148 = vmatpush1.msra.mxu0 0.0
    %149 = vmatprep.subr.mxu0 0.0
    %150 = vmatpush1.msra.mxu0 0.0
    %151 = vmatprep.subr.mxu0 0.0
    %152 = vmatpush1.msra.mxu0 0.0
    %153 = vmatprep.subr.mxu0 0.0
    %154 = vmatpush1.msra.mxu0 0.0
    %155 = vmatprep.subr.mxu0 0.0
    %156 = vmatpush1.msra.mxu0 0.0
    %157 = vmatprep.subr.mxu0 0.0
    %158 = vmatpush1.msra.mxu0 0.0
    %159 = vmatprep.subr.mxu0 0.0
    %160 = vmatpush1.msra.mxu0 %v131
    %161 = vmatprep.subr.mxu0 0.0
    %162 = vmatpush1.msra.mxu0 %v60
    %163 = vmatprep.subr.mxu0 0.0
    %164 = vmatpush1.msra.mxu0 %v59
    %165 = vmatprep.subr.mxu0 0.0
    %166 = vmatpush2.msra.mxu0 0.0
    %167 = vmatprep.subr.mxu0 0.0
    %168 = vmatpush2.msra.mxu0 0.0
    %169 = vmatprep.subr.mxu0 0.0
    %170 = vmatpush2.msra.mxu0 0.0
    %171 = vmatprep.subr.mxu0 0.0
    %172 = vmatpush2.msra.mxu0 0.0
    %173 = vmatprep.subr.mxu0 0.0
    %174 = vmatpush2.msra.mxu0 0.0
    %175 = vmatprep.subr.mxu0 0.0
    %176 = vmatpush2.msra.mxu0 0.0
    %177 = vmatprep.subr.mxu0 0.0
    %178 = vmatpush2.msra.mxu0 0.0
    %179 = vmatprep.subr.mxu0 0.0
    %180 = vmatpush2.msra.mxu0 0.0
    %181 = vmatprep.subr.mxu0 0.0
    %182 = vmatpush2.msra.mxu0 0.0
    %183 = vmatprep.subr.mxu0 0.0
    %184 = vmatpush2.msra.mxu0 0.0
    %185 = vmatprep.subr.mxu0 0.0
    %186 = vmatpush2.msra.mxu0 0.0
    %187 = vmatprep.subr.mxu0 0.0
    %188 = vmatpush2.msra.mxu0 0.0
    %189 = vmatprep.subr.mxu0 0.0
    %190 = vmatpush2.msra.mxu0 0.0
    %191 = vmatprep.subr.mxu0 0.0
    %192 = vmatpush2.msra.mxu0 0.0
    %193 = vmatprep.subr.mxu0 0.0
    %194 = vmatpush2.msra.mxu0 0.0
    %195 = vmatprep.subr.mxu0 0.0
    %196 = vmatpush2.msra.mxu0 0.0
    %197 = vmatprep.mubr.f32.mxu0 0.0
    %198 = vmatmul.mubr.f32.gmra.mxu0 %v64
    %v199 = vpop.f32.mrf.mxu0
    %v200 = vadd.f32 0.0, %v199
    %v201 = vpop.f32.mrf.mxu0
    %202 = vmatprep.mubr.f32.mxu0 0.0
    %203 = vmatmul.mubr.f32.gmra.mxu0 %v67
    %v204 = vpop.f32.mrf.mxu0
    %v205 = vadd.f32 0.0, %v204
    %v206 = vpop.f32.mrf.mxu0
    %207 = vmatprep.mubr.f32.mxu0 0.0
    %208 = vmatmul.mubr.f32.gmra.mxu0 %v70
    %v209 = vpop.f32.mrf.mxu0
    %v210 = vadd.f32 0.0, %v209
    %v211 = vpop.f32.mrf.mxu0
    %212 = vmatprep.mubr.f32.mxu0 0.0
    %213 = vmatmul.mubr.f32.gmra.mxu0 %v73
    %v214 = vpop.f32.mrf.mxu0
    %v215 = vadd.f32 0.0, %v214
    %v216 = vpop.f32.mrf.mxu0
    %217 = vmatprep.mubr.f32.mxu0 0.0
    %218 = vmatmul.mubr.f32.gmra.mxu0 %v76
    %v219 = vpop.f32.mrf.mxu0
    %v220 = vadd.f32 0.0, %v219
    %v221 = vpop.f32.mrf.mxu0
    %222 = vmatprep.mubr.f32.mxu0 0.0
    %223 = vmatmul.mubr.f32.gmra.mxu0 %v79
    %v224 = vpop.f32.mrf.mxu0
    %v225 = vadd.f32 0.0, %v224
    %v226 = vpop.f32.mrf.mxu0
    %227 = vmatprep.mubr.f32.mxu0 0.0
    %228 = vmatmul.mubr.f32.gmra.mxu0 %v82
    %v229 = vpop.f32.mrf.mxu0
    %v230 = vadd.f32 0.0, %v229
    %v231 = vpop.f32.mrf.mxu0
    %232 = vmatprep.mubr.f32.mxu0 0.0
    %233 = vmatmul.mubr.f32.gmra.mxu0 %v85
    %v234 = vpop.f32.mrf.mxu0
    %v235 = vadd.f32 0.0, %v234
    %v236 = vpop.f32.mrf.mxu0
    %237 = vmatprep.mubr.f32.mxu0 0.0
    %238 = vmatmul.mubr.f32.gmra.mxu0 %v88
    %v239 = vpop.f32.mrf.mxu0
    %v240 = vadd.f32 0.0, %v239
    %v241 = vpop.f32.mrf.mxu0
    %242 = vmatprep.mubr.f32.mxu0 0.0
    %243 = vmatmul.mubr.f32.gmra.mxu0 %v91
    %v244 = vpop.f32.mrf.mxu0
    %v245 = vadd.f32 0.0, %v244
    %v246 = vpop.f32.mrf.mxu0
    %247 = vmatprep.mubr.f32.mxu0 0.0
    %248 = vmatmul.mubr.f32.gmra.mxu0 %v94
    %v249 = vpop.f32.mrf.mxu0
    %v250 = vadd.f32 0.0, %v249
    %v251 = vpop.f32.mrf.mxu0
    %252 = vmatprep.mubr.f32.mxu0 0.0
    %253 = vmatmul.mubr.f32.gmra.mxu0 %v97
    %v254 = vpop.f32.mrf.mxu0
    %v255 = vadd.f32 0.0, %v254
    %v256 = vpop.f32.mrf.mxu0
    %257 = vmatprep.mubr.f32.mxu0 0.0
    %258 = vmatmul.mubr.f32.gmra.mxu0 %v100
    %v259 = vpop.f32.mrf.mxu0
    %v260 = vadd.f32 0.0, %v259
    %v261 = vpop.f32.mrf.mxu0
    %262 = vmatprep.mubr.f32.mxu0 0.0
    %263 = vmatmul.mubr.f32.gmra.mxu0 %v103
    %v264 = vpop.f32.mrf.mxu0
    %v265 = vadd.f32 0.0, %v264
    %v266 = vpop.f32.mrf.mxu0
    %267 = vmatprep.mubr.f32.mxu0 0.0
    %268 = vmatmul.mubr.f32.gmra.mxu0 %v106
    %v269 = vpop.f32.mrf.mxu0
    %v270 = vadd.f32 0.0, %v269
    %v271 = vpop.f32.mrf.mxu0
    %272 = vmatprep.mubr.f32.mxu0 0.0
    %273 = vmatmul.mubr.f32.gmra.mxu0 %v109
    %v274 = vpop.f32.mrf.mxu0
    %v275 = vadd.f32 0.0, %v274
    %v276 = vpop.f32.mrf.mxu0
    %277 = vmatprep.mubr.f32.mxu0 0.0
    %278 = vmatmul.mubr.f32.gmra.mxu0 %v112
    %v279 = vpop.f32.mrf.mxu0
    %v280 = vadd.f32 0.0, %v279
    %v281 = vpop.f32.mrf.mxu0
    %282 = vmatprep.mubr.f32.mxu0 0.0
    %283 = vmatmul.mubr.f32.gmra.mxu0 %v115
    %v284 = vpop.f32.mrf.mxu0
    %v285 = vadd.f32 0.0, %v284
    %v286 = vpop.f32.mrf.mxu0
    %287 = vmatprep.mubr.f32.mxu0 0.0
    %288 = vmatmul.mubr.f32.gmra.mxu0 %v118
    %v289 = vpop.f32.mrf.mxu0
    %v290 = vadd.f32 0.0, %v289
    %v291 = vpop.f32.mrf.mxu0
    %292 = vmatprep.mubr.f32.mxu0 0.0
    %293 = vmatmul.mubr.f32.gmra.mxu0 %v121
    %v294 = vpop.f32.mrf.mxu0
    %v295 = vadd.f32 0.0, %v294
    %v296 = vpop.f32.mrf.mxu0
    %297 = vmatprep.mubr.f32.mxu0 0.0
    %298 = vmatmul.mubr.f32.gmra.mxu0 %v124
    %v299 = vpop.f32.mrf.mxu0
    %v300 = vadd.f32 0.0, %v299
    %v301 = vpop.f32.mrf.mxu0
    %302 = vmatprep.mubr.f32.mxu0 0.0
    %303 = vmatmul.mubr.f32.gmra.mxu0 %v127
    %v304 = vpop.f32.mrf.mxu0
    %v305 = vadd.f32 0.0, %v304
    %v306 = vpop.f32.mrf.mxu0
    %307 = vdwg.mxu0
    %vm308 = vcmask 162816
    %v309 = vsel %vm308, %v200, 0.0
    %v310 = vsel %vm308, %v205, 0.0
    %v311 = vadd.f32 %v309, %v310
    %v312 = vsel %vm308, %v210, 0.0
    %v313 = vadd.f32 %v311, %v312
    %v314 = vsel %vm308, %v215, 0.0
    %v315 = vadd.f32 %v313, %v314
    %v316 = vsel %vm308, %v220, 0.0
    %v317 = vadd.f32 %v315, %v316
    %v318 = vsel %vm308, %v225, 0.0
    %v319 = vadd.f32 %v317, %v318
    %v320 = vsel %vm308, %v230, 0.0
    %v321 = vadd.f32 %v319, %v320
    %v322 = vsel %vm308, %v235, 0.0
    %v323 = vadd.f32 %v321, %v322
    %v324 = vsel %vm308, %v240, 0.0
    %v325 = vadd.f32 %v323, %v324
    %v326 = vsel %vm308, %v245, 0.0
    %v327 = vadd.f32 %v325, %v326
    %v328 = vsel %vm308, %v250, 0.0
    %v329 = vadd.f32 %v327, %v328
    %v330 = vsel %vm308, %v255, 0.0
    %v331 = vadd.f32 %v329, %v330
    %v332 = vsel %vm308, %v260, 0.0
    %v333 = vadd.f32 %v331, %v332
    %v334 = vsel %vm308, %v265, 0.0
    %v335 = vadd.f32 %v333, %v334
    %v336 = vsel %vm308, %v270, 0.0
    %v337 = vadd.f32 %v335, %v336
    %v338 = vsel %vm308, %v275, 0.0
    %v339 = vadd.f32 %v337, %v338
    %v340 = vsel %vm308, %v280, 0.0
    %v341 = vadd.f32 %v339, %v340
    %v342 = vsel %vm308, %v285, 0.0
    %v343 = vadd.f32 %v341, %v342
    %v344 = vsel %vm308, %v290, 0.0
    %v345 = vadd.f32 %v343, %v344
    %v346 = vsel %vm308, %v295, 0.0
    %v347 = vadd.f32 %v345, %v346
    %v348 = vsel %vm308, %v300, 0.0
    %v349 = vadd.f32 %v347, %v348
    %v350 = vsel %vm308, %v305, 0.0
    %v351 = vadd.f32 %v349, %v350
    %v352 = vrot.slane %v351, 4
    %v353 = vadd.f32 %v351, %v352
    %v354 = vrot.slane %v353, 2
    %v355 = vadd.f32 %v353, %v354
    %v356 = vrot.slane %v355, 1
    %v357 = vadd.f32 %v355, %v356
    %vm358 = vcmask 156672
    %v359 = vsel %vm358, %v200, 0.0
    %v360 = vrot.slane %v359, 4
    %v361 = vadd.f32 %v359, %v360
    %v362 = vrot.slane %v361, 2
    %v363 = vadd.f32 %v361, %v362
    %v364 = vrot.slane %v363, 1
    %v365 = vadd.f32 %v363, %v364
    %v366 = vsub.f32 %v357, %v365
    %v367 = vmul.f32 %v200, %v200
    %v368 = vmul.f32 %v205, %v205
    %v369 = vmul.f32 %v210, %v210
    %v370 = vmul.f32 %v215, %v215
    %v371 = vmul.f32 %v220, %v220
    %v372 = vmul.f32 %v225, %v225
    %v373 = vmul.f32 %v230, %v230
    %v374 = vmul.f32 %v235, %v235
    %v375 = vmul.f32 %v240, %v240
    %v376 = vmul.f32 %v245, %v245
    %v377 = vmul.f32 %v250, %v250
    %v378 = vmul.f32 %v255, %v255
    %v379 = vmul.f32 %v260, %v260
    %v380 = vmul.f32 %v265, %v265
    %v381 = vmul.f32 %v270, %v270
    %v382 = vmul.f32 %v275, %v275
    %v383 = vmul.f32 %v280, %v280
    %v384 = vmul.f32 %v285, %v285
    %v385 = vmul.f32 %v290, %v290
    %v386 = vmul.f32 %v295, %v295
    %v387 = vmul.f32 %v300, %v300
    %v388 = vmul.f32 %v305, %v305
    %v389 = vsel %vm308, %v367, 0.0
    %v390 = vsel %vm308, %v368, 0.0
    %v391 = vadd.f32 %v389, %v390
    %v392 = vsel %vm308, %v369, 0.0
    %v393 = vadd.f32 %v391, %v392
    %v394 = vsel %vm308, %v370, 0.0
    %v395 = vadd.f32 %v393, %v394
    %v396 = vsel %vm308, %v371, 0.0
    %v397 = vadd.f32 %v395, %v396
    %v398 = vsel %vm308, %v372, 0.0
    %v399 = vadd.f32 %v397, %v398
    %v400 = vsel %vm308, %v373, 0.0
    %v401 = vadd.f32 %v399, %v400
    %v402 = vsel %vm308, %v374, 0.0
    %v403 = vadd.f32 %v401, %v402
    %v404 = vsel %vm308, %v375, 0.0
    %v405 = vadd.f32 %v403, %v404
    %v406 = vsel %vm308, %v376, 0.0
    %v407 = vadd.f32 %v405, %v406
    %v408 = vsel %vm308, %v377, 0.0
    %v409 = vadd.f32 %v407, %v408
    %v410 = vsel %vm308, %v378, 0.0
    %v411 = vadd.f32 %v409, %v410
    %v412 = vsel %vm308, %v379, 0.0
    %v413 = vadd.f32 %v411, %v412
    %v414 = vsel %vm308, %v380, 0.0
    %v415 = vadd.f32 %v413, %v414
    %v416 = vsel %vm308, %v381, 0.0
    %v417 = vadd.f32 %v415, %v416
    %v418 = vsel %vm308, %v382, 0.0
    %v419 = vadd.f32 %v417, %v418
    %v420 = vsel %vm308, %v383, 0.0
    %v421 = vadd.f32 %v419, %v420
    %v422 = vsel %vm308, %v384, 0.0
    %v423 = vadd.f32 %v421, %v422
    %v424 = vsel %vm308, %v385, 0.0
    %v425 = vadd.f32 %v423, %v424
    %v426 = vsel %vm308, %v386, 0.0
    %v427 = vadd.f32 %v425, %v426
    %v428 = vsel %vm308, %v387, 0.0
    %v429 = vadd.f32 %v427, %v428
    %v430 = vsel %vm308, %v388, 0.0
    %v431 = vadd.f32 %v429, %v430
    %v432 = vrot.slane %v431, 4
    %v433 = vadd.f32 %v431, %v432
    %v434 = vrot.slane %v433, 2
    %v435 = vadd.f32 %v433, %v434
    %v436 = vrot.slane %v435, 1
    %v437 = vadd.f32 %v435, %v436
    %v438 = vsel %vm358, %v367, 0.0
    %v439 = vrot.slane %v438, 4
    %v440 = vadd.f32 %v438, %v439
    %v441 = vrot.slane %v440, 2
    %v442 = vadd.f32 %v440, %v441
    %v443 = vrot.slane %v442, 1
    %v444 = vadd.f32 %v442, %v443
    %v445 = vsub.f32 %v437, %v444
    %v446 = vmul.f32 %v366, 0.006024096
    %v447 = vmul.f32 %v445, 0.006024096
    %v448 = vmul.f32 %v446, %v446
    %v449 = vsub.f32 %v447, %v448
    %v450 = vld [vmem:[%s2] sm:$0x1]
    %v451 = vadd.f32 %v449, 1e-05
    %v452 = vrsqrt.pop %v451
    %v453 = vmul.f32 %v450, %v452
    %v454 = vld [vmem:[%s3] sm:$0x1]
    %v455 = vmul.f32 %v446, %v453
    %v456 = vsub.f32 %v454, %v455
    %v458 = vlaneseq
    %v459 = vshrl.u32 %v458, 7
    %v460 = vsub.s32 0, %v459
    %v461 = vrot.slane %v453, %v460
    %v463 = vmul.f32 %v200, %v461
    %v464 = vmul.f32 %v205, %v461
    %v465 = vmul.f32 %v210, %v461
    %v466 = vmul.f32 %v215, %v461
    %v467 = vmul.f32 %v220, %v461
    %v468 = vmul.f32 %v225, %v461
    %v469 = vmul.f32 %v230, %v461
    %v470 = vmul.f32 %v235, %v461
    %v471 = vmul.f32 %v240, %v461
    %v472 = vmul.f32 %v245, %v461
    %v473 = vmul.f32 %v250, %v461
    %v474 = vmul.f32 %v255, %v461
    %v475 = vmul.f32 %v260, %v461
    %v476 = vmul.f32 %v265, %v461
    %v477 = vmul.f32 %v270, %v461
    %v478 = vmul.f32 %v275, %v461
    %v479 = vmul.f32 %v280, %v461
    %v480 = vmul.f32 %v285, %v461
    %v481 = vmul.f32 %v290, %v461
    %v482 = vmul.f32 %v295, %v461
    %v483 = vmul.f32 %v300, %v461
    %v484 = vmul.f32 %v305, %v461
    %v486 = vlaneseq
    %v487 = vshrl.u32 %v486, 7
    %v488 = vsub.s32 0, %v487
    %v489 = vrot.slane %v456, %v488
    %v491 = vadd.f32 %v463, %v489
    %v492 = vadd.f32 %v464, %v489
    %v493 = vadd.f32 %v465, %v489
    %v494 = vadd.f32 %v466, %v489
    %v495 = vadd.f32 %v467, %v489
    %v496 = vadd.f32 %v468, %v489
    %v497 = vadd.f32 %v469, %v489
    %v498 = vadd.f32 %v470, %v489
    %v499 = vadd.f32 %v471, %v489
    %v500 = vadd.f32 %v472, %v489
    %v501 = vadd.f32 %v473, %v489
    %v502 = vadd.f32 %v474, %v489
    %v503 = vadd.f32 %v475, %v489
    %v504 = vadd.f32 %v476, %v489
    %v505 = vadd.f32 %v477, %v489
    %v506 = vadd.f32 %v478, %v489
    %v507 = vadd.f32 %v479, %v489
    %v508 = vadd.f32 %v480, %v489
    %v509 = vadd.f32 %v481, %v489
    %v510 = vadd.f32 %v482, %v489
    %v511 = vadd.f32 %v483, %v489
    %v512 = vadd.f32 %v484, %v489
    %v513 = vmax.f32 %v491, 0.0
    %v514 = vmax.f32 %v492, 0.0
    %v515 = vmax.f32 %v493, 0.0
    %v516 = vmax.f32 %v494, 0.0
    %v517 = vmax.f32 %v495, 0.0
    %v518 = vmax.f32 %v496, 0.0
    %v519 = vmax.f32 %v497, 0.0
    %v520 = vmax.f32 %v498, 0.0
    %v521 = vmax.f32 %v499, 0.0
    %v522 = vmax.f32 %v500, 0.0
    %v523 = vmax.f32 %v501, 0.0
    %v524 = vmax.f32 %v502, 0.0
    %v525 = vmax.f32 %v503, 0.0
    %v526 = vmax.f32 %v504, 0.0
    %v527 = vmax.f32 %v505, 0.0
    %v528 = vmax.f32 %v506, 0.0
    %v529 = vmax.f32 %v507, 0.0
    %v530 = vmax.f32 %v508, 0.0
    %v531 = vmax.f32 %v509, 0.0
    %v532 = vmax.f32 %v510, 0.0
    %v533 = vmax.f32 %v511, 0.0
    %v534 = vmax.f32 %v512, 0.0
    %v535 = vmax.f32 %v513, %v524
    %v536 = vmax.f32 %v514, %v525
    %v537 = vmax.f32 %v515, %v526
    %v538 = vmax.f32 %v516, %v527
    %v539 = vmax.f32 %v517, %v528
    %v540 = vmax.f32 %v518, %v529
    %v541 = vmax.f32 %v519, %v530
    %v542 = vmax.f32 %v520, %v531
    %v543 = vmax.f32 %v521, %v532
    %v544 = vmax.f32 %v522, %v533
    %v545 = vmax.f32 %v523, %v534
    %v546 = vld [vmem:[%s4] sm:$0xff]
    %v547 = vld [vmem:[%s4 + $0x8] sm:$0xff]
    %v548 = vld [vmem:[%s4 + $0x10] sm:$0xff]
    %v549 = vld [vmem:[%s4 + $0x18] sm:$0xff]
    %v550 = vld [vmem:[%s4 + $0x20] sm:$0xf]
    %v551 = vld [vmem:[%s4 + $0x28] sm:$0xf]
    %v552 = vld [vmem:[%s5] sm:$0x3]
    %v554 = vlaneseq
    %v555 = vshrl.u32 %v554, 7
    %v556 = vsub.s32 0, %v555
    %v557 = vrot.slane %v552, %v556
    %v558 = vlaneseq
    %v559 = vshrl.u32 %v558, 7
    %v560 = vsub.s32 1, %v559
    %v561 = vrot.slane %v552, %v560
    %v565 = vsel %vm308, %v535, 0
    %v568 = vsel %vm308, %v536, 0
    %v571 = vsel %vm308, %v537, 0
    %v574 = vsel %vm308, %v538, 0
    %v577 = vsel %vm308, %v539, 0
    %v580 = vsel %vm308, %v540, 0
    %v583 = vsel %vm308, %v541, 0
    %v586 = vsel %vm308, %v542, 0
    %v589 = vsel %vm308, %v543, 0
    %v592 = vsel %vm308, %v544, 0
    %v595 = vsel %vm308, %v545, 0
    %vm597 = vcmask 1043456
    %v599 = vsel %vm597, %v550, 0
    %v602 = vsel %vm597, %v551, 0
    %604 = vmatprep.subr.mxu0 0.0
    %605 = vmatpush1.msra.mxu0 0.0
    %606 = vmatprep.subr.mxu0 0.0
    %607 = vmatpush1.msra.mxu0 0.0
    %608 = vmatprep.subr.mxu0 0.0
    %609 = vmatpush1.msra.mxu0 0.0
    %610 = vmatprep.subr.mxu0 0.0
    %611 = vmatpush1.msra.mxu0 0.0
    %612 = vmatprep.subr.mxu0 0.0
    %613 = vmatpush1.msra.mxu0 0.0
    %614 = vmatprep.subr.mxu0 0.0
    %615 = vmatpush1.msra.mxu0 0.0
    %616 = vmatprep.subr.mxu0 0.0
    %617 = vmatpush1.msra.mxu0 0.0
    %618 = vmatprep.subr.mxu0 0.0
    %619 = vmatpush1.msra.mxu0 0.0
    %620 = vmatprep.subr.mxu0 0.0
    %621 = vmatpush1.msra.mxu0 0.0
    %622 = vmatprep.subr.mxu0 0.0
    %623 = vmatpush1.msra.mxu0 0.0
    %624 = vmatprep.subr.mxu0 0.0
    %625 = vmatpush1.msra.mxu0 0.0
    %626 = vmatprep.subr.mxu0 0.0
    %627 = vmatpush1.msra.mxu0 0.0
    %628 = vmatprep.subr.mxu0 0.0
    %629 = vmatpush1.msra.mxu0 0.0
    %630 = vmatprep.subr.mxu0 %v602
    %631 = vmatpush1.msra.mxu0 %v599
    %632 = vmatprep.subr.mxu0 %v549
    %633 = vmatpush1.msra.mxu0 %v548
    %634 = vmatprep.subr.mxu0 %v547
    %635 = vmatpush1.msra.mxu0 %v546
    %636 = vmatprep.subr.mxu0 0.0
    %637 = vmatpush2.msra.mxu0 0.0
    %638 = vmatprep.subr.mxu0 0.0
    %639 = vmatpush2.msra.mxu0 0.0
    %640 = vmatprep.subr.mxu0 0.0
    %641 = vmatpush2.msra.mxu0 0.0
    %642 = vmatprep.subr.mxu0 0.0
    %643 = vmatpush2.msra.mxu0 0.0
    %644 = vmatprep.subr.mxu0 0.0
    %645 = vmatpush2.msra.mxu0 0.0
    %646 = vmatprep.subr.mxu0 0.0
    %647 = vmatpush2.msra.mxu0 0.0
    %648 = vmatprep.subr.mxu0 0.0
    %649 = vmatpush2.msra.mxu0 0.0
    %650 = vmatprep.subr.mxu0 0.0
    %651 = vmatpush2.msra.mxu0 0.0
    %652 = vmatprep.subr.mxu0 0.0
    %653 = vmatpush2.msra.mxu0 0.0
    %654 = vmatprep.subr.mxu0 0.0
    %655 = vmatpush2.msra.mxu0 0.0
    %656 = vmatprep.subr.mxu0 0.0
    %657 = vmatpush2.msra.mxu0 0.0
    %658 = vmatprep.subr.mxu0 0.0
    %659 = vmatpush2.msra.mxu0 0.0
    %660 = vmatprep.subr.mxu0 0.0
    %661 = vmatpush2.msra.mxu0 0.0
    %662 = vmatprep.subr.mxu0 0.0
    %663 = vmatpush2.msra.mxu0 0.0
    %664 = vmatprep.subr.mxu0 0.0
    %665 = vmatpush2.msra.mxu0 0.0
    %666 = vmatprep.subr.mxu0 0.0
    %667 = vmatpush2.msra.mxu0 0.0
    %668 = vmatprep.mubr.f32.mxu0 0.0
    %669 = vmatmul.mubr.f32.gmra.mxu0 %v565
    %v670 = vpop.f32.mrf.mxu0
    %v671 = vadd.f32 %v557, %v670
    %v672 = vpop.f32.mrf.mxu0
    %673 = vmatprep.mubr.f32.mxu0 0.0
    %674 = vmatmul.mubr.f32.gmra.mxu0 %v568
    %v675 = vpop.f32.mrf.mxu0
    %v676 = vadd.f32 %v557, %v675
    %v677 = vpop.f32.mrf.mxu0
    %678 = vmatprep.mubr.f32.mxu0 0.0
    %679 = vmatmul.mubr.f32.gmra.mxu0 %v571
    %v680 = vpop.f32.mrf.mxu0
    %v681 = vadd.f32 %v557, %v680
    %v682 = vpop.f32.mrf.mxu0
    %683 = vmatprep.mubr.f32.mxu0 0.0
    %684 = vmatmul.mubr.f32.gmra.mxu0 %v574
    %v685 = vpop.f32.mrf.mxu0
    %v686 = vadd.f32 %v557, %v685
    %v687 = vpop.f32.mrf.mxu0
    %688 = vmatprep.mubr.f32.mxu0 0.0
    %689 = vmatmul.mubr.f32.gmra.mxu0 %v577
    %v690 = vpop.f32.mrf.mxu0
    %v691 = vadd.f32 %v557, %v690
    %v692 = vpop.f32.mrf.mxu0
    %693 = vmatprep.mubr.f32.mxu0 0.0
    %694 = vmatmul.mubr.f32.gmra.mxu0 %v580
    %v695 = vpop.f32.mrf.mxu0
    %v696 = vadd.f32 %v557, %v695
    %v697 = vpop.f32.mrf.mxu0
    %698 = vmatprep.mubr.f32.mxu0 0.0
    %699 = vmatmul.mubr.f32.gmra.mxu0 %v583
    %v700 = vpop.f32.mrf.mxu0
    %v701 = vadd.f32 %v557, %v700
    %v702 = vpop.f32.mrf.mxu0
    %703 = vmatprep.mubr.f32.mxu0 0.0
    %704 = vmatmul.mubr.f32.gmra.mxu0 %v586
    %v705 = vpop.f32.mrf.mxu0
    %v706 = vadd.f32 %v557, %v705
    %v707 = vpop.f32.mrf.mxu0
    %708 = vmatprep.mubr.f32.mxu0 0.0
    %709 = vmatmul.mubr.f32.gmra.mxu0 %v589
    %v710 = vpop.f32.mrf.mxu0
    %v711 = vadd.f32 %v557, %v710
    %v712 = vpop.f32.mrf.mxu0
    %713 = vmatprep.mubr.f32.mxu0 0.0
    %714 = vmatmul.mubr.f32.gmra.mxu0 %v592
    %v715 = vpop.f32.mrf.mxu0
    %v716 = vadd.f32 %v557, %v715
    %v717 = vpop.f32.mrf.mxu0
    %718 = vmatprep.mubr.f32.mxu0 0.0
    %719 = vmatmul.mubr.f32.gmra.mxu0 %v595
    %v720 = vpop.f32.mrf.mxu0
    %v721 = vadd.f32 %v557, %v720
    %v722 = vpop.f32.mrf.mxu0
    %v723 = vadd.f32 %v561, %v722
    %724 = vdwg.mxu0
    %725 = vst [vmem:[#allocation2] sm:$0xff] %v671
    %726 = vst [vmem:[#allocation2 + $0x8] sm:$0xff] %v676
    %727 = vst [vmem:[#allocation2 + $0x10] sm:$0xff] %v681
    %728 = vst [vmem:[#allocation2 + $0x18] sm:$0xff] %v686
    %729 = vst [vmem:[#allocation2 + $0x20] sm:$0xff] %v691
    %730 = vst [vmem:[#allocation2 + $0x28] sm:$0xff] %v696
    %731 = vst [vmem:[#allocation2 + $0x30] sm:$0xff] %v701
    %732 = vst [vmem:[#allocation2 + $0x38] sm:$0xff] %v706
    %733 = vst [vmem:[#allocation2 + $0x40] sm:$0xff] %v711
    %734 = vst [vmem:[#allocation2 + $0x48] sm:$0xff] %v716
    %735 = vst [vmem:[#allocation2 + $0x50] sm:$0xff] %v721
    %v736 = vlaneseq
    %v737 = vand.u32 %v736, 127
    %vm738 = vcmp.ge.s32.totalorder %v737, 64
    %vm739 = vcmp.lt.s32.totalorder %v737, 96
    %vm740 = vmand %vm738, %vm739
    %v741 = vsel %vm740, 1.0, 0.5
    %v742 = vsel %vm740, 0.0, 0.5
    %v743 = vld [vmem:[%s6] sm:$0xf]
    %v744 = vld [vmem:[%s6 + $0x4] sm:$0xf]
    %v745 = vld [vmem:[%s6 + $0x8] sm:$0xf]
    %v746 = vld [vmem:[%s6 + $0xc] sm:$0xf]
    %v747 = vmul.f32 %v723, %v741
    %v748 = vtanh.pop %v747
    %v749 = vmul.f32 %v748, %v741
    %v750 = vadd.f32 %v749, %v742
    %752 = vrot.lane.b32.xlu0 %v750, 64
    %v753 = vpop.permute.xlu0 %752
    %v755 = vmul.f32 %v750, %v753
    %v756 = vtanh.pop %v755
    %758 = vrot.lane.b32.xlu0 %v756, 96
    %v759 = vpop.permute.xlu0 %758
    %v761 = vmul.f32 %v750, %v759
    %v766 = vunpack.c.l.b16 %v743
    %v767 = vunpack.c.l.b16 %v744
    %v768 = vunpack.c.l.b16 %v745
    %v769 = vunpack.c.l.b16 %v746
    %v770 = vpack.c.b16 %v767, %v766
    %v771 = vpack.c.b16 %v769, %v768
    %vm774 = vcmask 261120
    %v776 = vsel %vm774, 0, 0
    %778 = vmatprep.subr.bf16.mxu0 0
    %779 = vmatpush1.bf16.msra.mxu0 0
    %780 = vmatprep.subr.bf16.mxu0 0
    %781 = vmatpush1.bf16.msra.mxu0 0
    %782 = vmatprep.subr.bf16.mxu0 0
    %783 = vmatpush1.bf16.msra.mxu0 0
    %784 = vmatprep.subr.bf16.mxu0 0
    %785 = vmatpush1.bf16.msra.mxu0 0
    %786 = vmatprep.subr.bf16.mxu0 0
    %787 = vmatpush1.bf16.msra.mxu0 0
    %788 = vmatprep.subr.bf16.mxu0 0
    %789 = vmatpush1.bf16.msra.mxu0 0
    %790 = vmatprep.subr.bf16.mxu0 0
    %791 = vmatpush1.bf16.msra.mxu0 %v771
    %792 = vmatprep.subr.bf16.mxu0 0
    %793 = vmatpush1.bf16.msra.mxu0 %v770
    %794 = vmatprep.subr.bf16.mxu0 0
    %795 = vmatpush2.bf16.msra.mxu0 0
    %796 = vmatprep.subr.bf16.mxu0 0
    %797 = vmatpush2.bf16.msra.mxu0 0
    %798 = vmatprep.subr.bf16.mxu0 0
    %799 = vmatpush2.bf16.msra.mxu0 0
    %800 = vmatprep.subr.bf16.mxu0 0
    %801 = vmatpush2.bf16.msra.mxu0 0
    %802 = vmatprep.subr.bf16.mxu0 0
    %803 = vmatpush2.bf16.msra.mxu0 0
    %804 = vmatprep.subr.bf16.mxu0 0
    %805 = vmatpush2.bf16.msra.mxu0 0
    %806 = vmatprep.subr.bf16.mxu0 0
    %807 = vmatpush2.bf16.msra.mxu0 0
    %808 = vmatprep.subr.bf16.mxu0 0
    %809 = vmatpush2.bf16.msra.mxu0 0
    %810 = vmatprep.mubr.bf16.mxu0 0
    %811 = vmatmul.mubr.bf16.gmra.mxu0 %v776
    %v812 = vpop.f32.mrf.mxu0
    %v813 = vadd.f32 0.0, %v812
    %v814 = vpop.f32.mrf.mxu0
    %v815 = vpop.f32.mrf.mxu0
    %v816 = vpop.f32.mrf.mxu0
    %817 = vdwg.mxu0
    %v818 = vld [vmem:[#allocation2] sm:$0x3]
    %v819 = vadd.f32 %v818, %v813
    %v820 = vmul.f32 %v819, %v741
    %v821 = vtanh.pop %v820
    %v822 = vmul.f32 %v821, %v741
    %v823 = vadd.f32 %v822, %v742
    %v824 = vmul.f32 %v823, 0.0
    %826 = vrot.lane.b32.xlu0 %v823, 64
    %v827 = vpop.permute.xlu0 %826
    %v829 = vmul.f32 %v823, %v827
    %831 = vrot.lane.b32.xlu0 %v829, 32
    %v832 = vpop.permute.xlu0 %831
    %v834 = vadd.f32 %v824, %v832
    %v835 = vtanh.pop %v834
    %837 = vrot.lane.b32.xlu0 %v835, 64
    %v838 = vpop.permute.xlu0 %837
    %v840 = vmul.f32 %v823, %v838
    %v841 = vpack.c.bf16 %v840, %v840
    %843 = vrot.lane.b32.xlu0 %v841, 32
    %v844 = vpop.permute.xlu0 %843
    %v846 = vsel %vm774, %v844, 0
    %848 = vmatprep.subr.bf16.mxu0 0
    %849 = vmatpush1.bf16.msra.mxu0 0
    %850 = vmatprep.subr.bf16.mxu0 0
    %851 = vmatpush1.bf16.msra.mxu0 0
    %852 = vmatprep.subr.bf16.mxu0 0
    %853 = vmatpush1.bf16.msra.mxu0 0
    %854 = vmatprep.subr.bf16.mxu0 0
    %855 = vmatpush1.bf16.msra.mxu0 0
    %856 = vmatprep.subr.bf16.mxu0 0
    %857 = vmatpush1.bf16.msra.mxu0 0
    %858 = vmatprep.subr.bf16.mxu0 0
    %859 = vmatpush1.bf16.msra.mxu0 0
    %860 = vmatprep.subr.bf16.mxu0 0
    %861 = vmatpush1.bf16.msra.mxu0 %v771
    %862 = vmatprep.subr.bf16.mxu0 0
    %863 = vmatpush1.bf16.msra.mxu0 %v770
    %864 = vmatprep.subr.bf16.mxu0 0
    %865 = vmatpush2.bf16.msra.mxu0 0
    %866 = vmatprep.subr.bf16.mxu0 0
    %867 = vmatpush2.bf16.msra.mxu0 0
    %868 = vmatprep.subr.bf16.mxu0 0
    %869 = vmatpush2.bf16.msra.mxu0 0
    %870 = vmatprep.subr.bf16.mxu0 0
    %871 = vmatpush2.bf16.msra.mxu0 0
    %872 = vmatprep.subr.bf16.mxu0 0
    %873 = vmatpush2.bf16.msra.mxu0 0
    %874 = vmatprep.subr.bf16.mxu0 0
    %875 = vmatpush2.bf16.msra.mxu0 0
    %876 = vmatprep.subr.bf16.mxu0 0
    %877 = vmatpush2.bf16.msra.mxu0 0
    %878 = vmatprep.subr.bf16.mxu0 0
    %879 = vmatpush2.bf16.msra.mxu0 0
    %880 = vmatprep.mubr.bf16.mxu0 0
    %881 = vmatmul.mubr.bf16.gmra.mxu0 %v846
    %v882 = vpop.f32.mrf.mxu0
    %v883 = vadd.f32 0.0, %v882
    %v884 = vpop.f32.mrf.mxu0
    %v885 = vpop.f32.mrf.mxu0
    %v886 = vpop.f32.mrf.mxu0
    %887 = vdwg.mxu0
    %v888 = vld [vmem:[#allocation2 + $0x2] sm:$0x3]
    %v889 = vadd.f32 %v888, %v883
    %v890 = vmul.f32 %v889, %v741
    %v891 = vtanh.pop %v890
    %v892 = vmul.f32 %v891, %v741
    %v893 = vadd.f32 %v892, %v742
    %v894 = vmul.f32 %v893, %v834
    %896 = vrot.lane.b32.xlu0 %v893, 64
    %v897 = vpop.permute.xlu0 %896
    %v899 = vmul.f32 %v893, %v897
    %901 = vrot.lane.b32.xlu0 %v899, 32
    %v902 = vpop.permute.xlu0 %901
    %v904 = vadd.f32 %v894, %v902
    %v905 = vtanh.pop %v904
    %907 = vrot.lane.b32.xlu0 %v905, 64
    %v908 = vpop.permute.xlu0 %907
    %v910 = vmul.f32 %v893, %v908
    %v911 = vpack.c.bf16 %v910, %v910
    %913 = vrot.lane.b32.xlu0 %v911, 32
    %v914 = vpop.permute.xlu0 %913
    %v916 = vsel %vm774, %v914, 0
    %918 = vmatprep.subr.bf16.mxu0 0
    %919 = vmatpush1.bf16.msra.mxu0 0
    %920 = vmatprep.subr.bf16.mxu0 0
    %921 = vmatpush1.bf16.msra.mxu0 0
    %922 = vmatprep.subr.bf16.mxu0 0
    %923 = vmatpush1.bf16.msra.mxu0 0
    %924 = vmatprep.subr.bf16.mxu0 0
    %925 = vmatpush1.bf16.msra.mxu0 0
    %926 = vmatprep.subr.bf16.mxu0 0
    %927 = vmatpush1.bf16.msra.mxu0 0
    %928 = vmatprep.subr.bf16.mxu0 0
    %929 = vmatpush1.bf16.msra.mxu0 0
    %930 = vmatprep.subr.bf16.mxu0 0
    %931 = vmatpush1.bf16.msra.mxu0 %v771
    %932 = vmatprep.subr.bf16.mxu0 0
    %933 = vmatpush1.bf16.msra.mxu0 %v770
    %934 = vmatprep.subr.bf16.mxu0 0
    %935 = vmatpush2.bf16.msra.mxu0 0
    %936 = vmatprep.subr.bf16.mxu0 0
    %937 = vmatpush2.bf16.msra.mxu0 0
    %938 = vmatprep.subr.bf16.mxu0 0
    %939 = vmatpush2.bf16.msra.mxu0 0
    %940 = vmatprep.subr.bf16.mxu0 0
    %941 = vmatpush2.bf16.msra.mxu0 0
    %942 = vmatprep.subr.bf16.mxu0 0
    %943 = vmatpush2.bf16.msra.mxu0 0
    %944 = vmatprep.subr.bf16.mxu0 0
    %945 = vmatpush2.bf16.msra.mxu0 0
    %946 = vmatprep.subr.bf16.mxu0 0
    %947 = vmatpush2.bf16.msra.mxu0 0
    %948 = vmatprep.subr.bf16.mxu0 0
    %949 = vmatpush2.bf16.msra.mxu0 0
    %950 = vmatprep.mubr.bf16.mxu0 0
    %951 = vmatmul.mubr.bf16.gmra.mxu0 %v916
    %v952 = vpop.f32.mrf.mxu0
    %v953 = vadd.f32 0.0, %v952
    %v954 = vpop.f32.mrf.mxu0
    %v955 = vpop.f32.mrf.mxu0
    %v956 = vpop.f32.mrf.mxu0
    %957 = vdwg.mxu0
    %v958 = vld [vmem:[#allocation2 + $0x4] sm:$0x3]
    %v959 = vadd.f32 %v958, %v953
    %v960 = vmul.f32 %v959, %v741
    %v961 = vtanh.pop %v960
    %v962 = vmul.f32 %v961, %v741
    %v963 = vadd.f32 %v962, %v742
    %v964 = vmul.f32 %v963, %v904
    %966 = vrot.lane.b32.xlu0 %v963, 64
    %v967 = vpop.permute.xlu0 %966
    %v969 = vmul.f32 %v963, %v967
    %971 = vrot.lane.b32.xlu0 %v969, 32
    %v972 = vpop.permute.xlu0 %971
    %v974 = vadd.f32 %v964, %v972
    %v975 = vtanh.pop %v974
    %977 = vrot.lane.b32.xlu0 %v975, 64
    %v978 = vpop.permute.xlu0 %977
    %v980 = vmul.f32 %v963, %v978
    %v981 = vpack.c.bf16 %v980, %v980
    %983 = vrot.lane.b32.xlu0 %v981, 32
    %v984 = vpop.permute.xlu0 %983
    %v986 = vsel %vm774, %v984, 0
    %988 = vmatprep.subr.bf16.mxu0 0
    %989 = vmatpush1.bf16.msra.mxu0 0
    %990 = vmatprep.subr.bf16.mxu0 0
    %991 = vmatpush1.bf16.msra.mxu0 0
    %992 = vmatprep.subr.bf16.mxu0 0
    %993 = vmatpush1.bf16.msra.mxu0 0
    %994 = vmatprep.subr.bf16.mxu0 0
    %995 = vmatpush1.bf16.msra.mxu0 0
    %996 = vmatprep.subr.bf16.mxu0 0
    %997 = vmatpush1.bf16.msra.mxu0 0
    %998 = vmatprep.subr.bf16.mxu0 0
    %999 = vmatpush1.bf16.msra.mxu0 0
    %1000 = vmatprep.subr.bf16.mxu0 0
    %1001 = vmatpush1.bf16.msra.mxu0 %v771
    %1002 = vmatprep.subr.bf16.mxu0 0
    %1003 = vmatpush1.bf16.msra.mxu0 %v770
    %1004 = vmatprep.subr.bf16.mxu0 0
    %1005 = vmatpush2.bf16.msra.mxu0 0
    %1006 = vmatprep.subr.bf16.mxu0 0
    %1007 = vmatpush2.bf16.msra.mxu0 0
    %1008 = vmatprep.subr.bf16.mxu0 0
    %1009 = vmatpush2.bf16.msra.mxu0 0
    %1010 = vmatprep.subr.bf16.mxu0 0
    %1011 = vmatpush2.bf16.msra.mxu0 0
    %1012 = vmatprep.subr.bf16.mxu0 0
    %1013 = vmatpush2.bf16.msra.mxu0 0
    %1014 = vmatprep.subr.bf16.mxu0 0
    %1015 = vmatpush2.bf16.msra.mxu0 0
    %1016 = vmatprep.subr.bf16.mxu0 0
    %1017 = vmatpush2.bf16.msra.mxu0 0
    %1018 = vmatprep.subr.bf16.mxu0 0
    %1019 = vmatpush2.bf16.msra.mxu0 0
    %1020 = vmatprep.mubr.bf16.mxu0 0
    %1021 = vmatmul.mubr.bf16.gmra.mxu0 %v986
    %v1022 = vpop.f32.mrf.mxu0
    %v1023 = vadd.f32 0.0, %v1022
    %v1024 = vpop.f32.mrf.mxu0
    %v1025 = vpop.f32.mrf.mxu0
    %v1026 = vpop.f32.mrf.mxu0
    %1027 = vdwg.mxu0
    %v1028 = vld [vmem:[#allocation2 + $0x6] sm:$0x3]
    %v1029 = vadd.f32 %v1028, %v1023
    %v1030 = vmul.f32 %v1029, %v741
    %v1031 = vtanh.pop %v1030
    %v1032 = vmul.f32 %v1031, %v741
    %v1033 = vadd.f32 %v1032, %v742
    %v1034 = vmul.f32 %v1033, %v974
    %1036 = vrot.lane.b32.xlu0 %v1033, 64
    %v1037 = vpop.permute.xlu0 %1036
    %v1039 = vmul.f32 %v1033, %v1037
    %1041 = vrot.lane.b32.xlu0 %v1039, 32
    %v1042 = vpop.permute.xlu0 %1041
    %v1044 = vadd.f32 %v1034, %v1042
    %v1045 = vtanh.pop %v1044
    %1047 = vrot.lane.b32.xlu0 %v1045, 64
    %v1048 = vpop.permute.xlu0 %1047
    %v1050 = vmul.f32 %v1033, %v1048
    %v1051 = vpack.c.bf16 %v1050, %v1050
    %1053 = vrot.lane.b32.xlu0 %v1051, 32
    %v1054 = vpop.permute.xlu0 %1053
    %v1056 = vsel %vm774, %v1054, 0
    %1058 = vmatprep.subr.bf16.mxu0 0
    %1059 = vmatpush1.bf16.msra.mxu0 0
    %1060 = vmatprep.subr.bf16.mxu0 0
    %1061 = vmatpush1.bf16.msra.mxu0 0
    %1062 = vmatprep.subr.bf16.mxu0 0
    %1063 = vmatpush1.bf16.msra.mxu0 0
    %1064 = vmatprep.subr.bf16.mxu0 0
    %1065 = vmatpush1.bf16.msra.mxu0 0
    %1066 = vmatprep.subr.bf16.mxu0 0
    %1067 = vmatpush1.bf16.msra.mxu0 0
    %1068 = vmatprep.subr.bf16.mxu0 0
    %1069 = vmatpush1.bf16.msra.mxu0 0
    %1070 = vmatprep.subr.bf16.mxu0 0
    %1071 = vmatpush1.bf16.msra.mxu0 %v771
    %1072 = vmatprep.subr.bf16.mxu0 0
    %1073 = vmatpush1.bf16.msra.mxu0 %v770
    %1074 = vmatprep.subr.bf16.mxu0 0
    %1075 = vmatpush2.bf16.msra.mxu0 0
    %1076 = vmatprep.subr.bf16.mxu0 0
    %1077 = vmatpush2.bf16.msra.mxu0 0
    %1078 = vmatprep.subr.bf16.mxu0 0
    %1079 = vmatpush2.bf16.msra.mxu0 0
    %1080 = vmatprep.subr.bf16.mxu0 0
    %1081 = vmatpush2.bf16.msra.mxu0 0
    %1082 = vmatprep.subr.bf16.mxu0 0
    %1083 = vmatpush2.bf16.msra.mxu0 0
    %1084 = vmatprep.subr.bf16.mxu0 0
    %1085 = vmatpush2.bf16.msra.mxu0 0
    %1086 = vmatprep.subr.bf16.mxu0 0
    %1087 = vmatpush2.bf16.msra.mxu0 0
    %1088 = vmatprep.subr.bf16.mxu0 0
    %1089 = vmatpush2.bf16.msra.mxu0 0
    %1090 = vmatprep.mubr.bf16.mxu0 0
    %1091 = vmatmul.mubr.bf16.gmra.mxu0 %v1056
    %v1092 = vpop.f32.mrf.mxu0
    %v1093 = vadd.f32 0.0, %v1092
    %v1094 = vpop.f32.mrf.mxu0
    %v1095 = vpop.f32.mrf.mxu0
    %v1096 = vpop.f32.mrf.mxu0
    %1097 = vdwg.mxu0
    %v1098 = vld [vmem:[#allocation2 + $0x8] sm:$0x3]
    %v1099 = vadd.f32 %v1098, %v1093
    %v1100 = vmul.f32 %v1099, %v741
    %v1101 = vtanh.pop %v1100
    %v1102 = vmul.f32 %v1101, %v741
    %v1103 = vadd.f32 %v1102, %v742
    %v1104 = vmul.f32 %v1103, %v1044
    %1106 = vrot.lane.b32.xlu0 %v1103, 64
    %v1107 = vpop.permute.xlu0 %1106
    %v1109 = vmul.f32 %v1103, %v1107
    %1111 = vrot.lane.b32.xlu0 %v1109, 32
    %v1112 = vpop.permute.xlu0 %1111
    %v1114 = vadd.f32 %v1104, %v1112
    %v1115 = vtanh.pop %v1114
    %1117 = vrot.lane.b32.xlu0 %v1115, 64
    %v1118 = vpop.permute.xlu0 %1117
    %v1120 = vmul.f32 %v1103, %v1118
    %v1121 = vpack.c.bf16 %v1120, %v1120
    %1123 = vrot.lane.b32.xlu0 %v1121, 32
    %v1124 = vpop.permute.xlu0 %1123
    %v1126 = vsel %vm774, %v1124, 0
    %1128 = vmatprep.subr.bf16.mxu0 0
    %1129 = vmatpush1.bf16.msra.mxu0 0
    %1130 = vmatprep.subr.bf16.mxu0 0
    %1131 = vmatpush1.bf16.msra.mxu0 0
    %1132 = vmatprep.subr.bf16.mxu0 0
    %1133 = vmatpush1.bf16.msra.mxu0 0
    %1134 = vmatprep.subr.bf16.mxu0 0
    %1135 = vmatpush1.bf16.msra.mxu0 0
    %1136 = vmatprep.subr.bf16.mxu0 0
    %1137 = vmatpush1.bf16.msra.mxu0 0
    %1138 = vmatprep.subr.bf16.mxu0 0
    %1139 = vmatpush1.bf16.msra.mxu0 0
    %1140 = vmatprep.subr.bf16.mxu0 0
    %1141 = vmatpush1.bf16.msra.mxu0 %v771
    %1142 = vmatprep.subr.bf16.mxu0 0
    %1143 = vmatpush1.bf16.msra.mxu0 %v770
    %1144 = vmatprep.subr.bf16.mxu0 0
    %1145 = vmatpush2.bf16.msra.mxu0 0
    %1146 = vmatprep.subr.bf16.mxu0 0
    %1147 = vmatpush2.bf16.msra.mxu0 0
    %1148 = vmatprep.subr.bf16.mxu0 0
    %1149 = vmatpush2.bf16.msra.mxu0 0
    %1150 = vmatprep.subr.bf16.mxu0 0
    %1151 = vmatpush2.bf16.msra.mxu0 0
    %1152 = vmatprep.subr.bf16.mxu0 0
    %1153 = vmatpush2.bf16.msra.mxu0 0
    %1154 = vmatprep.subr.bf16.mxu0 0
    %1155 = vmatpush2.bf16.msra.mxu0 0
    %1156 = vmatprep.subr.bf16.mxu0 0
    %1157 = vmatpush2.bf16.msra.mxu0 0
    %1158 = vmatprep.subr.bf16.mxu0 0
    %1159 = vmatpush2.bf16.msra.mxu0 0
    %1160 = vmatprep.mubr.bf16.mxu0 0
    %1161 = vmatmul.mubr.bf16.gmra.mxu0 %v1126
    %v1162 = vpop.f32.mrf.mxu0
    %v1163 = vadd.f32 0.0, %v1162
    %v1164 = vpop.f32.mrf.mxu0
    %v1165 = vpop.f32.mrf.mxu0
    %v1166 = vpop.f32.mrf.mxu0
    %1167 = vdwg.mxu0
    %v1168 = vld [vmem:[#allocation2 + $0xa] sm:$0x3]
    %v1169 = vadd.f32 %v1168, %v1163
    %v1170 = vmul.f32 %v1169, %v741
    %v1171 = vtanh.pop %v1170
    %v1172 = vmul.f32 %v1171, %v741
    %v1173 = vadd.f32 %v1172, %v742
    %v1174 = vmul.f32 %v1173, %v1114
    %1176 = vrot.lane.b32.xlu0 %v1173, 64
    %v1177 = vpop.permute.xlu0 %1176
    %v1179 = vmul.f32 %v1173, %v1177
    %1181 = vrot.lane.b32.xlu0 %v1179, 32
    %v1182 = vpop.permute.xlu0 %1181
    %v1184 = vadd.f32 %v1174, %v1182
    %v1185 = vtanh.pop %v1184
    %1187 = vrot.lane.b32.xlu0 %v1185, 64
    %v1188 = vpop.permute.xlu0 %1187
    %v1190 = vmul.f32 %v1173, %v1188
    %v1191 = vpack.c.bf16 %v1190, %v1190
    %1193 = vrot.lane.b32.xlu0 %v1191, 32
    %v1194 = vpop.permute.xlu0 %1193
    %v1196 = vsel %vm774, %v1194, 0
    %1198 = vmatprep.subr.bf16.mxu0 0
    %1199 = vmatpush1.bf16.msra.mxu0 0
    %1200 = vmatprep.subr.bf16.mxu0 0
    %1201 = vmatpush1.bf16.msra.mxu0 0
    %1202 = vmatprep.subr.bf16.mxu0 0
    %1203 = vmatpush1.bf16.msra.mxu0 0
    %1204 = vmatprep.subr.bf16.mxu0 0
    %1205 = vmatpush1.bf16.msra.mxu0 0
    %1206 = vmatprep.subr.bf16.mxu0 0
    %1207 = vmatpush1.bf16.msra.mxu0 0
    %1208 = vmatprep.subr.bf16.mxu0 0
    %1209 = vmatpush1.bf16.msra.mxu0 0
    %1210 = vmatprep.subr.bf16.mxu0 0
    %1211 = vmatpush1.bf16.msra.mxu0 %v771
    %1212 = vmatprep.subr.bf16.mxu0 0
    %1213 = vmatpush1.bf16.msra.mxu0 %v770
    %1214 = vmatprep.subr.bf16.mxu0 0
    %1215 = vmatpush2.bf16.msra.mxu0 0
    %1216 = vmatprep.subr.bf16.mxu0 0
    %1217 = vmatpush2.bf16.msra.mxu0 0
    %1218 = vmatprep.subr.bf16.mxu0 0
    %1219 = vmatpush2.bf16.msra.mxu0 0
    %1220 = vmatprep.subr.bf16.mxu0 0
    %1221 = vmatpush2.bf16.msra.mxu0 0
    %1222 = vmatprep.subr.bf16.mxu0 0
    %1223 = vmatpush2.bf16.msra.mxu0 0
    %1224 = vmatprep.subr.bf16.mxu0 0
    %1225 = vmatpush2.bf16.msra.mxu0 0
    %1226 = vmatprep.subr.bf16.mxu0 0
    %1227 = vmatpush2.bf16.msra.mxu0 0
    %1228 = vmatprep.subr.bf16.mxu0 0
    %1229 = vmatpush2.bf16.msra.mxu0 0
    %1230 = vmatprep.mubr.bf16.mxu0 0
    %1231 = vmatmul.mubr.bf16.gmra.mxu0 %v1196
    %v1232 = vpop.f32.mrf.mxu0
    %v1233 = vadd.f32 0.0, %v1232
    %v1234 = vpop.f32.mrf.mxu0
    %v1235 = vpop.f32.mrf.mxu0
    %v1236 = vpop.f32.mrf.mxu0
    %1237 = vdwg.mxu0
    %v1238 = vld [vmem:[#allocation2 + $0xc] sm:$0x3]
    %v1239 = vadd.f32 %v1238, %v1233
    %v1240 = vmul.f32 %v1239, %v741
    %v1241 = vtanh.pop %v1240
    %v1242 = vmul.f32 %v1241, %v741
    %v1243 = vadd.f32 %v1242, %v742
    %v1244 = vmul.f32 %v1243, %v1184
    %1246 = vrot.lane.b32.xlu0 %v1243, 64
    %v1247 = vpop.permute.xlu0 %1246
    %v1249 = vmul.f32 %v1243, %v1247
    %1251 = vrot.lane.b32.xlu0 %v1249, 32
    %v1252 = vpop.permute.xlu0 %1251
    %v1254 = vadd.f32 %v1244, %v1252
    %v1255 = vtanh.pop %v1254
    %1257 = vrot.lane.b32.xlu0 %v1255, 64
    %v1258 = vpop.permute.xlu0 %1257
    %v1260 = vmul.f32 %v1243, %v1258
    %v1261 = vpack.c.bf16 %v1260, %v1260
    %1263 = vrot.lane.b32.xlu0 %v1261, 32
    %v1264 = vpop.permute.xlu0 %1263
    %v1266 = vsel %vm774, %v1264, 0
    %1268 = vmatprep.subr.bf16.mxu0 0
    %1269 = vmatpush1.bf16.msra.mxu0 0
    %1270 = vmatprep.subr.bf16.mxu0 0
    %1271 = vmatpush1.bf16.msra.mxu0 0
    %1272 = vmatprep.subr.bf16.mxu0 0
    %1273 = vmatpush1.bf16.msra.mxu0 0
    %1274 = vmatprep.subr.bf16.mxu0 0
    %1275 = vmatpush1.bf16.msra.mxu0 0
    %1276 = vmatprep.subr.bf16.mxu0 0
    %1277 = vmatpush1.bf16.msra.mxu0 0
    %1278 = vmatprep.subr.bf16.mxu0 0
    %1279 = vmatpush1.bf16.msra.mxu0 0
    %1280 = vmatprep.subr.bf16.mxu0 0
    %1281 = vmatpush1.bf16.msra.mxu0 %v771
    %1282 = vmatprep.subr.bf16.mxu0 0
    %1283 = vmatpush1.bf16.msra.mxu0 %v770
    %1284 = vmatprep.subr.bf16.mxu0 0
    %1285 = vmatpush2.bf16.msra.mxu0 0
    %1286 = vmatprep.subr.bf16.mxu0 0
    %1287 = vmatpush2.bf16.msra.mxu0 0
    %1288 = vmatprep.subr.bf16.mxu0 0
    %1289 = vmatpush2.bf16.msra.mxu0 0
    %1290 = vmatprep.subr.bf16.mxu0 0
    %1291 = vmatpush2.bf16.msra.mxu0 0
    %1292 = vmatprep.subr.bf16.mxu0 0
    %1293 = vmatpush2.bf16.msra.mxu0 0
    %1294 = vmatprep.subr.bf16.mxu0 0
    %1295 = vmatpush2.bf16.msra.mxu0 0
    %1296 = vmatprep.subr.bf16.mxu0 0
    %1297 = vmatpush2.bf16.msra.mxu0 0
    %1298 = vmatprep.subr.bf16.mxu0 0
    %1299 = vmatpush2.bf16.msra.mxu0 0
    %1300 = vmatprep.mubr.bf16.mxu0 0
    %1301 = vmatmul.mubr.bf16.gmra.mxu0 %v1266
    %v1302 = vpop.f32.mrf.mxu0
    %v1303 = vadd.f32 0.0, %v1302
    %v1304 = vpop.f32.mrf.mxu0
    %v1305 = vpop.f32.mrf.mxu0
    %v1306 = vpop.f32.mrf.mxu0
    %1307 = vdwg.mxu0
    %v1308 = vld [vmem:[#allocation2 + $0xe] sm:$0x3]
    %v1309 = vadd.f32 %v1308, %v1303
    %v1310 = vmul.f32 %v1309, %v741
    %v1311 = vtanh.pop %v1310
    %v1312 = vmul.f32 %v1311, %v741
    %v1313 = vadd.f32 %v1312, %v742
    %v1314 = vmul.f32 %v1313, %v1254
    %1316 = vrot.lane.b32.xlu0 %v1313, 64
    %v1317 = vpop.permute.xlu0 %1316
    %v1319 = vmul.f32 %v1313, %v1317
    %1321 = vrot.lane.b32.xlu0 %v1319, 32
    %v1322 = vpop.permute.xlu0 %1321
    %v1324 = vadd.f32 %v1314, %v1322
    %v1325 = vtanh.pop %v1324
    %1327 = vrot.lane.b32.xlu0 %v1325, 64
    %v1328 = vpop.permute.xlu0 %1327
    %v1330 = vmul.f32 %v1313, %v1328
    %v1331 = vpack.c.bf16 %v1330, %v1330
    %1333 = vrot.lane.b32.xlu0 %v1331, 32
    %v1334 = vpop.permute.xlu0 %1333
    %v1336 = vsel %vm774, %v1334, 0
    %1338 = vmatprep.subr.bf16.mxu0 0
    %1339 = vmatpush1.bf16.msra.mxu0 0
    %1340 = vmatprep.subr.bf16.mxu0 0
    %1341 = vmatpush1.bf16.msra.mxu0 0
    %1342 = vmatprep.subr.bf16.mxu0 0
    %1343 = vmatpush1.bf16.msra.mxu0 0
    %1344 = vmatprep.subr.bf16.mxu0 0
    %1345 = vmatpush1.bf16.msra.mxu0 0
    %1346 = vmatprep.subr.bf16.mxu0 0
    %1347 = vmatpush1.bf16.msra.mxu0 0
    %1348 = vmatprep.subr.bf16.mxu0 0
    %1349 = vmatpush1.bf16.msra.mxu0 0
    %1350 = vmatprep.subr.bf16.mxu0 0
    %1351 = vmatpush1.bf16.msra.mxu0 %v771
    %1352 = vmatprep.subr.bf16.mxu0 0
    %1353 = vmatpush1.bf16.msra.mxu0 %v770
    %1354 = vmatprep.subr.bf16.mxu0 0
    %1355 = vmatpush2.bf16.msra.mxu0 0
    %1356 = vmatprep.subr.bf16.mxu0 0
    %1357 = vmatpush2.bf16.msra.mxu0 0
    %1358 = vmatprep.subr.bf16.mxu0 0
    %1359 = vmatpush2.bf16.msra.mxu0 0
    %1360 = vmatprep.subr.bf16.mxu0 0
    %1361 = vmatpush2.bf16.msra.mxu0 0
    %1362 = vmatprep.subr.bf16.mxu0 0
    %1363 = vmatpush2.bf16.msra.mxu0 0
    %1364 = vmatprep.subr.bf16.mxu0 0
    %1365 = vmatpush2.bf16.msra.mxu0 0
    %1366 = vmatprep.subr.bf16.mxu0 0
    %1367 = vmatpush2.bf16.msra.mxu0 0
    %1368 = vmatprep.subr.bf16.mxu0 0
    %1369 = vmatpush2.bf16.msra.mxu0 0
    %1370 = vmatprep.mubr.bf16.mxu0 0
    %1371 = vmatmul.mubr.bf16.gmra.mxu0 %v1336
    %v1372 = vpop.f32.mrf.mxu0
    %v1373 = vadd.f32 0.0, %v1372
    %v1374 = vpop.f32.mrf.mxu0
    %v1375 = vpop.f32.mrf.mxu0
    %v1376 = vpop.f32.mrf.mxu0
    %1377 = vdwg.mxu0
    %v1378 = vld [vmem:[#allocation2 + $0x10] sm:$0x3]
    %v1379 = vadd.f32 %v1378, %v1373
    %v1380 = vmul.f32 %v1379, %v741
    %v1381 = vtanh.pop %v1380
    %v1382 = vmul.f32 %v1381, %v741
    %v1383 = vadd.f32 %v1382, %v742
    %v1384 = vmul.f32 %v1383, %v1324
    %1386 = vrot.lane.b32.xlu0 %v1383, 64
    %v1387 = vpop.permute.xlu0 %1386
    %v1389 = vmul.f32 %v1383, %v1387
    %1391 = vrot.lane.b32.xlu0 %v1389, 32
    %v1392 = vpop.permute.xlu0 %1391
    %v1394 = vadd.f32 %v1384, %v1392
    %v1395 = vtanh.pop %v1394
    %1397 = vrot.lane.b32.xlu0 %v1395, 64
    %v1398 = vpop.permute.xlu0 %1397
    %v1400 = vmul.f32 %v1383, %v1398
    %v1401 = vpack.c.bf16 %v1400, %v1400
    %1403 = vrot.lane.b32.xlu0 %v1401, 32
    %v1404 = vpop.permute.xlu0 %1403
    %v1406 = vsel %vm774, %v1404, 0
    %1408 = vmatprep.subr.bf16.mxu0 0
    %1409 = vmatpush1.bf16.msra.mxu0 0
    %1410 = vmatprep.subr.bf16.mxu0 0
    %1411 = vmatpush1.bf16.msra.mxu0 0
    %1412 = vmatprep.subr.bf16.mxu0 0
    %1413 = vmatpush1.bf16.msra.mxu0 0
    %1414 = vmatprep.subr.bf16.mxu0 0
    %1415 = vmatpush1.bf16.msra.mxu0 0
    %1416 = vmatprep.subr.bf16.mxu0 0
    %1417 = vmatpush1.bf16.msra.mxu0 0
    %1418 = vmatprep.subr.bf16.mxu0 0
    %1419 = vmatpush1.bf16.msra.mxu0 0
    %1420 = vmatprep.subr.bf16.mxu0 0
    %1421 = vmatpush1.bf16.msra.mxu0 %v771
    %1422 = vmatprep.subr.bf16.mxu0 0
    %1423 = vmatpush1.bf16.msra.mxu0 %v770
    %1424 = vmatprep.subr.bf16.mxu0 0
    %1425 = vmatpush2.bf16.msra.mxu0 0
    %1426 = vmatprep.subr.bf16.mxu0 0
    %1427 = vmatpush2.bf16.msra.mxu0 0
    %1428 = vmatprep.subr.bf16.mxu0 0
    %1429 = vmatpush2.bf16.msra.mxu0 0
    %1430 = vmatprep.subr.bf16.mxu0 0
    %1431 = vmatpush2.bf16.msra.mxu0 0
    %1432 = vmatprep.subr.bf16.mxu0 0
    %1433 = vmatpush2.bf16.msra.mxu0 0
    %1434 = vmatprep.subr.bf16.mxu0 0
    %1435 = vmatpush2.bf16.msra.mxu0 0
    %1436 = vmatprep.subr.bf16.mxu0 0
    %1437 = vmatpush2.bf16.msra.mxu0 0
    %1438 = vmatprep.subr.bf16.mxu0 0
    %1439 = vmatpush2.bf16.msra.mxu0 0
    %1440 = vmatprep.mubr.bf16.mxu0 0
    %1441 = vmatmul.mubr.bf16.gmra.mxu0 %v1406
    %v1442 = vpop.f32.mrf.mxu0
    %v1443 = vadd.f32 0.0, %v1442
    %v1444 = vpop.f32.mrf.mxu0
    %v1445 = vpop.f32.mrf.mxu0
    %v1446 = vpop.f32.mrf.mxu0
    %1447 = vdwg.mxu0
    %v1448 = vld [vmem:[#allocation2 + $0x12] sm:$0x3]
    %v1449 = vadd.f32 %v1448, %v1443
    %v1450 = vmul.f32 %v1449, %v741
    %v1451 = vtanh.pop %v1450
    %v1452 = vmul.f32 %v1451, %v741
    %v1453 = vadd.f32 %v1452, %v742
    %v1454 = vmul.f32 %v1453, %v1394
    %1456 = vrot.lane.b32.xlu0 %v1453, 64
    %v1457 = vpop.permute.xlu0 %1456
    %v1459 = vmul.f32 %v1453, %v1457
    %1461 = vrot.lane.b32.xlu0 %v1459, 32
    %v1462 = vpop.permute.xlu0 %1461
    %v1464 = vadd.f32 %v1454, %v1462
    %v1465 = vtanh.pop %v1464
    %1467 = vrot.lane.b32.xlu0 %v1465, 64
    %v1468 = vpop.permute.xlu0 %1467
    %v1470 = vmul.f32 %v1453, %v1468
    %v1471 = vpack.c.bf16 %v1470, %v1470
    %1473 = vrot.lane.b32.xlu0 %v1471, 32
    %v1474 = vpop.permute.xlu0 %1473
    %v1476 = vsel %vm774, %v1474, 0
    %1478 = vmatprep.subr.bf16.mxu0 0
    %1479 = vmatpush1.bf16.msra.mxu0 0
    %1480 = vmatprep.subr.bf16.mxu0 0
    %1481 = vmatpush1.bf16.msra.mxu0 0
    %1482 = vmatprep.subr.bf16.mxu0 0
    %1483 = vmatpush1.bf16.msra.mxu0 0
    %1484 = vmatprep.subr.bf16.mxu0 0
    %1485 = vmatpush1.bf16.msra.mxu0 0
    %1486 = vmatprep.subr.bf16.mxu0 0
    %1487 = vmatpush1.bf16.msra.mxu0 0
    %1488 = vmatprep.subr.bf16.mxu0 0
    %1489 = vmatpush1.bf16.msra.mxu0 0
    %1490 = vmatprep.subr.bf16.mxu0 0
    %1491 = vmatpush1.bf16.msra.mxu0 %v771
    %1492 = vmatprep.subr.bf16.mxu0 0
    %1493 = vmatpush1.bf16.msra.mxu0 %v770
    %1494 = vmatprep.subr.bf16.mxu0 0
    %1495 = vmatpush2.bf16.msra.mxu0 0
    %1496 = vmatprep.subr.bf16.mxu0 0
    %1497 = vmatpush2.bf16.msra.mxu0 0
    %1498 = vmatprep.subr.bf16.mxu0 0
    %1499 = vmatpush2.bf16.msra.mxu0 0
    %1500 = vmatprep.subr.bf16.mxu0 0
    %1501 = vmatpush2.bf16.msra.mxu0 0
    %1502 = vmatprep.subr.bf16.mxu0 0
    %1503 = vmatpush2.bf16.msra.mxu0 0
    %1504 = vmatprep.subr.bf16.mxu0 0
    %1505 = vmatpush2.bf16.msra.mxu0 0
    %1506 = vmatprep.subr.bf16.mxu0 0
    %1507 = vmatpush2.bf16.msra.mxu0 0
    %1508 = vmatprep.subr.bf16.mxu0 0
    %1509 = vmatpush2.bf16.msra.mxu0 0
    %1510 = vmatprep.mubr.bf16.mxu0 0
    %1511 = vmatmul.mubr.bf16.gmra.mxu0 %v1476
    %v1512 = vpop.f32.mrf.mxu0
    %v1513 = vadd.f32 0.0, %v1512
    %v1514 = vpop.f32.mrf.mxu0
    %v1515 = vpop.f32.mrf.mxu0
    %v1516 = vpop.f32.mrf.mxu0
    %1517 = vdwg.mxu0
    %v1518 = vld [vmem:[#allocation2 + $0x14] sm:$0x3]
    %v1519 = vadd.f32 %v1518, %v1513
    %v1520 = vmul.f32 %v1519, %v741
    %v1521 = vtanh.pop %v1520
    %v1522 = vmul.f32 %v1521, %v741
    %v1523 = vadd.f32 %v1522, %v742
    %v1524 = vmul.f32 %v1523, %v1464
    %1526 = vrot.lane.b32.xlu0 %v1523, 64
    %v1527 = vpop.permute.xlu0 %1526
    %v1529 = vmul.f32 %v1523, %v1527
    %1531 = vrot.lane.b32.xlu0 %v1529, 32
    %v1532 = vpop.permute.xlu0 %1531
    %v1534 = vadd.f32 %v1524, %v1532
    %v1535 = vtanh.pop %v1534
    %1537 = vrot.lane.b32.xlu0 %v1535, 64
    %v1538 = vpop.permute.xlu0 %1537
    %v1540 = vmul.f32 %v1523, %v1538
    %v1541 = vpack.c.bf16 %v1540, %v1540
    %1543 = vrot.lane.b32.xlu0 %v1541, 32
    %v1544 = vpop.permute.xlu0 %1543
    %v1546 = vsel %vm774, %v1544, 0
    %1548 = vmatprep.subr.bf16.mxu0 0
    %1549 = vmatpush1.bf16.msra.mxu0 0
    %1550 = vmatprep.subr.bf16.mxu0 0
    %1551 = vmatpush1.bf16.msra.mxu0 0
    %1552 = vmatprep.subr.bf16.mxu0 0
    %1553 = vmatpush1.bf16.msra.mxu0 0
    %1554 = vmatprep.subr.bf16.mxu0 0
    %1555 = vmatpush1.bf16.msra.mxu0 0
    %1556 = vmatprep.subr.bf16.mxu0 0
    %1557 = vmatpush1.bf16.msra.mxu0 0
    %1558 = vmatprep.subr.bf16.mxu0 0
    %1559 = vmatpush1.bf16.msra.mxu0 0
    %1560 = vmatprep.subr.bf16.mxu0 0
    %1561 = vmatpush1.bf16.msra.mxu0 %v771
    %1562 = vmatprep.subr.bf16.mxu0 0
    %1563 = vmatpush1.bf16.msra.mxu0 %v770
    %1564 = vmatprep.subr.bf16.mxu0 0
    %1565 = vmatpush2.bf16.msra.mxu0 0
    %1566 = vmatprep.subr.bf16.mxu0 0
    %1567 = vmatpush2.bf16.msra.mxu0 0
    %1568 = vmatprep.subr.bf16.mxu0 0
    %1569 = vmatpush2.bf16.msra.mxu0 0
    %1570 = vmatprep.subr.bf16.mxu0 0
    %1571 = vmatpush2.bf16.msra.mxu0 0
    %1572 = vmatprep.subr.bf16.mxu0 0
    %1573 = vmatpush2.bf16.msra.mxu0 0
    %1574 = vmatprep.subr.bf16.mxu0 0
    %1575 = vmatpush2.bf16.msra.mxu0 0
    %1576 = vmatprep.subr.bf16.mxu0 0
    %1577 = vmatpush2.bf16.msra.mxu0 0
    %1578 = vmatprep.subr.bf16.mxu0 0
    %1579 = vmatpush2.bf16.msra.mxu0 0
    %1580 = vmatprep.mubr.bf16.mxu0 0
    %1581 = vmatmul.mubr.bf16.gmra.mxu0 %v1546
    %v1582 = vpop.f32.mrf.mxu0
    %v1583 = vadd.f32 0.0, %v1582
    %v1584 = vpop.f32.mrf.mxu0
    %v1585 = vpop.f32.mrf.mxu0
    %v1586 = vpop.f32.mrf.mxu0
    %1587 = vdwg.mxu0
    %v1588 = vld [vmem:[#allocation2 + $0x16] sm:$0x3]
    %v1589 = vadd.f32 %v1588, %v1583
    %v1590 = vmul.f32 %v1589, %v741
    %v1591 = vtanh.pop %v1590
    %v1592 = vmul.f32 %v1591, %v741
    %v1593 = vadd.f32 %v1592, %v742
    %v1594 = vmul.f32 %v1593, %v1534
    %1596 = vrot.lane.b32.xlu0 %v1593, 64
    %v1597 = vpop.permute.xlu0 %1596
    %v1599 = vmul.f32 %v1593, %v1597
    %1601 = vrot.lane.b32.xlu0 %v1599, 32
    %v1602 = vpop.permute.xlu0 %1601
    %v1604 = vadd.f32 %v1594, %v1602
    %v1605 = vtanh.pop %v1604
    %1607 = vrot.lane.b32.xlu0 %v1605, 64
    %v1608 = vpop.permute.xlu0 %1607
    %v1610 = vmul.f32 %v1593, %v1608
    %v1611 = vpack.c.bf16 %v1610, %v1610
    %1613 = vrot.lane.b32.xlu0 %v1611, 32
    %v1614 = vpop.permute.xlu0 %1613
    %v1616 = vsel %vm774, %v1614, 0
    %1618 = vmatprep.subr.bf16.mxu0 0
    %1619 = vmatpush1.bf16.msra.mxu0 0
    %1620 = vmatprep.subr.bf16.mxu0 0
    %1621 = vmatpush1.bf16.msra.mxu0 0
    %1622 = vmatprep.subr.bf16.mxu0 0
    %1623 = vmatpush1.bf16.msra.mxu0 0
    %1624 = vmatprep.subr.bf16.mxu0 0
    %1625 = vmatpush1.bf16.msra.mxu0 0
    %1626 = vmatprep.subr.bf16.mxu0 0
    %1627 = vmatpush1.bf16.msra.mxu0 0
    %1628 = vmatprep.subr.bf16.mxu0 0
    %1629 = vmatpush1.bf16.msra.mxu0 0
    %1630 = vmatprep.subr.bf16.mxu0 0
    %1631 = vmatpush1.bf16.msra.mxu0 %v771
    %1632 = vmatprep.subr.bf16.mxu0 0
    %1633 = vmatpush1.bf16.msra.mxu0 %v770
    %1634 = vmatprep.subr.bf16.mxu0 0
    %1635 = vmatpush2.bf16.msra.mxu0 0
    %1636 = vmatprep.subr.bf16.mxu0 0
    %1637 = vmatpush2.bf16.msra.mxu0 0
    %1638 = vmatprep.subr.bf16.mxu0 0
    %1639 = vmatpush2.bf16.msra.mxu0 0
    %1640 = vmatprep.subr.bf16.mxu0 0
    %1641 = vmatpush2.bf16.msra.mxu0 0
    %1642 = vmatprep.subr.bf16.mxu0 0
    %1643 = vmatpush2.bf16.msra.mxu0 0
    %1644 = vmatprep.subr.bf16.mxu0 0
    %1645 = vmatpush2.bf16.msra.mxu0 0
    %1646 = vmatprep.subr.bf16.mxu0 0
    %1647 = vmatpush2.bf16.msra.mxu0 0
    %1648 = vmatprep.subr.bf16.mxu0 0
    %1649 = vmatpush2.bf16.msra.mxu0 0
    %1650 = vmatprep.mubr.bf16.mxu0 0
    %1651 = vmatmul.mubr.bf16.gmra.mxu0 %v1616
    %v1652 = vpop.f32.mrf.mxu0
    %v1653 = vadd.f32 0.0, %v1652
    %v1654 = vpop.f32.mrf.mxu0
    %v1655 = vpop.f32.mrf.mxu0
    %v1656 = vpop.f32.mrf.mxu0
    %1657 = vdwg.mxu0
    %v1658 = vld [vmem:[#allocation2 + $0x18] sm:$0x3]
    %v1659 = vadd.f32 %v1658, %v1653
    %v1660 = vmul.f32 %v1659, %v741
    %v1661 = vtanh.pop %v1660
    %v1662 = vmul.f32 %v1661, %v741
    %v1663 = vadd.f32 %v1662, %v742
    %v1664 = vmul.f32 %v1663, %v1604
    %1666 = vrot.lane.b32.xlu0 %v1663, 64
    %v1667 = vpop.permute.xlu0 %1666
    %v1669 = vmul.f32 %v1663, %v1667
    %1671 = vrot.lane.b32.xlu0 %v1669, 32
    %v1672 = vpop.permute.xlu0 %1671
    %v1674 = vadd.f32 %v1664, %v1672
    %v1675 = vtanh.pop %v1674
    %1677 = vrot.lane.b32.xlu0 %v1675, 64
    %v1678 = vpop.permute.xlu0 %1677
    %v1680 = vmul.f32 %v1663, %v1678
    %v1681 = vpack.c.bf16 %v1680, %v1680
    %1683 = vrot.lane.b32.xlu0 %v1681, 32
    %v1684 = vpop.permute.xlu0 %1683
    %v1686 = vsel %vm774, %v1684, 0
    %1688 = vmatprep.subr.bf16.mxu0 0
    %1689 = vmatpush1.bf16.msra.mxu0 0
    %1690 = vmatprep.subr.bf16.mxu0 0
    %1691 = vmatpush1.bf16.msra.mxu0 0
    %1692 = vmatprep.subr.bf16.mxu0 0
    %1693 = vmatpush1.bf16.msra.mxu0 0
    %1694 = vmatprep.subr.bf16.mxu0 0
    %1695 = vmatpush1.bf16.msra.mxu0 0
    %1696 = vmatprep.subr.bf16.mxu0 0
    %1697 = vmatpush1.bf16.msra.mxu0 0
    %1698 = vmatprep.subr.bf16.mxu0 0
    %1699 = vmatpush1.bf16.msra.mxu0 0
    %1700 = vmatprep.subr.bf16.mxu0 0
    %1701 = vmatpush1.bf16.msra.mxu0 %v771
    %1702 = vmatprep.subr.bf16.mxu0 0
    %1703 = vmatpush1.bf16.msra.mxu0 %v770
    %1704 = vmatprep.subr.bf16.mxu0 0
    %1705 = vmatpush2.bf16.msra.mxu0 0
    %1706 = vmatprep.subr.bf16.mxu0 0
    %1707 = vmatpush2.bf16.msra.mxu0 0
    %1708 = vmatprep.subr.bf16.mxu0 0
    %1709 = vmatpush2.bf16.msra.mxu0 0
    %1710 = vmatprep.subr.bf16.mxu0 0
    %1711 = vmatpush2.bf16.msra.mxu0 0
    %1712 = vmatprep.subr.bf16.mxu0 0
    %1713 = vmatpush2.bf16.msra.mxu0 0
    %1714 = vmatprep.subr.bf16.mxu0 0
    %1715 = vmatpush2.bf16.msra.mxu0 0
    %1716 = vmatprep.subr.bf16.mxu0 0
    %1717 = vmatpush2.bf16.msra.mxu0 0
    %1718 = vmatprep.subr.bf16.mxu0 0
    %1719 = vmatpush2.bf16.msra.mxu0 0
    %1720 = vmatprep.mubr.bf16.mxu0 0
    %1721 = vmatmul.mubr.bf16.gmra.mxu0 %v1686
    %v1722 = vpop.f32.mrf.mxu0
    %v1723 = vadd.f32 0.0, %v1722
    %v1724 = vpop.f32.mrf.mxu0
    %v1725 = vpop.f32.mrf.mxu0
    %v1726 = vpop.f32.mrf.mxu0
    %1727 = vdwg.mxu0
    %v1728 = vld [vmem:[#allocation2 + $0x1a] sm:$0x3]
    %v1729 = vadd.f32 %v1728, %v1723
    %v1730 = vmul.f32 %v1729, %v741
    %v1731 = vtanh.pop %v1730
    %v1732 = vmul.f32 %v1731, %v741
    %v1733 = vadd.f32 %v1732, %v742
    %v1734 = vmul.f32 %v1733, %v1674
    %1736 = vrot.lane.b32.xlu0 %v1733, 64
    %v1737 = vpop.permute.xlu0 %1736
    %v1739 = vmul.f32 %v1733, %v1737
    %1741 = vrot.lane.b32.xlu0 %v1739, 32
    %v1742 = vpop.permute.xlu0 %1741
    %v1744 = vadd.f32 %v1734, %v1742
    %v1745 = vtanh.pop %v1744
    %1747 = vrot.lane.b32.xlu0 %v1745, 64
    %v1748 = vpop.permute.xlu0 %1747
    %v1750 = vmul.f32 %v1733, %v1748
    %v1751 = vpack.c.bf16 %v1750, %v1750
    %1753 = vrot.lane.b32.xlu0 %v1751, 32
    %v1754 = vpop.permute.xlu0 %1753
    %v1756 = vsel %vm774, %v1754, 0
    %1758 = vmatprep.subr.bf16.mxu0 0
    %1759 = vmatpush1.bf16.msra.mxu0 0
    %1760 = vmatprep.subr.bf16.mxu0 0
    %1761 = vmatpush1.bf16.msra.mxu0 0
    %1762 = vmatprep.subr.bf16.mxu0 0
    %1763 = vmatpush1.bf16.msra.mxu0 0
    %1764 = vmatprep.subr.bf16.mxu0 0
    %1765 = vmatpush1.bf16.msra.mxu0 0
    %1766 = vmatprep.subr.bf16.mxu0 0
    %1767 = vmatpush1.bf16.msra.mxu0 0
    %1768 = vmatprep.subr.bf16.mxu0 0
    %1769 = vmatpush1.bf16.msra.mxu0 0
    %1770 = vmatprep.subr.bf16.mxu0 0
    %1771 = vmatpush1.bf16.msra.mxu0 %v771
    %1772 = vmatprep.subr.bf16.mxu0 0
    %1773 = vmatpush1.bf16.msra.mxu0 %v770
    %1774 = vmatprep.subr.bf16.mxu0 0
    %1775 = vmatpush2.bf16.msra.mxu0 0
    %1776 = vmatprep.subr.bf16.mxu0 0
    %1777 = vmatpush2.bf16.msra.mxu0 0
    %1778 = vmatprep.subr.bf16.mxu0 0
    %1779 = vmatpush2.bf16.msra.mxu0 0
    %1780 = vmatprep.subr.bf16.mxu0 0
    %1781 = vmatpush2.bf16.msra.mxu0 0
    %1782 = vmatprep.subr.bf16.mxu0 0
    %1783 = vmatpush2.bf16.msra.mxu0 0
    %1784 = vmatprep.subr.bf16.mxu0 0
    %1785 = vmatpush2.bf16.msra.mxu0 0
    %1786 = vmatprep.subr.bf16.mxu0 0
    %1787 = vmatpush2.bf16.msra.mxu0 0
    %1788 = vmatprep.subr.bf16.mxu0 0
    %1789 = vmatpush2.bf16.msra.mxu0 0
    %1790 = vmatprep.mubr.bf16.mxu0 0
    %1791 = vmatmul.mubr.bf16.gmra.mxu0 %v1756
    %v1792 = vpop.f32.mrf.mxu0
    %v1793 = vadd.f32 0.0, %v1792
    %v1794 = vpop.f32.mrf.mxu0
    %v1795 = vpop.f32.mrf.mxu0
    %v1796 = vpop.f32.mrf.mxu0
    %1797 = vdwg.mxu0
    %v1798 = vld [vmem:[#allocation2 + $0x1c] sm:$0x3]
    %v1799 = vadd.f32 %v1798, %v1793
    %v1800 = vmul.f32 %v1799, %v741
    %v1801 = vtanh.pop %v1800
    %v1802 = vmul.f32 %v1801, %v741
    %v1803 = vadd.f32 %v1802, %v742
    %v1804 = vmul.f32 %v1803, %v1744
    %1806 = vrot.lane.b32.xlu0 %v1803, 64
    %v1807 = vpop.permute.xlu0 %1806
    %v1809 = vmul.f32 %v1803, %v1807
    %1811 = vrot.lane.b32.xlu0 %v1809, 32
    %v1812 = vpop.permute.xlu0 %1811
    %v1814 = vadd.f32 %v1804, %v1812
    %v1815 = vtanh.pop %v1814
    %1817 = vrot.lane.b32.xlu0 %v1815, 64
    %v1818 = vpop.permute.xlu0 %1817
    %v1820 = vmul.f32 %v1803, %v1818
    %v1821 = vpack.c.bf16 %v1820, %v1820
    %1823 = vrot.lane.b32.xlu0 %v1821, 32
    %v1824 = vpop.permute.xlu0 %1823
    %v1826 = vsel %vm774, %v1824, 0
    %1828 = vmatprep.subr.bf16.mxu0 0
    %1829 = vmatpush1.bf16.msra.mxu0 0
    %1830 = vmatprep.subr.bf16.mxu0 0
    %1831 = vmatpush1.bf16.msra.mxu0 0
    %1832 = vmatprep.subr.bf16.mxu0 0
    %1833 = vmatpush1.bf16.msra.mxu0 0
    %1834 = vmatprep.subr.bf16.mxu0 0
    %1835 = vmatpush1.bf16.msra.mxu0 0
    %1836 = vmatprep.subr.bf16.mxu0 0
    %1837 = vmatpush1.bf16.msra.mxu0 0
    %1838 = vmatprep.subr.bf16.mxu0 0
    %1839 = vmatpush1.bf16.msra.mxu0 0
    %1840 = vmatprep.subr.bf16.mxu0 0
    %1841 = vmatpush1.bf16.msra.mxu0 %v771
    %1842 = vmatprep.subr.bf16.mxu0 0
    %1843 = vmatpush1.bf16.msra.mxu0 %v770
    %1844 = vmatprep.subr.bf16.mxu0 0
    %1845 = vmatpush2.bf16.msra.mxu0 0
    %1846 = vmatprep.subr.bf16.mxu0 0
    %1847 = vmatpush2.bf16.msra.mxu0 0
    %1848 = vmatprep.subr.bf16.mxu0 0
    %1849 = vmatpush2.bf16.msra.mxu0 0
    %1850 = vmatprep.subr.bf16.mxu0 0
    %1851 = vmatpush2.bf16.msra.mxu0 0
    %1852 = vmatprep.subr.bf16.mxu0 0
    %1853 = vmatpush2.bf16.msra.mxu0 0
    %1854 = vmatprep.subr.bf16.mxu0 0
    %1855 = vmatpush2.bf16.msra.mxu0 0
    %1856 = vmatprep.subr.bf16.mxu0 0
    %1857 = vmatpush2.bf16.msra.mxu0 0
    %1858 = vmatprep.subr.bf16.mxu0 0
    %1859 = vmatpush2.bf16.msra.mxu0 0
    %1860 = vmatprep.mubr.bf16.mxu0 0
    %1861 = vmatmul.mubr.bf16.gmra.mxu0 %v1826
    %v1862 = vpop.f32.mrf.mxu0
    %v1863 = vadd.f32 0.0, %v1862
    %v1864 = vpop.f32.mrf.mxu0
    %v1865 = vpop.f32.mrf.mxu0
    %v1866 = vpop.f32.mrf.mxu0
    %1867 = vdwg.mxu0
    %v1868 = vld [vmem:[#allocation2 + $0x1e] sm:$0x3]
    %v1869 = vadd.f32 %v1868, %v1863
    %v1870 = vmul.f32 %v1869, %v741
    %v1871 = vtanh.pop %v1870
    %v1872 = vmul.f32 %v1871, %v741
    %v1873 = vadd.f32 %v1872, %v742
    %v1874 = vmul.f32 %v1873, %v1814
    %1876 = vrot.lane.b32.xlu0 %v1873, 64
    %v1877 = vpop.permute.xlu0 %1876
    %v1879 = vmul.f32 %v1873, %v1877
    %1881 = vrot.lane.b32.xlu0 %v1879, 32
    %v1882 = vpop.permute.xlu0 %1881
    %v1884 = vadd.f32 %v1874, %v1882
    %v1885 = vtanh.pop %v1884
    %1887 = vrot.lane.b32.xlu0 %v1885, 64
    %v1888 = vpop.permute.xlu0 %1887
    %v1890 = vmul.f32 %v1873, %v1888
    %v1891 = vpack.c.bf16 %v1890, %v1890
    %1893 = vrot.lane.b32.xlu0 %v1891, 32
    %v1894 = vpop.permute.xlu0 %1893
    %v1896 = vsel %vm774, %v1894, 0
    %1898 = vmatprep.subr.bf16.mxu0 0
    %1899 = vmatpush1.bf16.msra.mxu0 0
    %1900 = vmatprep.subr.bf16.mxu0 0
    %1901 = vmatpush1.bf16.msra.mxu0 0
    %1902 = vmatprep.subr.bf16.mxu0 0
    %1903 = vmatpush1.bf16.msra.mxu0 0
    %1904 = vmatprep.subr.bf16.mxu0 0
    %1905 = vmatpush1.bf16.msra.mxu0 0
    %1906 = vmatprep.subr.bf16.mxu0 0
    %1907 = vmatpush1.bf16.msra.mxu0 0
    %1908 = vmatprep.subr.bf16.mxu0 0
    %1909 = vmatpush1.bf16.msra.mxu0 0
    %1910 = vmatprep.subr.bf16.mxu0 0
    %1911 = vmatpush1.bf16.msra.mxu0 %v771
    %1912 = vmatprep.subr.bf16.mxu0 0
    %1913 = vmatpush1.bf16.msra.mxu0 %v770
    %1914 = vmatprep.subr.bf16.mxu0 0
    %1915 = vmatpush2.bf16.msra.mxu0 0
    %1916 = vmatprep.subr.bf16.mxu0 0
    %1917 = vmatpush2.bf16.msra.mxu0 0
    %1918 = vmatprep.subr.bf16.mxu0 0
    %1919 = vmatpush2.bf16.msra.mxu0 0
    %1920 = vmatprep.subr.bf16.mxu0 0
    %1921 = vmatpush2.bf16.msra.mxu0 0
    %1922 = vmatprep.subr.bf16.mxu0 0
    %1923 = vmatpush2.bf16.msra.mxu0 0
    %1924 = vmatprep.subr.bf16.mxu0 0
    %1925 = vmatpush2.bf16.msra.mxu0 0
    %1926 = vmatprep.subr.bf16.mxu0 0
    %1927 = vmatpush2.bf16.msra.mxu0 0
    %1928 = vmatprep.subr.bf16.mxu0 0
    %1929 = vmatpush2.bf16.msra.mxu0 0
    %1930 = vmatprep.mubr.bf16.mxu0 0
    %1931 = vmatmul.mubr.bf16.gmra.mxu0 %v1896
    %v1932 = vpop.f32.mrf.mxu0
    %v1933 = vadd.f32 0.0, %v1932
    %v1934 = vpop.f32.mrf.mxu0
    %v1935 = vpop.f32.mrf.mxu0
    %v1936 = vpop.f32.mrf.mxu0
    %1937 = vdwg.mxu0
    %v1938 = vld [vmem:[#allocation2 + $0x20] sm:$0x3]
    %v1939 = vadd.f32 %v1938, %v1933
    %v1940 = vmul.f32 %v1939, %v741
    %v1941 = vtanh.pop %v1940
    %v1942 = vmul.f32 %v1941, %v741
    %v1943 = vadd.f32 %v1942, %v742
    %v1944 = vmul.f32 %v1943, %v1884
    %1946 = vrot.lane.b32.xlu0 %v1943, 64
    %v1947 = vpop.permute.xlu0 %1946
    %v1949 = vmul.f32 %v1943, %v1947
    %1951 = vrot.lane.b32.xlu0 %v1949, 32
    %v1952 = vpop.permute.xlu0 %1951
    %v1954 = vadd.f32 %v1944, %v1952
    %v1955 = vtanh.pop %v1954
    %1957 = vrot.lane.b32.xlu0 %v1955, 64
    %v1958 = vpop.permute.xlu0 %1957
    %v1960 = vmul.f32 %v1943, %v1958
    %v1961 = vpack.c.bf16 %v1960, %v1960
    %1963 = vrot.lane.b32.xlu0 %v1961, 32
    %v1964 = vpop.permute.xlu0 %1963
    %v1966 = vsel %vm774, %v1964, 0
    %1968 = vmatprep.subr.bf16.mxu0 0
    %1969 = vmatpush1.bf16.msra.mxu0 0
    %1970 = vmatprep.subr.bf16.mxu0 0
    %1971 = vmatpush1.bf16.msra.mxu0 0
    %1972 = vmatprep.subr.bf16.mxu0 0
    %1973 = vmatpush1.bf16.msra.mxu0 0
    %1974 = vmatprep.subr.bf16.mxu0 0
    %1975 = vmatpush1.bf16.msra.mxu0 0
    %1976 = vmatprep.subr.bf16.mxu0 0
    %1977 = vmatpush1.bf16.msra.mxu0 0
    %1978 = vmatprep.subr.bf16.mxu0 0
    %1979 = vmatpush1.bf16.msra.mxu0 0
    %1980 = vmatprep.subr.bf16.mxu0 0
    %1981 = vmatpush1.bf16.msra.mxu0 %v771
    %1982 = vmatprep.subr.bf16.mxu0 0
    %1983 = vmatpush1.bf16.msra.mxu0 %v770
    %1984 = vmatprep.subr.bf16.mxu0 0
    %1985 = vmatpush2.bf16.msra.mxu0 0
    %1986 = vmatprep.subr.bf16.mxu0 0
    %1987 = vmatpush2.bf16.msra.mxu0 0
    %1988 = vmatprep.subr.bf16.mxu0 0
    %1989 = vmatpush2.bf16.msra.mxu0 0
    %1990 = vmatprep.subr.bf16.mxu0 0
    %1991 = vmatpush2.bf16.msra.mxu0 0
    %1992 = vmatprep.subr.bf16.mxu0 0
    %1993 = vmatpush2.bf16.msra.mxu0 0
    %1994 = vmatprep.subr.bf16.mxu0 0
    %1995 = vmatpush2.bf16.msra.mxu0 0
    %1996 = vmatprep.subr.bf16.mxu0 0
    %1997 = vmatpush2.bf16.msra.mxu0 0
    %1998 = vmatprep.subr.bf16.mxu0 0
    %1999 = vmatpush2.bf16.msra.mxu0 0
    %2000 = vmatprep.mubr.bf16.mxu0 0
    %2001 = vmatmul.mubr.bf16.gmra.mxu0 %v1966
    %v2002 = vpop.f32.mrf.mxu0
    %v2003 = vadd.f32 0.0, %v2002
    %v2004 = vpop.f32.mrf.mxu0
    %v2005 = vpop.f32.mrf.mxu0
    %v2006 = vpop.f32.mrf.mxu0
    %2007 = vdwg.mxu0
    %v2008 = vld [vmem:[#allocation2 + $0x22] sm:$0x3]
    %v2009 = vadd.f32 %v2008, %v2003
    %v2010 = vmul.f32 %v2009, %v741
    %v2011 = vtanh.pop %v2010
    %v2012 = vmul.f32 %v2011, %v741
    %v2013 = vadd.f32 %v2012, %v742
    %v2014 = vmul.f32 %v2013, %v1954
    %2016 = vrot.lane.b32.xlu0 %v2013, 64
    %v2017 = vpop.permute.xlu0 %2016
    %v2019 = vmul.f32 %v2013, %v2017
    %2021 = vrot.lane.b32.xlu0 %v2019, 32
    %v2022 = vpop.permute.xlu0 %2021
    %v2024 = vadd.f32 %v2014, %v2022
    %v2025 = vtanh.pop %v2024
    %2027 = vrot.lane.b32.xlu0 %v2025, 64
    %v2028 = vpop.permute.xlu0 %2027
    %v2030 = vmul.f32 %v2013, %v2028
    %v2031 = vpack.c.bf16 %v2030, %v2030
    %2033 = vrot.lane.b32.xlu0 %v2031, 32
    %v2034 = vpop.permute.xlu0 %2033
    %v2036 = vsel %vm774, %v2034, 0
    %2038 = vmatprep.subr.bf16.mxu0 0
    %2039 = vmatpush1.bf16.msra.mxu0 0
    %2040 = vmatprep.subr.bf16.mxu0 0
    %2041 = vmatpush1.bf16.msra.mxu0 0
    %2042 = vmatprep.subr.bf16.mxu0 0
    %2043 = vmatpush1.bf16.msra.mxu0 0
    %2044 = vmatprep.subr.bf16.mxu0 0
    %2045 = vmatpush1.bf16.msra.mxu0 0
    %2046 = vmatprep.subr.bf16.mxu0 0
    %2047 = vmatpush1.bf16.msra.mxu0 0
    %2048 = vmatprep.subr.bf16.mxu0 0
    %2049 = vmatpush1.bf16.msra.mxu0 0
    %2050 = vmatprep.subr.bf16.mxu0 0
    %2051 = vmatpush1.bf16.msra.mxu0 %v771
    %2052 = vmatprep.subr.bf16.mxu0 0
    %2053 = vmatpush1.bf16.msra.mxu0 %v770
    %2054 = vmatprep.subr.bf16.mxu0 0
    %2055 = vmatpush2.bf16.msra.mxu0 0
    %2056 = vmatprep.subr.bf16.mxu0 0
    %2057 = vmatpush2.bf16.msra.mxu0 0
    %2058 = vmatprep.subr.bf16.mxu0 0
    %2059 = vmatpush2.bf16.msra.mxu0 0
    %2060 = vmatprep.subr.bf16.mxu0 0
    %2061 = vmatpush2.bf16.msra.mxu0 0
    %2062 = vmatprep.subr.bf16.mxu0 0
    %2063 = vmatpush2.bf16.msra.mxu0 0
    %2064 = vmatprep.subr.bf16.mxu0 0
    %2065 = vmatpush2.bf16.msra.mxu0 0
    %2066 = vmatprep.subr.bf16.mxu0 0
    %2067 = vmatpush2.bf16.msra.mxu0 0
    %2068 = vmatprep.subr.bf16.mxu0 0
    %2069 = vmatpush2.bf16.msra.mxu0 0
    %2070 = vmatprep.mubr.bf16.mxu0 0
    %2071 = vmatmul.mubr.bf16.gmra.mxu0 %v2036
    %v2072 = vpop.f32.mrf.mxu0
    %v2073 = vadd.f32 0.0, %v2072
    %v2074 = vpop.f32.mrf.mxu0
    %v2075 = vpop.f32.mrf.mxu0
    %v2076 = vpop.f32.mrf.mxu0
    %2077 = vdwg.mxu0
    %v2078 = vld [vmem:[#allocation2 + $0x24] sm:$0x3]
    %v2079 = vadd.f32 %v2078, %v2073
    %v2080 = vmul.f32 %v2079, %v741
    %v2081 = vtanh.pop %v2080
    %v2082 = vmul.f32 %v2081, %v741
    %v2083 = vadd.f32 %v2082, %v742
    %v2084 = vmul.f32 %v2083, %v2024
    %2086 = vrot.lane.b32.xlu0 %v2083, 64
    %v2087 = vpop.permute.xlu0 %2086
    %v2089 = vmul.f32 %v2083, %v2087
    %2091 = vrot.lane.b32.xlu0 %v2089, 32
    %v2092 = vpop.permute.xlu0 %2091
    %v2094 = vadd.f32 %v2084, %v2092
    %v2095 = vtanh.pop %v2094
    %2097 = vrot.lane.b32.xlu0 %v2095, 64
    %v2098 = vpop.permute.xlu0 %2097
    %v2100 = vmul.f32 %v2083, %v2098
    %v2101 = vpack.c.bf16 %v2100, %v2100
    %2103 = vrot.lane.b32.xlu0 %v2101, 32
    %v2104 = vpop.permute.xlu0 %2103
    %v2106 = vsel %vm774, %v2104, 0
    %2108 = vmatprep.subr.bf16.mxu0 0
    %2109 = vmatpush1.bf16.msra.mxu0 0
    %2110 = vmatprep.subr.bf16.mxu0 0
    %2111 = vmatpush1.bf16.msra.mxu0 0
    %2112 = vmatprep.subr.bf16.mxu0 0
    %2113 = vmatpush1.bf16.msra.mxu0 0
    %2114 = vmatprep.subr.bf16.mxu0 0
    %2115 = vmatpush1.bf16.msra.mxu0 0
    %2116 = vmatprep.subr.bf16.mxu0 0
    %2117 = vmatpush1.bf16.msra.mxu0 0
    %2118 = vmatprep.subr.bf16.mxu0 0
    %2119 = vmatpush1.bf16.msra.mxu0 0
    %2120 = vmatprep.subr.bf16.mxu0 0
    %2121 = vmatpush1.bf16.msra.mxu0 %v771
    %2122 = vmatprep.subr.bf16.mxu0 0
    %2123 = vmatpush1.bf16.msra.mxu0 %v770
    %2124 = vmatprep.subr.bf16.mxu0 0
    %2125 = vmatpush2.bf16.msra.mxu0 0
    %2126 = vmatprep.subr.bf16.mxu0 0
    %2127 = vmatpush2.bf16.msra.mxu0 0
    %2128 = vmatprep.subr.bf16.mxu0 0
    %2129 = vmatpush2.bf16.msra.mxu0 0
    %2130 = vmatprep.subr.bf16.mxu0 0
    %2131 = vmatpush2.bf16.msra.mxu0 0
    %2132 = vmatprep.subr.bf16.mxu0 0
    %2133 = vmatpush2.bf16.msra.mxu0 0
    %2134 = vmatprep.subr.bf16.mxu0 0
    %2135 = vmatpush2.bf16.msra.mxu0 0
    %2136 = vmatprep.subr.bf16.mxu0 0
    %2137 = vmatpush2.bf16.msra.mxu0 0
    %2138 = vmatprep.subr.bf16.mxu0 0
    %2139 = vmatpush2.bf16.msra.mxu0 0
    %2140 = vmatprep.mubr.bf16.mxu0 0
    %2141 = vmatmul.mubr.bf16.gmra.mxu0 %v2106
    %v2142 = vpop.f32.mrf.mxu0
    %v2143 = vadd.f32 0.0, %v2142
    %v2144 = vpop.f32.mrf.mxu0
    %v2145 = vpop.f32.mrf.mxu0
    %v2146 = vpop.f32.mrf.mxu0
    %2147 = vdwg.mxu0
    %v2148 = vld [vmem:[#allocation2 + $0x26] sm:$0x3]
    %v2149 = vadd.f32 %v2148, %v2143
    %v2150 = vmul.f32 %v2149, %v741
    %v2151 = vtanh.pop %v2150
    %v2152 = vmul.f32 %v2151, %v741
    %v2153 = vadd.f32 %v2152, %v742
    %v2154 = vmul.f32 %v2153, %v2094
    %2156 = vrot.lane.b32.xlu0 %v2153, 64
    %v2157 = vpop.permute.xlu0 %2156
    %v2159 = vmul.f32 %v2153, %v2157
    %2161 = vrot.lane.b32.xlu0 %v2159, 32
    %v2162 = vpop.permute.xlu0 %2161
    %v2164 = vadd.f32 %v2154, %v2162
    %v2165 = vtanh.pop %v2164
    %2167 = vrot.lane.b32.xlu0 %v2165, 64
    %v2168 = vpop.permute.xlu0 %2167
    %v2170 = vmul.f32 %v2153, %v2168
    %v2171 = vpack.c.bf16 %v2170, %v2170
    %2173 = vrot.lane.b32.xlu0 %v2171, 32
    %v2174 = vpop.permute.xlu0 %2173
    %v2176 = vsel %vm774, %v2174, 0
    %2178 = vmatprep.subr.bf16.mxu0 0
    %2179 = vmatpush1.bf16.msra.mxu0 0
    %2180 = vmatprep.subr.bf16.mxu0 0
    %2181 = vmatpush1.bf16.msra.mxu0 0
    %2182 = vmatprep.subr.bf16.mxu0 0
    %2183 = vmatpush1.bf16.msra.mxu0 0
    %2184 = vmatprep.subr.bf16.mxu0 0
    %2185 = vmatpush1.bf16.msra.mxu0 0
    %2186 = vmatprep.subr.bf16.mxu0 0
    %2187 = vmatpush1.bf16.msra.mxu0 0
    %2188 = vmatprep.subr.bf16.mxu0 0
    %2189 = vmatpush1.bf16.msra.mxu0 0
    %2190 = vmatprep.subr.bf16.mxu0 0
    %2191 = vmatpush1.bf16.msra.mxu0 %v771
    %2192 = vmatprep.subr.bf16.mxu0 0
    %2193 = vmatpush1.bf16.msra.mxu0 %v770
    %2194 = vmatprep.subr.bf16.mxu0 0
    %2195 = vmatpush2.bf16.msra.mxu0 0
    %2196 = vmatprep.subr.bf16.mxu0 0
    %2197 = vmatpush2.bf16.msra.mxu0 0
    %2198 = vmatprep.subr.bf16.mxu0 0
    %2199 = vmatpush2.bf16.msra.mxu0 0
    %2200 = vmatprep.subr.bf16.mxu0 0
    %2201 = vmatpush2.bf16.msra.mxu0 0
    %2202 = vmatprep.subr.bf16.mxu0 0
    %2203 = vmatpush2.bf16.msra.mxu0 0
    %2204 = vmatprep.subr.bf16.mxu0 0
    %2205 = vmatpush2.bf16.msra.mxu0 0
    %2206 = vmatprep.subr.bf16.mxu0 0
    %2207 = vmatpush2.bf16.msra.mxu0 0
    %2208 = vmatprep.subr.bf16.mxu0 0
    %2209 = vmatpush2.bf16.msra.mxu0 0
    %2210 = vmatprep.mubr.bf16.mxu0 0
    %2211 = vmatmul.mubr.bf16.gmra.mxu0 %v2176
    %v2212 = vpop.f32.mrf.mxu0
    %v2213 = vadd.f32 0.0, %v2212
    %v2214 = vpop.f32.mrf.mxu0
    %v2215 = vpop.f32.mrf.mxu0
    %v2216 = vpop.f32.mrf.mxu0
    %2217 = vdwg.mxu0
    %v2218 = vld [vmem:[#allocation2 + $0x28] sm:$0x3]
    %v2219 = vadd.f32 %v2218, %v2213
    %v2220 = vmul.f32 %v2219, %v741
    %v2221 = vtanh.pop %v2220
    %v2222 = vmul.f32 %v2221, %v741
    %v2223 = vadd.f32 %v2222, %v742
    %v2224 = vmul.f32 %v2223, %v2164
    %2226 = vrot.lane.b32.xlu0 %v2223, 64
    %v2227 = vpop.permute.xlu0 %2226
    %v2229 = vmul.f32 %v2223, %v2227
    %2231 = vrot.lane.b32.xlu0 %v2229, 32
    %v2232 = vpop.permute.xlu0 %2231
    %v2234 = vadd.f32 %v2224, %v2232
    %v2235 = vtanh.pop %v2234
    %2237 = vrot.lane.b32.xlu0 %v2235, 64
    %v2238 = vpop.permute.xlu0 %2237
    %v2240 = vmul.f32 %v2223, %v2238
    %v2241 = vpack.c.bf16 %v2240, %v2240
    %2243 = vrot.lane.b32.xlu0 %v2241, 32
    %v2244 = vpop.permute.xlu0 %2243
    %v2246 = vsel %vm774, %v2244, 0
    %2248 = vmatprep.subr.bf16.mxu0 0
    %2249 = vmatpush1.bf16.msra.mxu0 0
    %2250 = vmatprep.subr.bf16.mxu0 0
    %2251 = vmatpush1.bf16.msra.mxu0 0
    %2252 = vmatprep.subr.bf16.mxu0 0
    %2253 = vmatpush1.bf16.msra.mxu0 0
    %2254 = vmatprep.subr.bf16.mxu0 0
    %2255 = vmatpush1.bf16.msra.mxu0 0
    %2256 = vmatprep.subr.bf16.mxu0 0
    %2257 = vmatpush1.bf16.msra.mxu0 0
    %2258 = vmatprep.subr.bf16.mxu0 0
    %2259 = vmatpush1.bf16.msra.mxu0 0
    %2260 = vmatprep.subr.bf16.mxu0 0
    %2261 = vmatpush1.bf16.msra.mxu0 %v771
    %2262 = vmatprep.subr.bf16.mxu0 0
    %2263 = vmatpush1.bf16.msra.mxu0 %v770
    %2264 = vmatprep.subr.bf16.mxu0 0
    %2265 = vmatpush2.bf16.msra.mxu0 0
    %2266 = vmatprep.subr.bf16.mxu0 0
    %2267 = vmatpush2.bf16.msra.mxu0 0
    %2268 = vmatprep.subr.bf16.mxu0 0
    %2269 = vmatpush2.bf16.msra.mxu0 0
    %2270 = vmatprep.subr.bf16.mxu0 0
    %2271 = vmatpush2.bf16.msra.mxu0 0
    %2272 = vmatprep.subr.bf16.mxu0 0
    %2273 = vmatpush2.bf16.msra.mxu0 0
    %2274 = vmatprep.subr.bf16.mxu0 0
    %2275 = vmatpush2.bf16.msra.mxu0 0
    %2276 = vmatprep.subr.bf16.mxu0 0
    %2277 = vmatpush2.bf16.msra.mxu0 0
    %2278 = vmatprep.subr.bf16.mxu0 0
    %2279 = vmatpush2.bf16.msra.mxu0 0
    %2280 = vmatprep.mubr.bf16.mxu0 0
    %2281 = vmatmul.mubr.bf16.gmra.mxu0 %v2246
    %v2282 = vpop.f32.mrf.mxu0
    %v2283 = vadd.f32 0.0, %v2282
    %v2284 = vpop.f32.mrf.mxu0
    %v2285 = vpop.f32.mrf.mxu0
    %v2286 = vpop.f32.mrf.mxu0
    %2287 = vdwg.mxu0
    %v2288 = vld [vmem:[#allocation2 + $0x2a] sm:$0x3]
    %v2289 = vadd.f32 %v2288, %v2283
    %v2290 = vmul.f32 %v2289, %v741
    %v2291 = vtanh.pop %v2290
    %v2292 = vmul.f32 %v2291, %v741
    %v2293 = vadd.f32 %v2292, %v742
    %v2294 = vmul.f32 %v2293, %v2234
    %2296 = vrot.lane.b32.xlu0 %v2293, 64
    %v2297 = vpop.permute.xlu0 %2296
    %v2299 = vmul.f32 %v2293, %v2297
    %2301 = vrot.lane.b32.xlu0 %v2299, 32
    %v2302 = vpop.permute.xlu0 %2301
    %v2304 = vadd.f32 %v2294, %v2302
    %v2305 = vtanh.pop %v2304
    %2307 = vrot.lane.b32.xlu0 %v2305, 64
    %v2308 = vpop.permute.xlu0 %2307
    %v2310 = vmul.f32 %v2293, %v2308
    %v2311 = vpack.c.bf16 %v2310, %v2310
    %2313 = vrot.lane.b32.xlu0 %v2311, 32
    %v2314 = vpop.permute.xlu0 %2313
    %v2316 = vsel %vm774, %v2314, 0
    %2318 = vmatprep.subr.bf16.mxu0 0
    %2319 = vmatpush1.bf16.msra.mxu0 0
    %2320 = vmatprep.subr.bf16.mxu0 0
    %2321 = vmatpush1.bf16.msra.mxu0 0
    %2322 = vmatprep.subr.bf16.mxu0 0
    %2323 = vmatpush1.bf16.msra.mxu0 0
    %2324 = vmatprep.subr.bf16.mxu0 0
    %2325 = vmatpush1.bf16.msra.mxu0 0
    %2326 = vmatprep.subr.bf16.mxu0 0
    %2327 = vmatpush1.bf16.msra.mxu0 0
    %2328 = vmatprep.subr.bf16.mxu0 0
    %2329 = vmatpush1.bf16.msra.mxu0 0
    %2330 = vmatprep.subr.bf16.mxu0 0
    %2331 = vmatpush1.bf16.msra.mxu0 %v771
    %2332 = vmatprep.subr.bf16.mxu0 0
    %2333 = vmatpush1.bf16.msra.mxu0 %v770
    %2334 = vmatprep.subr.bf16.mxu0 0
    %2335 = vmatpush2.bf16.msra.mxu0 0
    %2336 = vmatprep.subr.bf16.mxu0 0
    %2337 = vmatpush2.bf16.msra.mxu0 0
    %2338 = vmatprep.subr.bf16.mxu0 0
    %2339 = vmatpush2.bf16.msra.mxu0 0
    %2340 = vmatprep.subr.bf16.mxu0 0
    %2341 = vmatpush2.bf16.msra.mxu0 0
    %2342 = vmatprep.subr.bf16.mxu0 0
    %2343 = vmatpush2.bf16.msra.mxu0 0
    %2344 = vmatprep.subr.bf16.mxu0 0
    %2345 = vmatpush2.bf16.msra.mxu0 0
    %2346 = vmatprep.subr.bf16.mxu0 0
    %2347 = vmatpush2.bf16.msra.mxu0 0
    %2348 = vmatprep.subr.bf16.mxu0 0
    %2349 = vmatpush2.bf16.msra.mxu0 0
    %2350 = vmatprep.mubr.bf16.mxu0 0
    %2351 = vmatmul.mubr.bf16.gmra.mxu0 %v2316
    %v2352 = vpop.f32.mrf.mxu0
    %v2353 = vadd.f32 0.0, %v2352
    %v2354 = vpop.f32.mrf.mxu0
    %v2355 = vpop.f32.mrf.mxu0
    %v2356 = vpop.f32.mrf.mxu0
    %2357 = vdwg.mxu0
    %v2358 = vld [vmem:[#allocation2 + $0x2c] sm:$0x3]
    %v2359 = vadd.f32 %v2358, %v2353
    %v2360 = vmul.f32 %v2359, %v741
    %v2361 = vtanh.pop %v2360
    %v2362 = vmul.f32 %v2361, %v741
    %v2363 = vadd.f32 %v2362, %v742
    %v2364 = vmul.f32 %v2363, %v2304
    %2366 = vrot.lane.b32.xlu0 %v2363, 64
    %v2367 = vpop.permute.xlu0 %2366
    %v2369 = vmul.f32 %v2363, %v2367
    %2371 = vrot.lane.b32.xlu0 %v2369, 32
    %v2372 = vpop.permute.xlu0 %2371
    %v2374 = vadd.f32 %v2364, %v2372
    %v2375 = vtanh.pop %v2374
    %2377 = vrot.lane.b32.xlu0 %v2375, 64
    %v2378 = vpop.permute.xlu0 %2377
    %v2380 = vmul.f32 %v2363, %v2378
    %v2381 = vpack.c.bf16 %v2380, %v2380
    %2383 = vrot.lane.b32.xlu0 %v2381, 32
    %v2384 = vpop.permute.xlu0 %2383
    %v2386 = vsel %vm774, %v2384, 0
    %2388 = vmatprep.subr.bf16.mxu0 0
    %2389 = vmatpush1.bf16.msra.mxu0 0
    %2390 = vmatprep.subr.bf16.mxu0 0
    %2391 = vmatpush1.bf16.msra.mxu0 0
    %2392 = vmatprep.subr.bf16.mxu0 0
    %2393 = vmatpush1.bf16.msra.mxu0 0
    %2394 = vmatprep.subr.bf16.mxu0 0
    %2395 = vmatpush1.bf16.msra.mxu0 0
    %2396 = vmatprep.subr.bf16.mxu0 0
    %2397 = vmatpush1.bf16.msra.mxu0 0
    %2398 = vmatprep.subr.bf16.mxu0 0
    %2399 = vmatpush1.bf16.msra.mxu0 0
    %2400 = vmatprep.subr.bf16.mxu0 0
    %2401 = vmatpush1.bf16.msra.mxu0 %v771
    %2402 = vmatprep.subr.bf16.mxu0 0
    %2403 = vmatpush1.bf16.msra.mxu0 %v770
    %2404 = vmatprep.subr.bf16.mxu0 0
    %2405 = vmatpush2.bf16.msra.mxu0 0
    %2406 = vmatprep.subr.bf16.mxu0 0
    %2407 = vmatpush2.bf16.msra.mxu0 0
    %2408 = vmatprep.subr.bf16.mxu0 0
    %2409 = vmatpush2.bf16.msra.mxu0 0
    %2410 = vmatprep.subr.bf16.mxu0 0
    %2411 = vmatpush2.bf16.msra.mxu0 0
    %2412 = vmatprep.subr.bf16.mxu0 0
    %2413 = vmatpush2.bf16.msra.mxu0 0
    %2414 = vmatprep.subr.bf16.mxu0 0
    %2415 = vmatpush2.bf16.msra.mxu0 0
    %2416 = vmatprep.subr.bf16.mxu0 0
    %2417 = vmatpush2.bf16.msra.mxu0 0
    %2418 = vmatprep.subr.bf16.mxu0 0
    %2419 = vmatpush2.bf16.msra.mxu0 0
    %2420 = vmatprep.mubr.bf16.mxu0 0
    %2421 = vmatmul.mubr.bf16.gmra.mxu0 %v2386
    %v2422 = vpop.f32.mrf.mxu0
    %v2423 = vadd.f32 0.0, %v2422
    %v2424 = vpop.f32.mrf.mxu0
    %v2425 = vpop.f32.mrf.mxu0
    %v2426 = vpop.f32.mrf.mxu0
    %2427 = vdwg.mxu0
    %v2428 = vld [vmem:[#allocation2 + $0x2e] sm:$0x3]
    %v2429 = vadd.f32 %v2428, %v2423
    %v2430 = vmul.f32 %v2429, %v741
    %v2431 = vtanh.pop %v2430
    %v2432 = vmul.f32 %v2431, %v741
    %v2433 = vadd.f32 %v2432, %v742
    %v2434 = vmul.f32 %v2433, %v2374
    %2436 = vrot.lane.b32.xlu0 %v2433, 64
    %v2437 = vpop.permute.xlu0 %2436
    %v2439 = vmul.f32 %v2433, %v2437
    %2441 = vrot.lane.b32.xlu0 %v2439, 32
    %v2442 = vpop.permute.xlu0 %2441
    %v2444 = vadd.f32 %v2434, %v2442
    %v2445 = vtanh.pop %v2444
    %2447 = vrot.lane.b32.xlu0 %v2445, 64
    %v2448 = vpop.permute.xlu0 %2447
    %v2450 = vmul.f32 %v2433, %v2448
    %v2451 = vpack.c.bf16 %v2450, %v2450
    %2453 = vrot.lane.b32.xlu0 %v2451, 32
    %v2454 = vpop.permute.xlu0 %2453
    %v2456 = vsel %vm774, %v2454, 0
    %2458 = vmatprep.subr.bf16.mxu0 0
    %2459 = vmatpush1.bf16.msra.mxu0 0
    %2460 = vmatprep.subr.bf16.mxu0 0
    %2461 = vmatpush1.bf16.msra.mxu0 0
    %2462 = vmatprep.subr.bf16.mxu0 0
    %2463 = vmatpush1.bf16.msra.mxu0 0
    %2464 = vmatprep.subr.bf16.mxu0 0
    %2465 = vmatpush1.bf16.msra.mxu0 0
    %2466 = vmatprep.subr.bf16.mxu0 0
    %2467 = vmatpush1.bf16.msra.mxu0 0
    %2468 = vmatprep.subr.bf16.mxu0 0
    %2469 = vmatpush1.bf16.msra.mxu0 0
    %2470 = vmatprep.subr.bf16.mxu0 0
    %2471 = vmatpush1.bf16.msra.mxu0 %v771
    %2472 = vmatprep.subr.bf16.mxu0 0
    %2473 = vmatpush1.bf16.msra.mxu0 %v770
    %2474 = vmatprep.subr.bf16.mxu0 0
    %2475 = vmatpush2.bf16.msra.mxu0 0
    %2476 = vmatprep.subr.bf16.mxu0 0
    %2477 = vmatpush2.bf16.msra.mxu0 0
    %2478 = vmatprep.subr.bf16.mxu0 0
    %2479 = vmatpush2.bf16.msra.mxu0 0
    %2480 = vmatprep.subr.bf16.mxu0 0
    %2481 = vmatpush2.bf16.msra.mxu0 0
    %2482 = vmatprep.subr.bf16.mxu0 0
    %2483 = vmatpush2.bf16.msra.mxu0 0
    %2484 = vmatprep.subr.bf16.mxu0 0
    %2485 = vmatpush2.bf16.msra.mxu0 0
    %2486 = vmatprep.subr.bf16.mxu0 0
    %2487 = vmatpush2.bf16.msra.mxu0 0
    %2488 = vmatprep.subr.bf16.mxu0 0
    %2489 = vmatpush2.bf16.msra.mxu0 0
    %2490 = vmatprep.mubr.bf16.mxu0 0
    %2491 = vmatmul.mubr.bf16.gmra.mxu0 %v2456
    %v2492 = vpop.f32.mrf.mxu0
    %v2493 = vadd.f32 0.0, %v2492
    %v2494 = vpop.f32.mrf.mxu0
    %v2495 = vpop.f32.mrf.mxu0
    %v2496 = vpop.f32.mrf.mxu0
    %2497 = vdwg.mxu0
    %v2498 = vld [vmem:[#allocation2 + $0x30] sm:$0x3]
    %v2499 = vadd.f32 %v2498, %v2493
    %v2500 = vmul.f32 %v2499, %v741
    %v2501 = vtanh.pop %v2500
    %v2502 = vmul.f32 %v2501, %v741
    %v2503 = vadd.f32 %v2502, %v742
    %v2504 = vmul.f32 %v2503, %v2444
    %2506 = vrot.lane.b32.xlu0 %v2503, 64
    %v2507 = vpop.permute.xlu0 %2506
    %v2509 = vmul.f32 %v2503, %v2507
    %2511 = vrot.lane.b32.xlu0 %v2509, 32
    %v2512 = vpop.permute.xlu0 %2511
    %v2514 = vadd.f32 %v2504, %v2512
    %v2515 = vtanh.pop %v2514
    %2517 = vrot.lane.b32.xlu0 %v2515, 64
    %v2518 = vpop.permute.xlu0 %2517
    %v2520 = vmul.f32 %v2503, %v2518
    %v2521 = vpack.c.bf16 %v2520, %v2520
    %2523 = vrot.lane.b32.xlu0 %v2521, 32
    %v2524 = vpop.permute.xlu0 %2523
    %v2526 = vsel %vm774, %v2524, 0
    %2528 = vmatprep.subr.bf16.mxu0 0
    %2529 = vmatpush1.bf16.msra.mxu0 0
    %2530 = vmatprep.subr.bf16.mxu0 0
    %2531 = vmatpush1.bf16.msra.mxu0 0
    %2532 = vmatprep.subr.bf16.mxu0 0
    %2533 = vmatpush1.bf16.msra.mxu0 0
    %2534 = vmatprep.subr.bf16.mxu0 0
    %2535 = vmatpush1.bf16.msra.mxu0 0
    %2536 = vmatprep.subr.bf16.mxu0 0
    %2537 = vmatpush1.bf16.msra.mxu0 0
    %2538 = vmatprep.subr.bf16.mxu0 0
    %2539 = vmatpush1.bf16.msra.mxu0 0
    %2540 = vmatprep.subr.bf16.mxu0 0
    %2541 = vmatpush1.bf16.msra.mxu0 %v771
    %2542 = vmatprep.subr.bf16.mxu0 0
    %2543 = vmatpush1.bf16.msra.mxu0 %v770
    %2544 = vmatprep.subr.bf16.mxu0 0
    %2545 = vmatpush2.bf16.msra.mxu0 0
    %2546 = vmatprep.subr.bf16.mxu0 0
    %2547 = vmatpush2.bf16.msra.mxu0 0
    %2548 = vmatprep.subr.bf16.mxu0 0
    %2549 = vmatpush2.bf16.msra.mxu0 0
    %2550 = vmatprep.subr.bf16.mxu0 0
    %2551 = vmatpush2.bf16.msra.mxu0 0
    %2552 = vmatprep.subr.bf16.mxu0 0
    %2553 = vmatpush2.bf16.msra.mxu0 0
    %2554 = vmatprep.subr.bf16.mxu0 0
    %2555 = vmatpush2.bf16.msra.mxu0 0
    %2556 = vmatprep.subr.bf16.mxu0 0
    %2557 = vmatpush2.bf16.msra.mxu0 0
    %2558 = vmatprep.subr.bf16.mxu0 0
    %2559 = vmatpush2.bf16.msra.mxu0 0
    %2560 = vmatprep.mubr.bf16.mxu0 0
    %2561 = vmatmul.mubr.bf16.gmra.mxu0 %v2526
    %v2562 = vpop.f32.mrf.mxu0
    %v2563 = vadd.f32 0.0, %v2562
    %v2564 = vpop.f32.mrf.mxu0
    %v2565 = vpop.f32.mrf.mxu0
    %v2566 = vpop.f32.mrf.mxu0
    %2567 = vdwg.mxu0
    %v2568 = vld [vmem:[#allocation2 + $0x32] sm:$0x3]
    %v2569 = vadd.f32 %v2568, %v2563
    %v2570 = vmul.f32 %v2569, %v741
    %v2571 = vtanh.pop %v2570
    %v2572 = vmul.f32 %v2571, %v741
    %v2573 = vadd.f32 %v2572, %v742
    %v2574 = vmul.f32 %v2573, %v2514
    %2576 = vrot.lane.b32.xlu0 %v2573, 64
    %v2577 = vpop.permute.xlu0 %2576
    %v2579 = vmul.f32 %v2573, %v2577
    %2581 = vrot.lane.b32.xlu0 %v2579, 32
    %v2582 = vpop.permute.xlu0 %2581
    %v2584 = vadd.f32 %v2574, %v2582
    %v2585 = vtanh.pop %v2584
    %2587 = vrot.lane.b32.xlu0 %v2585, 64
    %v2588 = vpop.permute.xlu0 %2587
    %v2590 = vmul.f32 %v2573, %v2588
    %v2591 = vpack.c.bf16 %v2590, %v2590
    %2593 = vrot.lane.b32.xlu0 %v2591, 32
    %v2594 = vpop.permute.xlu0 %2593
    %v2596 = vsel %vm774, %v2594, 0
    %2598 = vmatprep.subr.bf16.mxu0 0
    %2599 = vmatpush1.bf16.msra.mxu0 0
    %2600 = vmatprep.subr.bf16.mxu0 0
    %2601 = vmatpush1.bf16.msra.mxu0 0
    %2602 = vmatprep.subr.bf16.mxu0 0
    %2603 = vmatpush1.bf16.msra.mxu0 0
    %2604 = vmatprep.subr.bf16.mxu0 0
    %2605 = vmatpush1.bf16.msra.mxu0 0
    %2606 = vmatprep.subr.bf16.mxu0 0
    %2607 = vmatpush1.bf16.msra.mxu0 0
    %2608 = vmatprep.subr.bf16.mxu0 0
    %2609 = vmatpush1.bf16.msra.mxu0 0
    %2610 = vmatprep.subr.bf16.mxu0 0
    %2611 = vmatpush1.bf16.msra.mxu0 %v771
    %2612 = vmatprep.subr.bf16.mxu0 0
    %2613 = vmatpush1.bf16.msra.mxu0 %v770
    %2614 = vmatprep.subr.bf16.mxu0 0
    %2615 = vmatpush2.bf16.msra.mxu0 0
    %2616 = vmatprep.subr.bf16.mxu0 0
    %2617 = vmatpush2.bf16.msra.mxu0 0
    %2618 = vmatprep.subr.bf16.mxu0 0
    %2619 = vmatpush2.bf16.msra.mxu0 0
    %2620 = vmatprep.subr.bf16.mxu0 0
    %2621 = vmatpush2.bf16.msra.mxu0 0
    %2622 = vmatprep.subr.bf16.mxu0 0
    %2623 = vmatpush2.bf16.msra.mxu0 0
    %2624 = vmatprep.subr.bf16.mxu0 0
    %2625 = vmatpush2.bf16.msra.mxu0 0
    %2626 = vmatprep.subr.bf16.mxu0 0
    %2627 = vmatpush2.bf16.msra.mxu0 0
    %2628 = vmatprep.subr.bf16.mxu0 0
    %2629 = vmatpush2.bf16.msra.mxu0 0
    %2630 = vmatprep.mubr.bf16.mxu0 0
    %2631 = vmatmul.mubr.bf16.gmra.mxu0 %v2596
    %v2632 = vpop.f32.mrf.mxu0
    %v2633 = vadd.f32 0.0, %v2632
    %v2634 = vpop.f32.mrf.mxu0
    %v2635 = vpop.f32.mrf.mxu0
    %v2636 = vpop.f32.mrf.mxu0
    %2637 = vdwg.mxu0
    %v2638 = vld [vmem:[#allocation2 + $0x34] sm:$0x3]
    %v2639 = vadd.f32 %v2638, %v2633
    %v2640 = vmul.f32 %v2639, %v741
    %v2641 = vtanh.pop %v2640
    %v2642 = vmul.f32 %v2641, %v741
    %v2643 = vadd.f32 %v2642, %v742
    %v2644 = vmul.f32 %v2643, %v2584
    %2646 = vrot.lane.b32.xlu0 %v2643, 64
    %v2647 = vpop.permute.xlu0 %2646
    %v2649 = vmul.f32 %v2643, %v2647
    %2651 = vrot.lane.b32.xlu0 %v2649, 32
    %v2652 = vpop.permute.xlu0 %2651
    %v2654 = vadd.f32 %v2644, %v2652
    %v2655 = vtanh.pop %v2654
    %2657 = vrot.lane.b32.xlu0 %v2655, 64
    %v2658 = vpop.permute.xlu0 %2657
    %v2660 = vmul.f32 %v2643, %v2658
    %v2661 = vpack.c.bf16 %v2660, %v2660
    %2663 = vrot.lane.b32.xlu0 %v2661, 32
    %v2664 = vpop.permute.xlu0 %2663
    %v2666 = vsel %vm774, %v2664, 0
    %2668 = vmatprep.subr.bf16.mxu0 0
    %2669 = vmatpush1.bf16.msra.mxu0 0
    %2670 = vmatprep.subr.bf16.mxu0 0
    %2671 = vmatpush1.bf16.msra.mxu0 0
    %2672 = vmatprep.subr.bf16.mxu0 0
    %2673 = vmatpush1.bf16.msra.mxu0 0
    %2674 = vmatprep.subr.bf16.mxu0 0
    %2675 = vmatpush1.bf16.msra.mxu0 0
    %2676 = vmatprep.subr.bf16.mxu0 0
    %2677 = vmatpush1.bf16.msra.mxu0 0
    %2678 = vmatprep.subr.bf16.mxu0 0
    %2679 = vmatpush1.bf16.msra.mxu0 0
    %2680 = vmatprep.subr.bf16.mxu0 0
    %2681 = vmatpush1.bf16.msra.mxu0 %v771
    %2682 = vmatprep.subr.bf16.mxu0 0
    %2683 = vmatpush1.bf16.msra.mxu0 %v770
    %2684 = vmatprep.subr.bf16.mxu0 0
    %2685 = vmatpush2.bf16.msra.mxu0 0
    %2686 = vmatprep.subr.bf16.mxu0 0
    %2687 = vmatpush2.bf16.msra.mxu0 0
    %2688 = vmatprep.subr.bf16.mxu0 0
    %2689 = vmatpush2.bf16.msra.mxu0 0
    %2690 = vmatprep.subr.bf16.mxu0 0
    %2691 = vmatpush2.bf16.msra.mxu0 0
    %2692 = vmatprep.subr.bf16.mxu0 0
    %2693 = vmatpush2.bf16.msra.mxu0 0
    %2694 = vmatprep.subr.bf16.mxu0 0
    %2695 = vmatpush2.bf16.msra.mxu0 0
    %2696 = vmatprep.subr.bf16.mxu0 0
    %2697 = vmatpush2.bf16.msra.mxu0 0
    %2698 = vmatprep.subr.bf16.mxu0 0
    %2699 = vmatpush2.bf16.msra.mxu0 0
    %2700 = vmatprep.mubr.bf16.mxu0 0
    %2701 = vmatmul.mubr.bf16.gmra.mxu0 %v2666
    %v2702 = vpop.f32.mrf.mxu0
    %v2703 = vadd.f32 0.0, %v2702
    %v2704 = vpop.f32.mrf.mxu0
    %v2705 = vpop.f32.mrf.mxu0
    %v2706 = vpop.f32.mrf.mxu0
    %2707 = vdwg.mxu0
    %v2708 = vld [vmem:[#allocation2 + $0x36] sm:$0x3]
    %v2709 = vadd.f32 %v2708, %v2703
    %v2710 = vmul.f32 %v2709, %v741
    %v2711 = vtanh.pop %v2710
    %v2712 = vmul.f32 %v2711, %v741
    %v2713 = vadd.f32 %v2712, %v742
    %v2714 = vmul.f32 %v2713, %v2654
    %2716 = vrot.lane.b32.xlu0 %v2713, 64
    %v2717 = vpop.permute.xlu0 %2716
    %v2719 = vmul.f32 %v2713, %v2717
    %2721 = vrot.lane.b32.xlu0 %v2719, 32
    %v2722 = vpop.permute.xlu0 %2721
    %v2724 = vadd.f32 %v2714, %v2722
    %v2725 = vtanh.pop %v2724
    %2727 = vrot.lane.b32.xlu0 %v2725, 64
    %v2728 = vpop.permute.xlu0 %2727
    %v2730 = vmul.f32 %v2713, %v2728
    %v2731 = vpack.c.bf16 %v2730, %v2730
    %2733 = vrot.lane.b32.xlu0 %v2731, 32
    %v2734 = vpop.permute.xlu0 %2733
    %v2736 = vsel %vm774, %v2734, 0
    %2738 = vmatprep.subr.bf16.mxu0 0
    %2739 = vmatpush1.bf16.msra.mxu0 0
    %2740 = vmatprep.subr.bf16.mxu0 0
    %2741 = vmatpush1.bf16.msra.mxu0 0
    %2742 = vmatprep.subr.bf16.mxu0 0
    %2743 = vmatpush1.bf16.msra.mxu0 0
    %2744 = vmatprep.subr.bf16.mxu0 0
    %2745 = vmatpush1.bf16.msra.mxu0 0
    %2746 = vmatprep.subr.bf16.mxu0 0
    %2747 = vmatpush1.bf16.msra.mxu0 0
    %2748 = vmatprep.subr.bf16.mxu0 0
    %2749 = vmatpush1.bf16.msra.mxu0 0
    %2750 = vmatprep.subr.bf16.mxu0 0
    %2751 = vmatpush1.bf16.msra.mxu0 %v771
    %2752 = vmatprep.subr.bf16.mxu0 0
    %2753 = vmatpush1.bf16.msra.mxu0 %v770
    %2754 = vmatprep.subr.bf16.mxu0 0
    %2755 = vmatpush2.bf16.msra.mxu0 0
    %2756 = vmatprep.subr.bf16.mxu0 0
    %2757 = vmatpush2.bf16.msra.mxu0 0
    %2758 = vmatprep.subr.bf16.mxu0 0
    %2759 = vmatpush2.bf16.msra.mxu0 0
    %2760 = vmatprep.subr.bf16.mxu0 0
    %2761 = vmatpush2.bf16.msra.mxu0 0
    %2762 = vmatprep.subr.bf16.mxu0 0
    %2763 = vmatpush2.bf16.msra.mxu0 0
    %2764 = vmatprep.subr.bf16.mxu0 0
    %2765 = vmatpush2.bf16.msra.mxu0 0
    %2766 = vmatprep.subr.bf16.mxu0 0
    %2767 = vmatpush2.bf16.msra.mxu0 0
    %2768 = vmatprep.subr.bf16.mxu0 0
    %2769 = vmatpush2.bf16.msra.mxu0 0
    %2770 = vmatprep.mubr.bf16.mxu0 0
    %2771 = vmatmul.mubr.bf16.gmra.mxu0 %v2736
    %v2772 = vpop.f32.mrf.mxu0
    %v2773 = vadd.f32 0.0, %v2772
    %v2774 = vpop.f32.mrf.mxu0
    %v2775 = vpop.f32.mrf.mxu0
    %v2776 = vpop.f32.mrf.mxu0
    %2777 = vdwg.mxu0
    %v2778 = vld [vmem:[#allocation2 + $0x38] sm:$0x3]
    %v2779 = vadd.f32 %v2778, %v2773
    %v2780 = vmul.f32 %v2779, %v741
    %v2781 = vtanh.pop %v2780
    %v2782 = vmul.f32 %v2781, %v741
    %v2783 = vadd.f32 %v2782, %v742
    %v2784 = vmul.f32 %v2783, %v2724
    %2786 = vrot.lane.b32.xlu0 %v2783, 64
    %v2787 = vpop.permute.xlu0 %2786
    %v2789 = vmul.f32 %v2783, %v2787
    %2791 = vrot.lane.b32.xlu0 %v2789, 32
    %v2792 = vpop.permute.xlu0 %2791
    %v2794 = vadd.f32 %v2784, %v2792
    %v2795 = vtanh.pop %v2794
    %2797 = vrot.lane.b32.xlu0 %v2795, 64
    %v2798 = vpop.permute.xlu0 %2797
    %v2800 = vmul.f32 %v2783, %v2798
    %v2801 = vpack.c.bf16 %v2800, %v2800
    %2803 = vrot.lane.b32.xlu0 %v2801, 32
    %v2804 = vpop.permute.xlu0 %2803
    %v2806 = vsel %vm774, %v2804, 0
    %2808 = vmatprep.subr.bf16.mxu0 0
    %2809 = vmatpush1.bf16.msra.mxu0 0
    %2810 = vmatprep.subr.bf16.mxu0 0
    %2811 = vmatpush1.bf16.msra.mxu0 0
    %2812 = vmatprep.subr.bf16.mxu0 0
    %2813 = vmatpush1.bf16.msra.mxu0 0
    %2814 = vmatprep.subr.bf16.mxu0 0
    %2815 = vmatpush1.bf16.msra.mxu0 0
    %2816 = vmatprep.subr.bf16.mxu0 0
    %2817 = vmatpush1.bf16.msra.mxu0 0
    %2818 = vmatprep.subr.bf16.mxu0 0
    %2819 = vmatpush1.bf16.msra.mxu0 0
    %2820 = vmatprep.subr.bf16.mxu0 0
    %2821 = vmatpush1.bf16.msra.mxu0 %v771
    %2822 = vmatprep.subr.bf16.mxu0 0
    %2823 = vmatpush1.bf16.msra.mxu0 %v770
    %2824 = vmatprep.subr.bf16.mxu0 0
    %2825 = vmatpush2.bf16.msra.mxu0 0
    %2826 = vmatprep.subr.bf16.mxu0 0
    %2827 = vmatpush2.bf16.msra.mxu0 0
    %2828 = vmatprep.subr.bf16.mxu0 0
    %2829 = vmatpush2.bf16.msra.mxu0 0
    %2830 = vmatprep.subr.bf16.mxu0 0
    %2831 = vmatpush2.bf16.msra.mxu0 0
    %2832 = vmatprep.subr.bf16.mxu0 0
    %2833 = vmatpush2.bf16.msra.mxu0 0
    %2834 = vmatprep.subr.bf16.mxu0 0
    %2835 = vmatpush2.bf16.msra.mxu0 0
    %2836 = vmatprep.subr.bf16.mxu0 0
    %2837 = vmatpush2.bf16.msra.mxu0 0
    %2838 = vmatprep.subr.bf16.mxu0 0
    %2839 = vmatpush2.bf16.msra.mxu0 0
    %2840 = vmatprep.mubr.bf16.mxu0 0
    %2841 = vmatmul.mubr.bf16.gmra.mxu0 %v2806
    %v2842 = vpop.f32.mrf.mxu0
    %v2843 = vadd.f32 0.0, %v2842
    %v2844 = vpop.f32.mrf.mxu0
    %v2845 = vpop.f32.mrf.mxu0
    %v2846 = vpop.f32.mrf.mxu0
    %2847 = vdwg.mxu0
    %v2848 = vld [vmem:[#allocation2 + $0x3a] sm:$0x3]
    %v2849 = vadd.f32 %v2848, %v2843
    %v2850 = vmul.f32 %v2849, %v741
    %v2851 = vtanh.pop %v2850
    %v2852 = vmul.f32 %v2851, %v741
    %v2853 = vadd.f32 %v2852, %v742
    %v2854 = vmul.f32 %v2853, %v2794
    %2856 = vrot.lane.b32.xlu0 %v2853, 64
    %v2857 = vpop.permute.xlu0 %2856
    %v2859 = vmul.f32 %v2853, %v2857
    %2861 = vrot.lane.b32.xlu0 %v2859, 32
    %v2862 = vpop.permute.xlu0 %2861
    %v2864 = vadd.f32 %v2854, %v2862
    %v2865 = vtanh.pop %v2864
    %2867 = vrot.lane.b32.xlu0 %v2865, 64
    %v2868 = vpop.permute.xlu0 %2867
    %v2870 = vmul.f32 %v2853, %v2868
    %v2871 = vpack.c.bf16 %v2870, %v2870
    %2873 = vrot.lane.b32.xlu0 %v2871, 32
    %v2874 = vpop.permute.xlu0 %2873
    %v2876 = vsel %vm774, %v2874, 0
    %2878 = vmatprep.subr.bf16.mxu0 0
    %2879 = vmatpush1.bf16.msra.mxu0 0
    %2880 = vmatprep.subr.bf16.mxu0 0
    %2881 = vmatpush1.bf16.msra.mxu0 0
    %2882 = vmatprep.subr.bf16.mxu0 0
    %2883 = vmatpush1.bf16.msra.mxu0 0
    %2884 = vmatprep.subr.bf16.mxu0 0
    %2885 = vmatpush1.bf16.msra.mxu0 0
    %2886 = vmatprep.subr.bf16.mxu0 0
    %2887 = vmatpush1.bf16.msra.mxu0 0
    %2888 = vmatprep.subr.bf16.mxu0 0
    %2889 = vmatpush1.bf16.msra.mxu0 0
    %2890 = vmatprep.subr.bf16.mxu0 0
    %2891 = vmatpush1.bf16.msra.mxu0 %v771
    %2892 = vmatprep.subr.bf16.mxu0 0
    %2893 = vmatpush1.bf16.msra.mxu0 %v770
    %2894 = vmatprep.subr.bf16.mxu0 0
    %2895 = vmatpush2.bf16.msra.mxu0 0
    %2896 = vmatprep.subr.bf16.mxu0 0
    %2897 = vmatpush2.bf16.msra.mxu0 0
    %2898 = vmatprep.subr.bf16.mxu0 0
    %2899 = vmatpush2.bf16.msra.mxu0 0
    %2900 = vmatprep.subr.bf16.mxu0 0
    %2901 = vmatpush2.bf16.msra.mxu0 0
    %2902 = vmatprep.subr.bf16.mxu0 0
    %2903 = vmatpush2.bf16.msra.mxu0 0
    %2904 = vmatprep.subr.bf16.mxu0 0
    %2905 = vmatpush2.bf16.msra.mxu0 0
    %2906 = vmatprep.subr.bf16.mxu0 0
    %2907 = vmatpush2.bf16.msra.mxu0 0
    %2908 = vmatprep.subr.bf16.mxu0 0
    %2909 = vmatpush2.bf16.msra.mxu0 0
    %2910 = vmatprep.mubr.bf16.mxu0 0
    %2911 = vmatmul.mubr.bf16.gmra.mxu0 %v2876
    %v2912 = vpop.f32.mrf.mxu0
    %v2913 = vadd.f32 0.0, %v2912
    %v2914 = vpop.f32.mrf.mxu0
    %v2915 = vpop.f32.mrf.mxu0
    %v2916 = vpop.f32.mrf.mxu0
    %2917 = vdwg.mxu0
    %v2918 = vld [vmem:[#allocation2 + $0x3c] sm:$0x3]
    %v2919 = vadd.f32 %v2918, %v2913
    %v2920 = vmul.f32 %v2919, %v741
    %v2921 = vtanh.pop %v2920
    %v2922 = vmul.f32 %v2921, %v741
    %v2923 = vadd.f32 %v2922, %v742
    %v2924 = vmul.f32 %v2923, %v2864
    %2926 = vrot.lane.b32.xlu0 %v2923, 64
    %v2927 = vpop.permute.xlu0 %2926
    %v2929 = vmul.f32 %v2923, %v2927
    %2931 = vrot.lane.b32.xlu0 %v2929, 32
    %v2932 = vpop.permute.xlu0 %2931
    %v2934 = vadd.f32 %v2924, %v2932
    %v2935 = vtanh.pop %v2934
    %2937 = vrot.lane.b32.xlu0 %v2935, 64
    %v2938 = vpop.permute.xlu0 %2937
    %v2940 = vmul.f32 %v2923, %v2938
    %v2941 = vpack.c.bf16 %v2940, %v2940
    %2943 = vrot.lane.b32.xlu0 %v2941, 32
    %v2944 = vpop.permute.xlu0 %2943
    %v2946 = vsel %vm774, %v2944, 0
    %2948 = vmatprep.subr.bf16.mxu0 0
    %2949 = vmatpush1.bf16.msra.mxu0 0
    %2950 = vmatprep.subr.bf16.mxu0 0
    %2951 = vmatpush1.bf16.msra.mxu0 0
    %2952 = vmatprep.subr.bf16.mxu0 0
    %2953 = vmatpush1.bf16.msra.mxu0 0
    %2954 = vmatprep.subr.bf16.mxu0 0
    %2955 = vmatpush1.bf16.msra.mxu0 0
    %2956 = vmatprep.subr.bf16.mxu0 0
    %2957 = vmatpush1.bf16.msra.mxu0 0
    %2958 = vmatprep.subr.bf16.mxu0 0
    %2959 = vmatpush1.bf16.msra.mxu0 0
    %2960 = vmatprep.subr.bf16.mxu0 0
    %2961 = vmatpush1.bf16.msra.mxu0 %v771
    %2962 = vmatprep.subr.bf16.mxu0 0
    %2963 = vmatpush1.bf16.msra.mxu0 %v770
    %2964 = vmatprep.subr.bf16.mxu0 0
    %2965 = vmatpush2.bf16.msra.mxu0 0
    %2966 = vmatprep.subr.bf16.mxu0 0
    %2967 = vmatpush2.bf16.msra.mxu0 0
    %2968 = vmatprep.subr.bf16.mxu0 0
    %2969 = vmatpush2.bf16.msra.mxu0 0
    %2970 = vmatprep.subr.bf16.mxu0 0
    %2971 = vmatpush2.bf16.msra.mxu0 0
    %2972 = vmatprep.subr.bf16.mxu0 0
    %2973 = vmatpush2.bf16.msra.mxu0 0
    %2974 = vmatprep.subr.bf16.mxu0 0
    %2975 = vmatpush2.bf16.msra.mxu0 0
    %2976 = vmatprep.subr.bf16.mxu0 0
    %2977 = vmatpush2.bf16.msra.mxu0 0
    %2978 = vmatprep.subr.bf16.mxu0 0
    %2979 = vmatpush2.bf16.msra.mxu0 0
    %2980 = vmatprep.mubr.bf16.mxu0 0
    %2981 = vmatmul.mubr.bf16.gmra.mxu0 %v2946
    %v2982 = vpop.f32.mrf.mxu0
    %v2983 = vadd.f32 0.0, %v2982
    %v2984 = vpop.f32.mrf.mxu0
    %v2985 = vpop.f32.mrf.mxu0
    %v2986 = vpop.f32.mrf.mxu0
    %2987 = vdwg.mxu0
    %v2988 = vld [vmem:[#allocation2 + $0x3e] sm:$0x3]
    %v2989 = vadd.f32 %v2988, %v2983
    %v2990 = vmul.f32 %v2989, %v741
    %v2991 = vtanh.pop %v2990
    %v2992 = vmul.f32 %v2991, %v741
    %v2993 = vadd.f32 %v2992, %v742
    %v2994 = vmul.f32 %v2993, %v2934
    %2996 = vrot.lane.b32.xlu0 %v2993, 64
    %v2997 = vpop.permute.xlu0 %2996
    %v2999 = vmul.f32 %v2993, %v2997
    %3001 = vrot.lane.b32.xlu0 %v2999, 32
    %v3002 = vpop.permute.xlu0 %3001
    %v3004 = vadd.f32 %v2994, %v3002
    %v3005 = vtanh.pop %v3004
    %3007 = vrot.lane.b32.xlu0 %v3005, 64
    %v3008 = vpop.permute.xlu0 %3007
    %v3010 = vmul.f32 %v2993, %v3008
    %v3011 = vpack.c.bf16 %v3010, %v3010
    %3013 = vrot.lane.b32.xlu0 %v3011, 32
    %v3014 = vpop.permute.xlu0 %3013
    %v3016 = vsel %vm774, %v3014, 0
    %3018 = vmatprep.subr.bf16.mxu0 0
    %3019 = vmatpush1.bf16.msra.mxu0 0
    %3020 = vmatprep.subr.bf16.mxu0 0
    %3021 = vmatpush1.bf16.msra.mxu0 0
    %3022 = vmatprep.subr.bf16.mxu0 0
    %3023 = vmatpush1.bf16.msra.mxu0 0
    %3024 = vmatprep.subr.bf16.mxu0 0
    %3025 = vmatpush1.bf16.msra.mxu0 0
    %3026 = vmatprep.subr.bf16.mxu0 0
    %3027 = vmatpush1.bf16.msra.mxu0 0
    %3028 = vmatprep.subr.bf16.mxu0 0
    %3029 = vmatpush1.bf16.msra.mxu0 0
    %3030 = vmatprep.subr.bf16.mxu0 0
    %3031 = vmatpush1.bf16.msra.mxu0 %v771
    %3032 = vmatprep.subr.bf16.mxu0 0
    %3033 = vmatpush1.bf16.msra.mxu0 %v770
    %3034 = vmatprep.subr.bf16.mxu0 0
    %3035 = vmatpush2.bf16.msra.mxu0 0
    %3036 = vmatprep.subr.bf16.mxu0 0
    %3037 = vmatpush2.bf16.msra.mxu0 0
    %3038 = vmatprep.subr.bf16.mxu0 0
    %3039 = vmatpush2.bf16.msra.mxu0 0
    %3040 = vmatprep.subr.bf16.mxu0 0
    %3041 = vmatpush2.bf16.msra.mxu0 0
    %3042 = vmatprep.subr.bf16.mxu0 0
    %3043 = vmatpush2.bf16.msra.mxu0 0
    %3044 = vmatprep.subr.bf16.mxu0 0
    %3045 = vmatpush2.bf16.msra.mxu0 0
    %3046 = vmatprep.subr.bf16.mxu0 0
    %3047 = vmatpush2.bf16.msra.mxu0 0
    %3048 = vmatprep.subr.bf16.mxu0 0
    %3049 = vmatpush2.bf16.msra.mxu0 0
    %3050 = vmatprep.mubr.bf16.mxu0 0
    %3051 = vmatmul.mubr.bf16.gmra.mxu0 %v3016
    %v3052 = vpop.f32.mrf.mxu0
    %v3053 = vadd.f32 0.0, %v3052
    %v3054 = vpop.f32.mrf.mxu0
    %v3055 = vpop.f32.mrf.mxu0
    %v3056 = vpop.f32.mrf.mxu0
    %3057 = vdwg.mxu0
    %v3058 = vld [vmem:[#allocation2 + $0x40] sm:$0x3]
    %v3059 = vadd.f32 %v3058, %v3053
    %v3060 = vmul.f32 %v3059, %v741
    %v3061 = vtanh.pop %v3060
    %v3062 = vmul.f32 %v3061, %v741
    %v3063 = vadd.f32 %v3062, %v742
    %v3064 = vmul.f32 %v3063, %v3004
    %3066 = vrot.lane.b32.xlu0 %v3063, 64
    %v3067 = vpop.permute.xlu0 %3066
    %v3069 = vmul.f32 %v3063, %v3067
    %3071 = vrot.lane.b32.xlu0 %v3069, 32
    %v3072 = vpop.permute.xlu0 %3071
    %v3074 = vadd.f32 %v3064, %v3072
    %v3075 = vtanh.pop %v3074
    %3077 = vrot.lane.b32.xlu0 %v3075, 64
    %v3078 = vpop.permute.xlu0 %3077
    %v3080 = vmul.f32 %v3063, %v3078
    %v3081 = vpack.c.bf16 %v3080, %v3080
    %3083 = vrot.lane.b32.xlu0 %v3081, 32
    %v3084 = vpop.permute.xlu0 %3083
    %v3086 = vsel %vm774, %v3084, 0
    %3088 = vmatprep.subr.bf16.mxu0 0
    %3089 = vmatpush1.bf16.msra.mxu0 0
    %3090 = vmatprep.subr.bf16.mxu0 0
    %3091 = vmatpush1.bf16.msra.mxu0 0
    %3092 = vmatprep.subr.bf16.mxu0 0
    %3093 = vmatpush1.bf16.msra.mxu0 0
    %3094 = vmatprep.subr.bf16.mxu0 0
    %3095 = vmatpush1.bf16.msra.mxu0 0
    %3096 = vmatprep.subr.bf16.mxu0 0
    %3097 = vmatpush1.bf16.msra.mxu0 0
    %3098 = vmatprep.subr.bf16.mxu0 0
    %3099 = vmatpush1.bf16.msra.mxu0 0
    %3100 = vmatprep.subr.bf16.mxu0 0
    %3101 = vmatpush1.bf16.msra.mxu0 %v771
    %3102 = vmatprep.subr.bf16.mxu0 0
    %3103 = vmatpush1.bf16.msra.mxu0 %v770
    %3104 = vmatprep.subr.bf16.mxu0 0
    %3105 = vmatpush2.bf16.msra.mxu0 0
    %3106 = vmatprep.subr.bf16.mxu0 0
    %3107 = vmatpush2.bf16.msra.mxu0 0
    %3108 = vmatprep.subr.bf16.mxu0 0
    %3109 = vmatpush2.bf16.msra.mxu0 0
    %3110 = vmatprep.subr.bf16.mxu0 0
    %3111 = vmatpush2.bf16.msra.mxu0 0
    %3112 = vmatprep.subr.bf16.mxu0 0
    %3113 = vmatpush2.bf16.msra.mxu0 0
    %3114 = vmatprep.subr.bf16.mxu0 0
    %3115 = vmatpush2.bf16.msra.mxu0 0
    %3116 = vmatprep.subr.bf16.mxu0 0
    %3117 = vmatpush2.bf16.msra.mxu0 0
    %3118 = vmatprep.subr.bf16.mxu0 0
    %3119 = vmatpush2.bf16.msra.mxu0 0
    %3120 = vmatprep.mubr.bf16.mxu0 0
    %3121 = vmatmul.mubr.bf16.gmra.mxu0 %v3086
    %v3122 = vpop.f32.mrf.mxu0
    %v3123 = vadd.f32 0.0, %v3122
    %v3124 = vpop.f32.mrf.mxu0
    %v3125 = vpop.f32.mrf.mxu0
    %v3126 = vpop.f32.mrf.mxu0
    %3127 = vdwg.mxu0
    %v3128 = vld [vmem:[#allocation2 + $0x42] sm:$0x3]
    %v3129 = vadd.f32 %v3128, %v3123
    %v3130 = vmul.f32 %v3129, %v741
    %v3131 = vtanh.pop %v3130
    %v3132 = vmul.f32 %v3131, %v741
    %v3133 = vadd.f32 %v3132, %v742
    %v3134 = vmul.f32 %v3133, %v3074
    %3136 = vrot.lane.b32.xlu0 %v3133, 64
    %v3137 = vpop.permute.xlu0 %3136
    %v3139 = vmul.f32 %v3133, %v3137
    %3141 = vrot.lane.b32.xlu0 %v3139, 32
    %v3142 = vpop.permute.xlu0 %3141
    %v3144 = vadd.f32 %v3134, %v3142
    %v3145 = vtanh.pop %v3144
    %3147 = vrot.lane.b32.xlu0 %v3145, 64
    %v3148 = vpop.permute.xlu0 %3147
    %v3150 = vmul.f32 %v3133, %v3148
    %v3151 = vpack.c.bf16 %v3150, %v3150
    %3153 = vrot.lane.b32.xlu0 %v3151, 32
    %v3154 = vpop.permute.xlu0 %3153
    %v3156 = vsel %vm774, %v3154, 0
    %3158 = vmatprep.subr.bf16.mxu0 0
    %3159 = vmatpush1.bf16.msra.mxu0 0
    %3160 = vmatprep.subr.bf16.mxu0 0
    %3161 = vmatpush1.bf16.msra.mxu0 0
    %3162 = vmatprep.subr.bf16.mxu0 0
    %3163 = vmatpush1.bf16.msra.mxu0 0
    %3164 = vmatprep.subr.bf16.mxu0 0
    %3165 = vmatpush1.bf16.msra.mxu0 0
    %3166 = vmatprep.subr.bf16.mxu0 0
    %3167 = vmatpush1.bf16.msra.mxu0 0
    %3168 = vmatprep.subr.bf16.mxu0 0
    %3169 = vmatpush1.bf16.msra.mxu0 0
    %3170 = vmatprep.subr.bf16.mxu0 0
    %3171 = vmatpush1.bf16.msra.mxu0 %v771
    %3172 = vmatprep.subr.bf16.mxu0 0
    %3173 = vmatpush1.bf16.msra.mxu0 %v770
    %3174 = vmatprep.subr.bf16.mxu0 0
    %3175 = vmatpush2.bf16.msra.mxu0 0
    %3176 = vmatprep.subr.bf16.mxu0 0
    %3177 = vmatpush2.bf16.msra.mxu0 0
    %3178 = vmatprep.subr.bf16.mxu0 0
    %3179 = vmatpush2.bf16.msra.mxu0 0
    %3180 = vmatprep.subr.bf16.mxu0 0
    %3181 = vmatpush2.bf16.msra.mxu0 0
    %3182 = vmatprep.subr.bf16.mxu0 0
    %3183 = vmatpush2.bf16.msra.mxu0 0
    %3184 = vmatprep.subr.bf16.mxu0 0
    %3185 = vmatpush2.bf16.msra.mxu0 0
    %3186 = vmatprep.subr.bf16.mxu0 0
    %3187 = vmatpush2.bf16.msra.mxu0 0
    %3188 = vmatprep.subr.bf16.mxu0 0
    %3189 = vmatpush2.bf16.msra.mxu0 0
    %3190 = vmatprep.mubr.bf16.mxu0 0
    %3191 = vmatmul.mubr.bf16.gmra.mxu0 %v3156
    %v3192 = vpop.f32.mrf.mxu0
    %v3193 = vadd.f32 0.0, %v3192
    %v3194 = vpop.f32.mrf.mxu0
    %v3195 = vpop.f32.mrf.mxu0
    %v3196 = vpop.f32.mrf.mxu0
    %3197 = vdwg.mxu0
    %v3198 = vld [vmem:[#allocation2 + $0x44] sm:$0x3]
    %v3199 = vadd.f32 %v3198, %v3193
    %v3200 = vmul.f32 %v3199, %v741
    %v3201 = vtanh.pop %v3200
    %v3202 = vmul.f32 %v3201, %v741
    %v3203 = vadd.f32 %v3202, %v742
    %v3204 = vmul.f32 %v3203, %v3144
    %3206 = vrot.lane.b32.xlu0 %v3203, 64
    %v3207 = vpop.permute.xlu0 %3206
    %v3209 = vmul.f32 %v3203, %v3207
    %3211 = vrot.lane.b32.xlu0 %v3209, 32
    %v3212 = vpop.permute.xlu0 %3211
    %v3214 = vadd.f32 %v3204, %v3212
    %v3215 = vtanh.pop %v3214
    %3217 = vrot.lane.b32.xlu0 %v3215, 64
    %v3218 = vpop.permute.xlu0 %3217
    %v3220 = vmul.f32 %v3203, %v3218
    %v3221 = vpack.c.bf16 %v3220, %v3220
    %3223 = vrot.lane.b32.xlu0 %v3221, 32
    %v3224 = vpop.permute.xlu0 %3223
    %v3226 = vsel %vm774, %v3224, 0
    %3228 = vmatprep.subr.bf16.mxu0 0
    %3229 = vmatpush1.bf16.msra.mxu0 0
    %3230 = vmatprep.subr.bf16.mxu0 0
    %3231 = vmatpush1.bf16.msra.mxu0 0
    %3232 = vmatprep.subr.bf16.mxu0 0
    %3233 = vmatpush1.bf16.msra.mxu0 0
    %3234 = vmatprep.subr.bf16.mxu0 0
    %3235 = vmatpush1.bf16.msra.mxu0 0
    %3236 = vmatprep.subr.bf16.mxu0 0
    %3237 = vmatpush1.bf16.msra.mxu0 0
    %3238 = vmatprep.subr.bf16.mxu0 0
    %3239 = vmatpush1.bf16.msra.mxu0 0
    %3240 = vmatprep.subr.bf16.mxu0 0
    %3241 = vmatpush1.bf16.msra.mxu0 %v771
    %3242 = vmatprep.subr.bf16.mxu0 0
    %3243 = vmatpush1.bf16.msra.mxu0 %v770
    %3244 = vmatprep.subr.bf16.mxu0 0
    %3245 = vmatpush2.bf16.msra.mxu0 0
    %3246 = vmatprep.subr.bf16.mxu0 0
    %3247 = vmatpush2.bf16.msra.mxu0 0
    %3248 = vmatprep.subr.bf16.mxu0 0
    %3249 = vmatpush2.bf16.msra.mxu0 0
    %3250 = vmatprep.subr.bf16.mxu0 0
    %3251 = vmatpush2.bf16.msra.mxu0 0
    %3252 = vmatprep.subr.bf16.mxu0 0
    %3253 = vmatpush2.bf16.msra.mxu0 0
    %3254 = vmatprep.subr.bf16.mxu0 0
    %3255 = vmatpush2.bf16.msra.mxu0 0
    %3256 = vmatprep.subr.bf16.mxu0 0
    %3257 = vmatpush2.bf16.msra.mxu0 0
    %3258 = vmatprep.subr.bf16.mxu0 0
    %3259 = vmatpush2.bf16.msra.mxu0 0
    %3260 = vmatprep.mubr.bf16.mxu0 0
    %3261 = vmatmul.mubr.bf16.gmra.mxu0 %v3226
    %v3262 = vpop.f32.mrf.mxu0
    %v3263 = vadd.f32 0.0, %v3262
    %v3264 = vpop.f32.mrf.mxu0
    %v3265 = vpop.f32.mrf.mxu0
    %v3266 = vpop.f32.mrf.mxu0
    %3267 = vdwg.mxu0
    %v3268 = vld [vmem:[#allocation2 + $0x46] sm:$0x3]
    %v3269 = vadd.f32 %v3268, %v3263
    %v3270 = vmul.f32 %v3269, %v741
    %v3271 = vtanh.pop %v3270
    %v3272 = vmul.f32 %v3271, %v741
    %v3273 = vadd.f32 %v3272, %v742
    %v3274 = vmul.f32 %v3273, %v3214
    %3276 = vrot.lane.b32.xlu0 %v3273, 64
    %v3277 = vpop.permute.xlu0 %3276
    %v3279 = vmul.f32 %v3273, %v3277
    %3281 = vrot.lane.b32.xlu0 %v3279, 32
    %v3282 = vpop.permute.xlu0 %3281
    %v3284 = vadd.f32 %v3274, %v3282
    %v3285 = vtanh.pop %v3284
    %3287 = vrot.lane.b32.xlu0 %v3285, 64
    %v3288 = vpop.permute.xlu0 %3287
    %v3290 = vmul.f32 %v3273, %v3288
    %v3291 = vpack.c.bf16 %v3290, %v3290
    %3293 = vrot.lane.b32.xlu0 %v3291, 32
    %v3294 = vpop.permute.xlu0 %3293
    %v3296 = vsel %vm774, %v3294, 0
    %3298 = vmatprep.subr.bf16.mxu0 0
    %3299 = vmatpush1.bf16.msra.mxu0 0
    %3300 = vmatprep.subr.bf16.mxu0 0
    %3301 = vmatpush1.bf16.msra.mxu0 0
    %3302 = vmatprep.subr.bf16.mxu0 0
    %3303 = vmatpush1.bf16.msra.mxu0 0
    %3304 = vmatprep.subr.bf16.mxu0 0
    %3305 = vmatpush1.bf16.msra.mxu0 0
    %3306 = vmatprep.subr.bf16.mxu0 0
    %3307 = vmatpush1.bf16.msra.mxu0 0
    %3308 = vmatprep.subr.bf16.mxu0 0
    %3309 = vmatpush1.bf16.msra.mxu0 0
    %3310 = vmatprep.subr.bf16.mxu0 0
    %3311 = vmatpush1.bf16.msra.mxu0 %v771
    %3312 = vmatprep.subr.bf16.mxu0 0
    %3313 = vmatpush1.bf16.msra.mxu0 %v770
    %3314 = vmatprep.subr.bf16.mxu0 0
    %3315 = vmatpush2.bf16.msra.mxu0 0
    %3316 = vmatprep.subr.bf16.mxu0 0
    %3317 = vmatpush2.bf16.msra.mxu0 0
    %3318 = vmatprep.subr.bf16.mxu0 0
    %3319 = vmatpush2.bf16.msra.mxu0 0
    %3320 = vmatprep.subr.bf16.mxu0 0
    %3321 = vmatpush2.bf16.msra.mxu0 0
    %3322 = vmatprep.subr.bf16.mxu0 0
    %3323 = vmatpush2.bf16.msra.mxu0 0
    %3324 = vmatprep.subr.bf16.mxu0 0
    %3325 = vmatpush2.bf16.msra.mxu0 0
    %3326 = vmatprep.subr.bf16.mxu0 0
    %3327 = vmatpush2.bf16.msra.mxu0 0
    %3328 = vmatprep.subr.bf16.mxu0 0
    %3329 = vmatpush2.bf16.msra.mxu0 0
    %3330 = vmatprep.mubr.bf16.mxu0 0
    %3331 = vmatmul.mubr.bf16.gmra.mxu0 %v3296
    %v3332 = vpop.f32.mrf.mxu0
    %v3333 = vadd.f32 0.0, %v3332
    %v3334 = vpop.f32.mrf.mxu0
    %v3335 = vpop.f32.mrf.mxu0
    %v3336 = vpop.f32.mrf.mxu0
    %3337 = vdwg.mxu0
    %v3338 = vld [vmem:[#allocation2 + $0x48] sm:$0x3]
    %v3339 = vadd.f32 %v3338, %v3333
    %v3340 = vmul.f32 %v3339, %v741
    %v3341 = vtanh.pop %v3340
    %v3342 = vmul.f32 %v3341, %v741
    %v3343 = vadd.f32 %v3342, %v742
    %v3344 = vmul.f32 %v3343, %v3284
    %3346 = vrot.lane.b32.xlu0 %v3343, 64
    %v3347 = vpop.permute.xlu0 %3346
    %v3349 = vmul.f32 %v3343, %v3347
    %3351 = vrot.lane.b32.xlu0 %v3349, 32
    %v3352 = vpop.permute.xlu0 %3351
    %v3354 = vadd.f32 %v3344, %v3352
    %v3355 = vtanh.pop %v3354
    %3357 = vrot.lane.b32.xlu0 %v3355, 64
    %v3358 = vpop.permute.xlu0 %3357
    %v3360 = vmul.f32 %v3343, %v3358
    %v3361 = vpack.c.bf16 %v3360, %v3360
    %3363 = vrot.lane.b32.xlu0 %v3361, 32
    %v3364 = vpop.permute.xlu0 %3363
    %v3366 = vsel %vm774, %v3364, 0
    %3368 = vmatprep.subr.bf16.mxu0 0
    %3369 = vmatpush1.bf16.msra.mxu0 0
    %3370 = vmatprep.subr.bf16.mxu0 0
    %3371 = vmatpush1.bf16.msra.mxu0 0
    %3372 = vmatprep.subr.bf16.mxu0 0
    %3373 = vmatpush1.bf16.msra.mxu0 0
    %3374 = vmatprep.subr.bf16.mxu0 0
    %3375 = vmatpush1.bf16.msra.mxu0 0
    %3376 = vmatprep.subr.bf16.mxu0 0
    %3377 = vmatpush1.bf16.msra.mxu0 0
    %3378 = vmatprep.subr.bf16.mxu0 0
    %3379 = vmatpush1.bf16.msra.mxu0 0
    %3380 = vmatprep.subr.bf16.mxu0 0
    %3381 = vmatpush1.bf16.msra.mxu0 %v771
    %3382 = vmatprep.subr.bf16.mxu0 0
    %3383 = vmatpush1.bf16.msra.mxu0 %v770
    %3384 = vmatprep.subr.bf16.mxu0 0
    %3385 = vmatpush2.bf16.msra.mxu0 0
    %3386 = vmatprep.subr.bf16.mxu0 0
    %3387 = vmatpush2.bf16.msra.mxu0 0
    %3388 = vmatprep.subr.bf16.mxu0 0
    %3389 = vmatpush2.bf16.msra.mxu0 0
    %3390 = vmatprep.subr.bf16.mxu0 0
    %3391 = vmatpush2.bf16.msra.mxu0 0
    %3392 = vmatprep.subr.bf16.mxu0 0
    %3393 = vmatpush2.bf16.msra.mxu0 0
    %3394 = vmatprep.subr.bf16.mxu0 0
    %3395 = vmatpush2.bf16.msra.mxu0 0
    %3396 = vmatprep.subr.bf16.mxu0 0
    %3397 = vmatpush2.bf16.msra.mxu0 0
    %3398 = vmatprep.subr.bf16.mxu0 0
    %3399 = vmatpush2.bf16.msra.mxu0 0
    %3400 = vmatprep.mubr.bf16.mxu0 0
    %3401 = vmatmul.mubr.bf16.gmra.mxu0 %v3366
    %v3402 = vpop.f32.mrf.mxu0
    %v3403 = vadd.f32 0.0, %v3402
    %v3404 = vpop.f32.mrf.mxu0
    %v3405 = vpop.f32.mrf.mxu0
    %v3406 = vpop.f32.mrf.mxu0
    %3407 = vdwg.mxu0
    %v3408 = vld [vmem:[#allocation2 + $0x4a] sm:$0x3]
    %v3409 = vadd.f32 %v3408, %v3403
    %v3410 = vmul.f32 %v3409, %v741
    %v3411 = vtanh.pop %v3410
    %v3412 = vmul.f32 %v3411, %v741
    %v3413 = vadd.f32 %v3412, %v742
    %v3414 = vmul.f32 %v3413, %v3354
    %3416 = vrot.lane.b32.xlu0 %v3413, 64
    %v3417 = vpop.permute.xlu0 %3416
    %v3419 = vmul.f32 %v3413, %v3417
    %3421 = vrot.lane.b32.xlu0 %v3419, 32
    %v3422 = vpop.permute.xlu0 %3421
    %v3424 = vadd.f32 %v3414, %v3422
    %v3425 = vtanh.pop %v3424
    %3427 = vrot.lane.b32.xlu0 %v3425, 64
    %v3428 = vpop.permute.xlu0 %3427
    %v3430 = vmul.f32 %v3413, %v3428
    %v3431 = vpack.c.bf16 %v3430, %v3430
    %3433 = vrot.lane.b32.xlu0 %v3431, 32
    %v3434 = vpop.permute.xlu0 %3433
    %v3436 = vsel %vm774, %v3434, 0
    %3438 = vmatprep.subr.bf16.mxu0 0
    %3439 = vmatpush1.bf16.msra.mxu0 0
    %3440 = vmatprep.subr.bf16.mxu0 0
    %3441 = vmatpush1.bf16.msra.mxu0 0
    %3442 = vmatprep.subr.bf16.mxu0 0
    %3443 = vmatpush1.bf16.msra.mxu0 0
    %3444 = vmatprep.subr.bf16.mxu0 0
    %3445 = vmatpush1.bf16.msra.mxu0 0
    %3446 = vmatprep.subr.bf16.mxu0 0
    %3447 = vmatpush1.bf16.msra.mxu0 0
    %3448 = vmatprep.subr.bf16.mxu0 0
    %3449 = vmatpush1.bf16.msra.mxu0 0
    %3450 = vmatprep.subr.bf16.mxu0 0
    %3451 = vmatpush1.bf16.msra.mxu0 %v771
    %3452 = vmatprep.subr.bf16.mxu0 0
    %3453 = vmatpush1.bf16.msra.mxu0 %v770
    %3454 = vmatprep.subr.bf16.mxu0 0
    %3455 = vmatpush2.bf16.msra.mxu0 0
    %3456 = vmatprep.subr.bf16.mxu0 0
    %3457 = vmatpush2.bf16.msra.mxu0 0
    %3458 = vmatprep.subr.bf16.mxu0 0
    %3459 = vmatpush2.bf16.msra.mxu0 0
    %3460 = vmatprep.subr.bf16.mxu0 0
    %3461 = vmatpush2.bf16.msra.mxu0 0
    %3462 = vmatprep.subr.bf16.mxu0 0
    %3463 = vmatpush2.bf16.msra.mxu0 0
    %3464 = vmatprep.subr.bf16.mxu0 0
    %3465 = vmatpush2.bf16.msra.mxu0 0
    %3466 = vmatprep.subr.bf16.mxu0 0
    %3467 = vmatpush2.bf16.msra.mxu0 0
    %3468 = vmatprep.subr.bf16.mxu0 0
    %3469 = vmatpush2.bf16.msra.mxu0 0
    %3470 = vmatprep.mubr.bf16.mxu0 0
    %3471 = vmatmul.mubr.bf16.gmra.mxu0 %v3436
    %v3472 = vpop.f32.mrf.mxu0
    %v3473 = vadd.f32 0.0, %v3472
    %v3474 = vpop.f32.mrf.mxu0
    %v3475 = vpop.f32.mrf.mxu0
    %v3476 = vpop.f32.mrf.mxu0
    %3477 = vdwg.mxu0
    %v3478 = vld [vmem:[#allocation2 + $0x4c] sm:$0x3]
    %v3479 = vadd.f32 %v3478, %v3473
    %v3480 = vmul.f32 %v3479, %v741
    %v3481 = vtanh.pop %v3480
    %v3482 = vmul.f32 %v3481, %v741
    %v3483 = vadd.f32 %v3482, %v742
    %v3484 = vmul.f32 %v3483, %v3424
    %3486 = vrot.lane.b32.xlu0 %v3483, 64
    %v3487 = vpop.permute.xlu0 %3486
    %v3489 = vmul.f32 %v3483, %v3487
    %3491 = vrot.lane.b32.xlu0 %v3489, 32
    %v3492 = vpop.permute.xlu0 %3491
    %v3494 = vadd.f32 %v3484, %v3492
    %v3495 = vtanh.pop %v3494
    %3497 = vrot.lane.b32.xlu0 %v3495, 64
    %v3498 = vpop.permute.xlu0 %3497
    %v3500 = vmul.f32 %v3483, %v3498
    %v3501 = vpack.c.bf16 %v3500, %v3500
    %3503 = vrot.lane.b32.xlu0 %v3501, 32
    %v3504 = vpop.permute.xlu0 %3503
    %v3506 = vsel %vm774, %v3504, 0
    %3508 = vmatprep.subr.bf16.mxu0 0
    %3509 = vmatpush1.bf16.msra.mxu0 0
    %3510 = vmatprep.subr.bf16.mxu0 0
    %3511 = vmatpush1.bf16.msra.mxu0 0
    %3512 = vmatprep.subr.bf16.mxu0 0
    %3513 = vmatpush1.bf16.msra.mxu0 0
    %3514 = vmatprep.subr.bf16.mxu0 0
    %3515 = vmatpush1.bf16.msra.mxu0 0
    %3516 = vmatprep.subr.bf16.mxu0 0
    %3517 = vmatpush1.bf16.msra.mxu0 0
    %3518 = vmatprep.subr.bf16.mxu0 0
    %3519 = vmatpush1.bf16.msra.mxu0 0
    %3520 = vmatprep.subr.bf16.mxu0 0
    %3521 = vmatpush1.bf16.msra.mxu0 %v771
    %3522 = vmatprep.subr.bf16.mxu0 0
    %3523 = vmatpush1.bf16.msra.mxu0 %v770
    %3524 = vmatprep.subr.bf16.mxu0 0
    %3525 = vmatpush2.bf16.msra.mxu0 0
    %3526 = vmatprep.subr.bf16.mxu0 0
    %3527 = vmatpush2.bf16.msra.mxu0 0
    %3528 = vmatprep.subr.bf16.mxu0 0
    %3529 = vmatpush2.bf16.msra.mxu0 0
    %3530 = vmatprep.subr.bf16.mxu0 0
    %3531 = vmatpush2.bf16.msra.mxu0 0
    %3532 = vmatprep.subr.bf16.mxu0 0
    %3533 = vmatpush2.bf16.msra.mxu0 0
    %3534 = vmatprep.subr.bf16.mxu0 0
    %3535 = vmatpush2.bf16.msra.mxu0 0
    %3536 = vmatprep.subr.bf16.mxu0 0
    %3537 = vmatpush2.bf16.msra.mxu0 0
    %3538 = vmatprep.subr.bf16.mxu0 0
    %3539 = vmatpush2.bf16.msra.mxu0 0
    %3540 = vmatprep.mubr.bf16.mxu0 0
    %3541 = vmatmul.mubr.bf16.gmra.mxu0 %v3506
    %v3542 = vpop.f32.mrf.mxu0
    %v3543 = vadd.f32 0.0, %v3542
    %v3544 = vpop.f32.mrf.mxu0
    %v3545 = vpop.f32.mrf.mxu0
    %v3546 = vpop.f32.mrf.mxu0
    %3547 = vdwg.mxu0
    %v3548 = vld [vmem:[#allocation2 + $0x4e] sm:$0x3]
    %v3549 = vadd.f32 %v3548, %v3543
    %v3550 = vmul.f32 %v3549, %v741
    %v3551 = vtanh.pop %v3550
    %v3552 = vmul.f32 %v3551, %v741
    %v3553 = vadd.f32 %v3552, %v742
    %v3554 = vmul.f32 %v3553, %v3494
    %3556 = vrot.lane.b32.xlu0 %v3553, 64
    %v3557 = vpop.permute.xlu0 %3556
    %v3559 = vmul.f32 %v3553, %v3557
    %3561 = vrot.lane.b32.xlu0 %v3559, 32
    %v3562 = vpop.permute.xlu0 %3561
    %v3564 = vadd.f32 %v3554, %v3562
    %v3565 = vtanh.pop %v3564
    %3567 = vrot.lane.b32.xlu0 %v3565, 64
    %v3568 = vpop.permute.xlu0 %3567
    %v3570 = vmul.f32 %v3553, %v3568
    %v3571 = vpack.c.bf16 %v3570, %v3570
    %3573 = vrot.lane.b32.xlu0 %v3571, 32
    %v3574 = vpop.permute.xlu0 %3573
    %v3576 = vsel %vm774, %v3574, 0
    %3578 = vmatprep.subr.bf16.mxu0 0
    %3579 = vmatpush1.bf16.msra.mxu0 0
    %3580 = vmatprep.subr.bf16.mxu0 0
    %3581 = vmatpush1.bf16.msra.mxu0 0
    %3582 = vmatprep.subr.bf16.mxu0 0
    %3583 = vmatpush1.bf16.msra.mxu0 0
    %3584 = vmatprep.subr.bf16.mxu0 0
    %3585 = vmatpush1.bf16.msra.mxu0 0
    %3586 = vmatprep.subr.bf16.mxu0 0
    %3587 = vmatpush1.bf16.msra.mxu0 0
    %3588 = vmatprep.subr.bf16.mxu0 0
    %3589 = vmatpush1.bf16.msra.mxu0 0
    %3590 = vmatprep.subr.bf16.mxu0 0
    %3591 = vmatpush1.bf16.msra.mxu0 %v771
    %3592 = vmatprep.subr.bf16.mxu0 0
    %3593 = vmatpush1.bf16.msra.mxu0 %v770
    %3594 = vmatprep.subr.bf16.mxu0 0
    %3595 = vmatpush2.bf16.msra.mxu0 0
    %3596 = vmatprep.subr.bf16.mxu0 0
    %3597 = vmatpush2.bf16.msra.mxu0 0
    %3598 = vmatprep.subr.bf16.mxu0 0
    %3599 = vmatpush2.bf16.msra.mxu0 0
    %3600 = vmatprep.subr.bf16.mxu0 0
    %3601 = vmatpush2.bf16.msra.mxu0 0
    %3602 = vmatprep.subr.bf16.mxu0 0
    %3603 = vmatpush2.bf16.msra.mxu0 0
    %3604 = vmatprep.subr.bf16.mxu0 0
    %3605 = vmatpush2.bf16.msra.mxu0 0
    %3606 = vmatprep.subr.bf16.mxu0 0
    %3607 = vmatpush2.bf16.msra.mxu0 0
    %3608 = vmatprep.subr.bf16.mxu0 0
    %3609 = vmatpush2.bf16.msra.mxu0 0
    %3610 = vmatprep.mubr.bf16.mxu0 0
    %3611 = vmatmul.mubr.bf16.gmra.mxu0 %v3576
    %v3612 = vpop.f32.mrf.mxu0
    %v3613 = vadd.f32 0.0, %v3612
    %v3614 = vpop.f32.mrf.mxu0
    %v3615 = vpop.f32.mrf.mxu0
    %v3616 = vpop.f32.mrf.mxu0
    %3617 = vdwg.mxu0
    %v3618 = vld [vmem:[#allocation2 + $0x50] sm:$0x3]
    %v3619 = vadd.f32 %v3618, %v3613
    %v3620 = vmul.f32 %v3619, %v741
    %v3621 = vtanh.pop %v3620
    %v3622 = vmul.f32 %v3621, %v741
    %v3623 = vadd.f32 %v3622, %v742
    %v3624 = vmul.f32 %v3623, %v3564
    %3626 = vrot.lane.b32.xlu0 %v3623, 64
    %v3627 = vpop.permute.xlu0 %3626
    %v3629 = vmul.f32 %v3623, %v3627
    %3631 = vrot.lane.b32.xlu0 %v3629, 32
    %v3632 = vpop.permute.xlu0 %3631
    %v3634 = vadd.f32 %v3624, %v3632
    %v3635 = vtanh.pop %v3634
    %3637 = vrot.lane.b32.xlu0 %v3635, 64
    %v3638 = vpop.permute.xlu0 %3637
    %v3640 = vmul.f32 %v3623, %v3638
    %v3641 = vpack.c.bf16 %v3640, %v3640
    %3643 = vrot.lane.b32.xlu0 %v3641, 32
    %v3644 = vpop.permute.xlu0 %3643
    %v3646 = vsel %vm774, %v3644, 0
    %3648 = vmatprep.subr.bf16.mxu0 0
    %3649 = vmatpush1.bf16.msra.mxu0 0
    %3650 = vmatprep.subr.bf16.mxu0 0
    %3651 = vmatpush1.bf16.msra.mxu0 0
    %3652 = vmatprep.subr.bf16.mxu0 0
    %3653 = vmatpush1.bf16.msra.mxu0 0
    %3654 = vmatprep.subr.bf16.mxu0 0
    %3655 = vmatpush1.bf16.msra.mxu0 0
    %3656 = vmatprep.subr.bf16.mxu0 0
    %3657 = vmatpush1.bf16.msra.mxu0 0
    %3658 = vmatprep.subr.bf16.mxu0 0
    %3659 = vmatpush1.bf16.msra.mxu0 0
    %3660 = vmatprep.subr.bf16.mxu0 0
    %3661 = vmatpush1.bf16.msra.mxu0 %v771
    %3662 = vmatprep.subr.bf16.mxu0 0
    %3663 = vmatpush1.bf16.msra.mxu0 %v770
    %3664 = vmatprep.subr.bf16.mxu0 0
    %3665 = vmatpush2.bf16.msra.mxu0 0
    %3666 = vmatprep.subr.bf16.mxu0 0
    %3667 = vmatpush2.bf16.msra.mxu0 0
    %3668 = vmatprep.subr.bf16.mxu0 0
    %3669 = vmatpush2.bf16.msra.mxu0 0
    %3670 = vmatprep.subr.bf16.mxu0 0
    %3671 = vmatpush2.bf16.msra.mxu0 0
    %3672 = vmatprep.subr.bf16.mxu0 0
    %3673 = vmatpush2.bf16.msra.mxu0 0
    %3674 = vmatprep.subr.bf16.mxu0 0
    %3675 = vmatpush2.bf16.msra.mxu0 0
    %3676 = vmatprep.subr.bf16.mxu0 0
    %3677 = vmatpush2.bf16.msra.mxu0 0
    %3678 = vmatprep.subr.bf16.mxu0 0
    %3679 = vmatpush2.bf16.msra.mxu0 0
    %3680 = vmatprep.mubr.bf16.mxu0 0
    %3681 = vmatmul.mubr.bf16.gmra.mxu0 %v3646
    %v3682 = vpop.f32.mrf.mxu0
    %v3683 = vadd.f32 0.0, %v3682
    %v3684 = vpop.f32.mrf.mxu0
    %v3685 = vpop.f32.mrf.mxu0
    %v3686 = vpop.f32.mrf.mxu0
    %3687 = vdwg.mxu0
    %v3688 = vld [vmem:[#allocation2 + $0x52] sm:$0x3]
    %v3689 = vadd.f32 %v3688, %v3683
    %v3690 = vmul.f32 %v3689, %v741
    %v3691 = vtanh.pop %v3690
    %v3692 = vmul.f32 %v3691, %v741
    %v3693 = vadd.f32 %v3692, %v742
    %v3694 = vmul.f32 %v3693, %v3634
    %3696 = vrot.lane.b32.xlu0 %v3693, 64
    %v3697 = vpop.permute.xlu0 %3696
    %v3699 = vmul.f32 %v3693, %v3697
    %3701 = vrot.lane.b32.xlu0 %v3699, 32
    %v3702 = vpop.permute.xlu0 %3701
    %v3704 = vadd.f32 %v3694, %v3702
    %v3705 = vtanh.pop %v3704
    %3707 = vrot.lane.b32.xlu0 %v3705, 64
    %v3708 = vpop.permute.xlu0 %3707
    %v3710 = vmul.f32 %v3693, %v3708
    %v3711 = vld [vmem:[%s7] sm:$0xff]
    %v3712 = vld [vmem:[%s7 + $0x8] sm:$0xff]
    %v3713 = vld [vmem:[%s7 + $0x10] sm:$0xff]
    %v3714 = vld [vmem:[%s7 + $0x18] sm:$0xff]
    %v3715 = vld [vmem:[%s8] sm:$0xff]
    %v3716 = vld [vmem:[%s8 + $0x8] sm:$0xff]
    %v3717 = vld [vmem:[%s8 + $0x10] sm:$0xff]
    %v3718 = vld [vmem:[%s8 + $0x18] sm:$0xff]
    %v3720 = vrot.slane %v761, 2
    %3721 = vrot.lane.b32.xlu0 %v3720, 32
    %v3722 = vpop.permute.xlu0 %3721
    %v3723 = vsel %vm774, %v3722, 0
    %3725 = vmatprep.subr.mxu0 0.0
    %3726 = vmatpush1.msra.mxu0 0.0
    %3727 = vmatprep.subr.mxu0 0.0
    %3728 = vmatpush1.msra.mxu0 0.0
    %3729 = vmatprep.subr.mxu0 0.0
    %3730 = vmatpush1.msra.mxu0 0.0
    %3731 = vmatprep.subr.mxu0 0.0
    %3732 = vmatpush1.msra.mxu0 0.0
    %3733 = vmatprep.subr.mxu0 0.0
    %3734 = vmatpush1.msra.mxu0 0.0
    %3735 = vmatprep.subr.mxu0 0.0
    %3736 = vmatpush1.msra.mxu0 0.0
    %3737 = vmatprep.subr.mxu0 0.0
    %3738 = vmatpush1.msra.mxu0 0.0
    %3739 = vmatprep.subr.mxu0 0.0
    %3740 = vmatpush1.msra.mxu0 0.0
    %3741 = vmatprep.subr.mxu0 0.0
    %3742 = vmatpush1.msra.mxu0 0.0
    %3743 = vmatprep.subr.mxu0 0.0
    %3744 = vmatpush1.msra.mxu0 0.0
    %3745 = vmatprep.subr.mxu0 0.0
    %3746 = vmatpush1.msra.mxu0 0.0
    %3747 = vmatprep.subr.mxu0 0.0
    %3748 = vmatpush1.msra.mxu0 0.0
    %3749 = vmatprep.subr.mxu0 0.0
    %3750 = vmatpush1.msra.mxu0 %v3718
    %3751 = vmatprep.subr.mxu0 0.0
    %3752 = vmatpush1.msra.mxu0 %v3717
    %3753 = vmatprep.subr.mxu0 0.0
    %3754 = vmatpush1.msra.mxu0 %v3716
    %3755 = vmatprep.subr.mxu0 0.0
    %3756 = vmatpush1.msra.mxu0 %v3715
    %3757 = vmatprep.subr.mxu0 0.0
    %3758 = vmatpush2.msra.mxu0 0.0
    %3759 = vmatprep.subr.mxu0 0.0
    %3760 = vmatpush2.msra.mxu0 0.0
    %3761 = vmatprep.subr.mxu0 0.0
    %3762 = vmatpush2.msra.mxu0 0.0
    %3763 = vmatprep.subr.mxu0 0.0
    %3764 = vmatpush2.msra.mxu0 0.0
    %3765 = vmatprep.subr.mxu0 0.0
    %3766 = vmatpush2.msra.mxu0 0.0
    %3767 = vmatprep.subr.mxu0 0.0
    %3768 = vmatpush2.msra.mxu0 0.0
    %3769 = vmatprep.subr.mxu0 0.0
    %3770 = vmatpush2.msra.mxu0 0.0
    %3771 = vmatprep.subr.mxu0 0.0
    %3772 = vmatpush2.msra.mxu0 0.0
    %3773 = vmatprep.subr.mxu0 0.0
    %3774 = vmatpush2.msra.mxu0 0.0
    %3775 = vmatprep.subr.mxu0 0.0
    %3776 = vmatpush2.msra.mxu0 0.0
    %3777 = vmatprep.subr.mxu0 0.0
    %3778 = vmatpush2.msra.mxu0 0.0
    %3779 = vmatprep.subr.mxu0 0.0
    %3780 = vmatpush2.msra.mxu0 0.0
    %3781 = vmatprep.subr.mxu0 0.0
    %3782 = vmatpush2.msra.mxu0 0.0
    %3783 = vmatprep.subr.mxu0 0.0
    %3784 = vmatpush2.msra.mxu0 0.0
    %3785 = vmatprep.subr.mxu0 0.0
    %3786 = vmatpush2.msra.mxu0 0.0
    %3787 = vmatprep.subr.mxu0 0.0
    %3788 = vmatpush2.msra.mxu0 0.0
    %3789 = vmatprep.mubr.f32.mxu0 0.0
    %3790 = vmatmul.mubr.f32.gmra.mxu0 %v3723
    %v3791 = vpop.f32.mrf.mxu0
    %v3792 = vadd.f32 0.0, %v3791
    %v3793 = vpop.f32.mrf.mxu0
    %3794 = vdwg.mxu0
    %3796 = vrot.lane.b32.xlu0 %v3710, 32
    %v3797 = vpop.permute.xlu0 %3796
    %v3798 = vsel %vm774, %v3797, 0
    %3800 = vmatprep.subr.mxu0 0.0
    %3801 = vmatpush1.msra.mxu0 0.0
    %3802 = vmatprep.subr.mxu0 0.0
    %3803 = vmatpush1.msra.mxu0 0.0
    %3804 = vmatprep.subr.mxu0 0.0
    %3805 = vmatpush1.msra.mxu0 0.0
    %3806 = vmatprep.subr.mxu0 0.0
    %3807 = vmatpush1.msra.mxu0 0.0
    %3808 = vmatprep.subr.mxu0 0.0
    %3809 = vmatpush1.msra.mxu0 0.0
    %3810 = vmatprep.subr.mxu0 0.0
    %3811 = vmatpush1.msra.mxu0 0.0
    %3812 = vmatprep.subr.mxu0 0.0
    %3813 = vmatpush1.msra.mxu0 0.0
    %3814 = vmatprep.subr.mxu0 0.0
    %3815 = vmatpush1.msra.mxu0 0.0
    %3816 = vmatprep.subr.mxu0 0.0
    %3817 = vmatpush1.msra.mxu0 0.0
    %3818 = vmatprep.subr.mxu0 0.0
    %3819 = vmatpush1.msra.mxu0 0.0
    %3820 = vmatprep.subr.mxu0 0.0
    %3821 = vmatpush1.msra.mxu0 0.0
    %3822 = vmatprep.subr.mxu0 0.0
    %3823 = vmatpush1.msra.mxu0 0.0
    %3824 = vmatprep.subr.mxu0 0.0
    %3825 = vmatpush1.msra.mxu0 %v3714
    %3826 = vmatprep.subr.mxu0 0.0
    %3827 = vmatpush1.msra.mxu0 %v3713
    %3828 = vmatprep.subr.mxu0 0.0
    %3829 = vmatpush1.msra.mxu0 %v3712
    %3830 = vmatprep.subr.mxu0 0.0
    %3831 = vmatpush1.msra.mxu0 %v3711
    %3832 = vmatprep.subr.mxu0 0.0
    %3833 = vmatpush2.msra.mxu0 0.0
    %3834 = vmatprep.subr.mxu0 0.0
    %3835 = vmatpush2.msra.mxu0 0.0
    %3836 = vmatprep.subr.mxu0 0.0
    %3837 = vmatpush2.msra.mxu0 0.0
    %3838 = vmatprep.subr.mxu0 0.0
    %3839 = vmatpush2.msra.mxu0 0.0
    %3840 = vmatprep.subr.mxu0 0.0
    %3841 = vmatpush2.msra.mxu0 0.0
    %3842 = vmatprep.subr.mxu0 0.0
    %3843 = vmatpush2.msra.mxu0 0.0
    %3844 = vmatprep.subr.mxu0 0.0
    %3845 = vmatpush2.msra.mxu0 0.0
    %3846 = vmatprep.subr.mxu0 0.0
    %3847 = vmatpush2.msra.mxu0 0.0
    %3848 = vmatprep.subr.mxu0 0.0
    %3849 = vmatpush2.msra.mxu0 0.0
    %3850 = vmatprep.subr.mxu0 0.0
    %3851 = vmatpush2.msra.mxu0 0.0
    %3852 = vmatprep.subr.mxu0 0.0
    %3853 = vmatpush2.msra.mxu0 0.0
    %3854 = vmatprep.subr.mxu0 0.0
    %3855 = vmatpush2.msra.mxu0 0.0
    %3856 = vmatprep.subr.mxu0 0.0
    %3857 = vmatpush2.msra.mxu0 0.0
    %3858 = vmatprep.subr.mxu0 0.0
    %3859 = vmatpush2.msra.mxu0 0.0
    %3860 = vmatprep.subr.mxu0 0.0
    %3861 = vmatpush2.msra.mxu0 0.0
    %3862 = vmatprep.subr.mxu0 0.0
    %3863 = vmatpush2.msra.mxu0 0.0
    %3864 = vmatprep.mubr.f32.mxu0 0.0
    %3865 = vmatmul.mubr.f32.gmra.mxu0 %v3798
    %v3866 = vpop.f32.mrf.mxu0
    %v3867 = vadd.f32 %v3792, %v3866
    %v3868 = vpop.f32.mrf.mxu0
    %3869 = vdwg.mxu0
    %v3870 = vld [vmem:[%s9] sm:$0x1]
    %v3872 = vlaneseq
    %v3873 = vshrl.u32 %v3872, 7
    %v3874 = vsub.s32 0, %v3873
    %v3875 = vrot.slane %v3870, %v3874
    %v3877 = vadd.f32 %v3867, %v3875
    %vm3878 = vcmask 25600
    %3879 = vst.msk [vmem:[#allocation3] sm:$0x3] %vm3878, %v3877
    // Predicated region
    $region42: #{lstm_forward.1} parent=1 // pred_check
      _
    $region43: #{lstm_forward.1} parent=1 // pred_check_branch
      %3881 = sbr.rel (0) target = $region45
    $region44: #{lstm_forward.1} parent=1 // pred_region
      %s3883 = ssub.s32 32, 32
      %3884 = vsyncadd [#allocation4], %s3883
      %s3886 = sshll.u32 [#allocation3], 4
      %s3887 = int_to_ptr.vmem [resolvable:$true] %s3886
      %3889 = dma.vmem_to_hbm [thread:$0]  %s3887, 32, %s10, [#allocation4]
    $region45: #{lstm_forward.1} parent=1 // pred_fallthru
      _
    // Predicated region
    $region46: #{lstm_forward.1} parent=1 // pred_check
      _
    $region47: #{lstm_forward.1} parent=1 // pred_check_branch
      %3891 = sbr.rel (0) target = $region49
    $region48: #{lstm_forward.1} parent=1 // pred_region
      %3892 = dma.done [#allocation4], 32
    $region49: #{lstm_forward.1} parent=1 // pred_fallthru
      _
    %3893 = vsyncpa [#allocation4], 1

</llo_original>
